<compile_context>
chip_gen: v6e
topology: v6e:2x2x1
jax: 0.10.0
libtpu: 0.0.40
codegen_flags: <defaults>
</compile_context>

<pallas_src>
import jax
import jax.numpy as jnp
import numpy as np
from jax.experimental import pallas as pl
from jax.experimental.pallas import tpu as pltpu

EPS = 1e-5  # nn.BatchNorm2d default eps


def _build_patches_bf16(a, p_ref, H, W, C):
    """im2col for a 3x3 SAME conv, one sample.

    a:     (H*W, C) f32 activation, rows ordered r = h*W + w.
    p_ref: (H*W, 9*C) bf16 VMEM scratch; tap k=(oy+1)*3+(ox+1) occupies lanes
           [k*C, (k+1)*C).

    Every store is a full slab: the horizontal (+/-1 along W) shift is a
    pltpu.roll along the flattened row axis plus a jnp.where mask on the
    in-row position (the cross-row / circular wrap rows are exactly the rows
    the mask zeroes), and the vertical (+/-1 along H) shift is a destination
    row offset of +/-W, which stays sublane-aligned because W % 8 == 0.
    """
    HW = H * W
    w_ids = jax.lax.broadcasted_iota(jnp.int32, (HW, 1), 0) % W
    zrow = jnp.zeros((W, C), jnp.bfloat16)
    for ox in (-1, 0, 1):
        if ox == 0:
            hb = a.astype(jnp.bfloat16)
        else:
            rolled = pltpu.roll(a, (-ox) % HW, 0)          # rolled[r] = a[r + ox]
            valid = (w_ids < W - 1) if ox == 1 else (w_ids > 0)
            hb = jnp.where(valid, rolled, 0.0).astype(jnp.bfloat16)
        for oy in (-1, 0, 1):
            lo = ((oy + 1) * 3 + (ox + 1)) * C
            if oy == 0:
                p_ref[:, lo:lo + C] = hb
            elif oy == -1:        # tap[y] = a[y-1]; output row 0 is zero padding
                p_ref[W:HW, lo:lo + C] = hb[0:HW - W, :]
                p_ref[0:W, lo:lo + C] = zrow
            else:                 # tap[y] = a[y+1]; output row H-1 is zero padding
                p_ref[0:HW - W, lo:lo + C] = hb[W:HW, :]
                p_ref[HW - W:HW, lo:lo + C] = zrow
    # TODO(synk): at production widths (C >= 128) on v6e/v7x the patch-build
    # vst slot (not the MXU) saturates first; switch to tap-decomposed shifted
    # matmuls (taps grouped so K >= 256) accumulated in f32 and drop this 9x
    # scratch entirely.


def _make_conv_stats_kernel(H, W, fuse_bn_relu):
    """conv3x3 (optionally preceded by fused BN-apply+ReLU) + partial BN stats."""

    def body(a, w_ref, y_ref, st_ref, p_ref):
        C = a.shape[-1]
        _build_patches_bf16(a, p_ref, H, W, C)
        # One im2col matmul per tile: bf16 operands, f32 accumulation on the MXU.
        acc = jnp.dot(p_ref[...], w_ref[...], preferred_element_type=jnp.float32)
        y_ref[...] = acc
        s = jnp.sum(acc, axis=0, keepdims=True)
        s2 = jnp.sum(acc * acc, axis=0, keepdims=True)
        st_ref[...] = jnp.concatenate([s, s2], axis=0)

    if fuse_bn_relu:
        def kernel(a_ref, sc_ref, sh_ref, w_ref, y_ref, st_ref, p_ref):
            a = jnp.maximum(a_ref[...] * sc_ref[...] + sh_ref[...], 0.0)
            body(a, w_ref, y_ref, st_ref, p_ref)
    else:
        def kernel(a_ref, w_ref, y_ref, st_ref, p_ref):
            body(a_ref[...], w_ref, y_ref, st_ref, p_ref)
    return kernel


def _bn_relu_kernel(y_ref, sc_ref, sh_ref, o_ref):
    o_ref[...] = jnp.maximum(y_ref[...] * sc_ref[...] + sh_ref[...], 0.0)


def _bn_scale_shift(partial_stats, gamma, beta, m):
    """Combine per-tile (sum, sumsq) into per-channel BN scale/shift (f32)."""
    s = jnp.sum(partial_stats[:, 0, :], axis=0)
    s2 = jnp.sum(partial_stats[:, 1, :], axis=0)
    mean = s / m
    var = jnp.maximum(s2 / m - mean * mean, 0.0)   # clamp: single-pass var can go < 0
    scale = gamma.astype(jnp.float32) * jax.lax.rsqrt(var + EPS)
    shift = beta.astype(jnp.float32) - mean * scale
    return scale.reshape(1, -1), shift.reshape(1, -1)


def _mosaic_params(vmem_need_bytes):
    # Default scoped VMEM (16 MiB v5e / 32 MiB v6e,v7x) is far below physical;
    # size the limit from the actual blocks + scratch with headroom, capped
    # below v7x's 64 MiB physical budget to leave pipelining room.
    limit = int(min(max(2 * vmem_need_bytes, 32 * 2**20), 56 * 2**20))
    return pltpu.CompilerParams(
        dimension_semantics=("parallel",),   # batch tiles are independent (2 TCs on v7x)
        vmem_limit_bytes=limit)


def conv_block(x_nchw, params):
    """Runs ConvBlock.forward on NCHW input; returns NCHW output."""
    N, Cin, H, W = x_nchw.shape
    Cout = params["w1"].shape[0]
    HW = H * W
    M = N * HW
    f32, bf16 = 4, 2

    # NCHW -> NHWC (channels on the 128-lane axis) -> flatten spatial per sample.
    # TODO(synk): production configs should keep Cin/Cout multiples of 128 so
    # tap writes / matmul dims / output stores are lane-dense; the toy Cout=8
    # runs with masked lane stores.
    x = jnp.transpose(x_nchw, (0, 2, 3, 1)).astype(jnp.float32).reshape(N, HW, Cin)

    # PyTorch conv weight (Cout, Cin, 3, 3) -> im2col matrix (9*Cin, Cout), bf16.
    w1 = jnp.transpose(params["w1"], (2, 3, 1, 0)).reshape(9 * Cin, Cout).astype(jnp.bfloat16)
    w2 = jnp.transpose(params["w2"], (2, 3, 1, 0)).reshape(9 * Cout, Cout).astype(jnp.bfloat16)
    # Conv biases b1/b2 deliberately NOT passed: training-mode BN subtracts the
    # batch mean immediately after the conv, so they cancel exactly.

    row_in = pl.BlockSpec((None, HW, Cin), lambda n: (n, 0, 0))
    row_out = pl.BlockSpec((None, HW, Cout), lambda n: (n, 0, 0))
    st_spec = pl.BlockSpec((None, 2, Cout), lambda n: (n, 0, 0))
    ch_spec = pl.BlockSpec((1, Cout), lambda n: (0, 0))

    # ---- pass 1: conv1 + per-sample partial BN1 stats ----------------------
    need1 = 2 * (HW * Cin * f32 + 9 * Cin * Cout * bf16
                 + HW * Cout * f32 + 2 * Cout * f32) + HW * 9 * Cin * bf16
    y1_raw, st1 = pl.pallas_call(
        _make_conv_stats_kernel(H, W, fuse_bn_relu=False),
        grid=(N,),
        in_specs=[row_in, pl.BlockSpec((9 * Cin, Cout), lambda n: (0, 0))],
        out_specs=(row_out, st_spec),
        out_shape=(jax.ShapeDtypeStruct((N, HW, Cout), jnp.float32),
                   jax.ShapeDtypeStruct((N, 2, Cout), jnp.float32)),
        scratch_shapes=[pltpu.VMEM((HW, 9 * Cin), jnp.bfloat16)],
        compiler_params=_mosaic_params(need1),
    )(x, w1)

    sc1, sh1 = _bn_scale_shift(st1, params["g1"], params["be1"], M)

    # ---- pass 2: BN1-apply + ReLU + conv2 + partial BN2 stats --------------
    need2 = 2 * (2 * HW * Cout * f32 + 2 * Cout * f32 + 9 * Cout * Cout * bf16
                 + 2 * Cout * f32) + HW * 9 * Cout * bf16
    y2_raw, st2 = pl.pallas_call(
        _make_conv_stats_kernel(H, W, fuse_bn_relu=True),
        grid=(N,),
        in_specs=[row_out, ch_spec, ch_spec,
                  pl.BlockSpec((9 * Cout, Cout), lambda n: (0, 0))],
        out_specs=(row_out, st_spec),
        out_shape=(jax.ShapeDtypeStruct((N, HW, Cout), jnp.float32),
                   jax.ShapeDtypeStruct((N, 2, Cout), jnp.float32)),
        scratch_shapes=[pltpu.VMEM((HW, 9 * Cout), jnp.bfloat16)],
        compiler_params=_mosaic_params(need2),
    )(y1_raw, sc1, sh1, w2)

    sc2, sh2 = _bn_scale_shift(st2, params["g2"], params["be2"], M)

    # ---- pass 3: BN2-apply + ReLU (elementwise) -----------------------------
    need3 = 2 * (2 * HW * Cout * f32 + 2 * Cout * f32)
    out_flat = pl.pallas_call(
        _bn_relu_kernel,
        grid=(N,),
        in_specs=[row_out, ch_spec, ch_spec],
        out_specs=row_out,
        out_shape=jax.ShapeDtypeStruct((N, HW, Cout), jnp.float32),
        compiler_params=_mosaic_params(need3),
    )(y2_raw, sc2, sh2)

    # TODO(synk): for production H*W too large for one VMEM-resident sample,
    # add an H-strip grid axis (1-row halos in the index_map) on top of the
    # batch axis; the partial-stats structure already supports it.
    return jnp.transpose(out_flat.reshape(N, H, W, Cout), (0, 3, 1, 2))


def reference(x_nchw, params):
    """Pure-JAX f32 reference matching PyTorch ConvBlock (training-mode BN)."""
    x = jnp.transpose(x_nchw, (0, 2, 3, 1)).astype(jnp.float32)

    def conv(x, w, b):
        wj = jnp.transpose(w, (2, 3, 1, 0))  # OIHW -> HWIO
        y = jax.lax.conv_general_dilated(
            x, wj, window_strides=(1, 1), padding="SAME",
            dimension_numbers=("NHWC", "HWIO", "NHWC"))
        return y + b.reshape(1, 1, 1, -1)

    def bn_relu(y, g, be):
        m = jnp.mean(y, axis=(0, 1, 2), keepdims=True)
        v = jnp.mean((y - m) ** 2, axis=(0, 1, 2), keepdims=True)
        out = g.reshape(1, 1, 1, -1) * (y - m) / jnp.sqrt(v + EPS) \
            + be.reshape(1, 1, 1, -1)
        return jnp.maximum(out, 0.0)

    y = bn_relu(conv(x, params["w1"], params["b1"]), params["g1"], params["be1"])
    y = bn_relu(conv(y, params["w2"], params["b2"]), params["g2"], params["be2"])
    return jnp.transpose(y, (0, 3, 1, 2))


if __name__ == "__main__":
    N, Cin, Cout, H, W = 2, 4, 8, 16, 16

    key = jax.random.PRNGKey(0)
    ks = jax.random.split(key, 9)
    params = {
        "w1": jax.random.normal(ks[0], (Cout, Cin, 3, 3), jnp.float32) * 0.2,
        "b1": jax.random.normal(ks[1], (Cout,), jnp.float32) * 0.1,
        "g1": 1.0 + 0.1 * jax.random.normal(ks[2], (Cout,), jnp.float32),
        "be1": 0.1 * jax.random.normal(ks[3], (Cout,), jnp.float32),
        "w2": jax.random.normal(ks[4], (Cout, Cout, 3, 3), jnp.float32) * 0.2,
        "b2": jax.random.normal(ks[5], (Cout,), jnp.float32) * 0.1,
        "g2": 1.0 + 0.1 * jax.random.normal(ks[6], (Cout,), jnp.float32),
        "be2": 0.1 * jax.random.normal(ks[7], (Cout,), jnp.float32),
    }
    x = jax.random.normal(ks[8], (N, Cin, H, W), jnp.float32)

    # Make x and the conv weights exactly bf16-representable so the kernel's
    # bf16 MXU operands add no input-rounding error vs. the f32 reference; the
    # only residual bf16 effect is the rounding of the activation feeding conv2.
    def _bf16_exact(a):
        return a.astype(jnp.bfloat16).astype(jnp.float32)

    params["w1"] = _bf16_exact(params["w1"])
    params["w2"] = _bf16_exact(params["w2"])
    x = _bf16_exact(x)

    out = jax.block_until_ready(conv_block(x, params))
    ref = jax.block_until_ready(reference(x, params))

    assert out.shape == (N, Cout, H, W)
    # Tolerance sized for the bf16 rounding of the conv2 input activation.
    assert np.max(np.abs(np.asarray(out) - np.asarray(ref))) < 2e-2

    print("KERNEL_OK")
</pallas_src>

<mosaic_0001>
module attributes {stable_mosaic.version = 11 : i64} {
  func.func @kernel(%arg0: i32, %arg1: memref<1x256x4xf32, #tpu.memory_space<vmem>>, %arg2: memref<36x8xbf16, #tpu.memory_space<vmem>>, %arg3: memref<1x256x8xf32, #tpu.memory_space<vmem>>, %arg4: memref<1x2x8xf32, #tpu.memory_space<vmem>>, %arg5: memref<256x36xbf16, #tpu.memory_space<vmem>>) attributes {dimension_semantics = [#tpu.dimension_semantics<parallel>], iteration_bounds = array<i64: 2>, scalar_prefetch = 0 : i64, scratch_operands = 1 : i64, tpu.core_type = #tpu.core_type<tc>, window_params = [{transform_indices = @transform_0, window_bounds = array<i64: 1, 256, 4>}, {pipeline_mode = #tpu.pipeline_mode<synchronous>, transform_indices = @transform_1, window_bounds = array<i64: 36, 8>}, {transform_indices = @transform_2, window_bounds = array<i64: 1, 256, 8>}, {transform_indices = @transform_3, window_bounds = array<i64: 1, 2, 8>}]} {
    %c0 = arith.constant 0 : index
    %c0_0 = arith.constant 0 : index
    %c0_1 = arith.constant 0 : index
    %0 = vector.load %arg1[%c0, %c0_0, %c0_1] : memref<1x256x4xf32, #tpu.memory_space<vmem>>, vector<1x256x4xf32>
    %1 = vector.shape_cast %0 : vector<1x256x4xf32> to vector<256x4xf32>
    %2 = tpu.iota {dimensions = array<i32: 0>} : vector<256x1xi32>
    %c16_i32 = arith.constant 16 : i32
    %c0_i32 = arith.constant 0 : i32
    %3 = arith.cmpi eq, %c16_i32, %c0_i32 : i32
    %c1_i32 = arith.constant 1 : i32
    %4 = arith.select %3, %c1_i32, %c16_i32 : i32
    %5 = vector.broadcast %4 : i32 to vector<256x1xi32>
    %6 = arith.remsi %2, %5 : vector<256x1xi32>
    %c0_i32_2 = arith.constant 0 : i32
    %7 = vector.broadcast %c0_i32_2 : i32 to vector<256x1xi32>
    %8 = arith.cmpi ne, %6, %7 : vector<256x1xi32>
    %c0_i32_3 = arith.constant 0 : i32
    %9 = vector.broadcast %c0_i32_3 : i32 to vector<256x1xi32>
    %10 = arith.cmpi slt, %6, %9 : vector<256x1xi32>
    %c0_i32_4 = arith.constant 0 : i32
    %11 = arith.cmpi slt, %4, %c0_i32_4 : i32
    %12 = vector.broadcast %11 : i1 to vector<256x1xi1>
    %13 = vector.broadcast %12 : vector<256x1xi1> to vector<256x1xi1>
    %14 = arith.xori %10, %13 : vector<256x1xi1>
    %15 = arith.andi %14, %8 : vector<256x1xi1>
    %16 = vector.broadcast %4 : i32 to vector<256x1xi32>
    %17 = arith.addi %6, %16 : vector<256x1xi32>
    %18 = arith.select %15, %17, %6 : vector<256x1xi1>, vector<256x1xi32>
    %cst = arith.constant 0.000000e+00 : bf16
    %19 = vector.broadcast %cst : bf16 to vector<16x4xbf16>
    %c1_i32_5 = arith.constant 1 : i32
    %20 = tpu.dynamic_rotate %1 by %c1_i32_5 dim 0 : vector<256x4xf32>, i32 -> vector<256x4xf32>
    %c0_i32_6 = arith.constant 0 : i32
    %21 = vector.broadcast %c0_i32_6 : i32 to vector<256x1xi32>
    %22 = arith.cmpi sgt, %18, %21 : vector<256x1xi32>
    %cst_7 = arith.constant 0.000000e+00 : f32
    %23 = vector.shape_cast %22 : vector<256x1xi1> to vector<256x1xi1>
    %24 = vector.broadcast %23 : vector<256x1xi1> to vector<256x4xi1>
    %25 = vector.broadcast %cst_7 : f32 to vector<256x4xf32>
    %26 = arith.select %24, %20, %25 : vector<256x4xi1>, vector<256x4xf32>
    %27 = arith.truncf %26 : vector<256x4xf32> to vector<256x4xbf16>
    %28 = vector.extract_strided_slice %27 {offsets = [0, 0], sizes = [240, 4], strides = [1, 1]} : vector<256x4xbf16> to vector<240x4xbf16>
    %c16 = arith.constant 16 : index
    %c0_8 = arith.constant 0 : index
    %29 = vector.load %arg5[%c16, %c0_8] : memref<256x36xbf16, #tpu.memory_space<vmem>>, vector<240x4xbf16>
    tpu.vector_store %arg5[%c16, %c0_8], %28 {strides = array<i32>} : memref<256x36xbf16, #tpu.memory_space<vmem>>, vector<240x4xbf16>,
    %c0_9 = arith.constant 0 : index
    %c0_10 = arith.constant 0 : index
    %30 = vector.load %arg5[%c0_9, %c0_10] : memref<256x36xbf16, #tpu.memory_space<vmem>>, vector<16x4xbf16>
    tpu.vector_store %arg5[%c0_9, %c0_10], %19 {strides = array<i32>} : memref<256x36xbf16, #tpu.memory_space<vmem>>, vector<16x4xbf16>,
    %c0_11 = arith.constant 0 : index
    %c12 = arith.constant 12 : index
    %31 = vector.load %arg5[%c0_11, %c12] : memref<256x36xbf16, #tpu.memory_space<vmem>>, vector<256x4xbf16>
    tpu.vector_store %arg5[%c0_11, %c12], %27 {strides = array<i32>} : memref<256x36xbf16, #tpu.memory_space<vmem>>, vector<256x4xbf16>,
    %32 = vector.extract_strided_slice %27 {offsets = [16, 0], sizes = [240, 4], strides = [1, 1]} : vector<256x4xbf16> to vector<240x4xbf16>
    %c0_12 = arith.constant 0 : index
    %c24 = arith.constant 24 : index
    %33 = vector.load %arg5[%c0_12, %c24] : memref<256x36xbf16, #tpu.memory_space<vmem>>, vector<240x4xbf16>
    tpu.vector_store %arg5[%c0_12, %c24], %32 {strides = array<i32>} : memref<256x36xbf16, #tpu.memory_space<vmem>>, vector<240x4xbf16>,
    %c240 = arith.constant 240 : index
    %c24_13 = arith.constant 24 : index
    %34 = vector.load %arg5[%c240, %c24_13] : memref<256x36xbf16, #tpu.memory_space<vmem>>, vector<16x4xbf16>
    tpu.vector_store %arg5[%c240, %c24_13], %19 {strides = array<i32>} : memref<256x36xbf16, #tpu.memory_space<vmem>>, vector<16x4xbf16>,
    %35 = arith.truncf %1 : vector<256x4xf32> to vector<256x4xbf16>
    %36 = vector.extract_strided_slice %35 {offsets = [0, 0], sizes = [240, 4], strides = [1, 1]} : vector<256x4xbf16> to vector<240x4xbf16>
    %c16_14 = arith.constant 16 : index
    %c4 = arith.constant 4 : index
    %37 = vector.load %arg5[%c16_14, %c4] : memref<256x36xbf16, #tpu.memory_space<vmem>>, vector<240x4xbf16>
    tpu.vector_store %arg5[%c16_14, %c4], %36 {strides = array<i32>} : memref<256x36xbf16, #tpu.memory_space<vmem>>, vector<240x4xbf16>,
    %c0_15 = arith.constant 0 : index
    %c4_16 = arith.constant 4 : index
    %38 = vector.load %arg5[%c0_15, %c4_16] : memref<256x36xbf16, #tpu.memory_space<vmem>>, vector<16x4xbf16>
    tpu.vector_store %arg5[%c0_15, %c4_16], %19 {strides = array<i32>} : memref<256x36xbf16, #tpu.memory_space<vmem>>, vector<16x4xbf16>,
    %c0_17 = arith.constant 0 : index
    %c16_18 = arith.constant 16 : index
    %39 = vector.load %arg5[%c0_17, %c16_18] : memref<256x36xbf16, #tpu.memory_space<vmem>>, vector<256x4xbf16>
    tpu.vector_store %arg5[%c0_17, %c16_18], %35 {strides = array<i32>} : memref<256x36xbf16, #tpu.memory_space<vmem>>, vector<256x4xbf16>,
    %40 = vector.extract_strided_slice %35 {offsets = [16, 0], sizes = [240, 4], strides = [1, 1]} : vector<256x4xbf16> to vector<240x4xbf16>
    %c0_19 = arith.constant 0 : index
    %c28 = arith.constant 28 : index
    %41 = vector.load %arg5[%c0_19, %c28] : memref<256x36xbf16, #tpu.memory_space<vmem>>, vector<240x4xbf16>
    tpu.vector_store %arg5[%c0_19, %c28], %40 {strides = array<i32>} : memref<256x36xbf16, #tpu.memory_space<vmem>>, vector<240x4xbf16>,
    %c240_20 = arith.constant 240 : index
    %c28_21 = arith.constant 28 : index
    %42 = vector.load %arg5[%c240_20, %c28_21] : memref<256x36xbf16, #tpu.memory_space<vmem>>, vector<16x4xbf16>
    tpu.vector_store %arg5[%c240_20, %c28_21], %19 {strides = array<i32>} : memref<256x36xbf16, #tpu.memory_space<vmem>>, vector<16x4xbf16>,
    %c255_i32 = arith.constant 255 : i32
    %43 = tpu.dynamic_rotate %1 by %c255_i32 dim 0 : vector<256x4xf32>, i32 -> vector<256x4xf32>
    %c15_i32 = arith.constant 15 : i32
    %44 = vector.broadcast %c15_i32 : i32 to vector<256x1xi32>
    %45 = arith.cmpi slt, %18, %44 : vector<256x1xi32>
    %cst_22 = arith.constant 0.000000e+00 : f32
    %46 = vector.shape_cast %45 : vector<256x1xi1> to vector<256x1xi1>
    %47 = vector.broadcast %46 : vector<256x1xi1> to vector<256x4xi1>
    %48 = vector.broadcast %cst_22 : f32 to vector<256x4xf32>
    %49 = arith.select %47, %43, %48 : vector<256x4xi1>, vector<256x4xf32>
    %50 = arith.truncf %49 : vector<256x4xf32> to vector<256x4xbf16>
    %51 = vector.extract_strided_slice %50 {offsets = [0, 0], sizes = [240, 4], strides = [1, 1]} : vector<256x4xbf16> to vector<240x4xbf16>
    %c16_23 = arith.constant 16 : index
    %c8 = arith.constant 8 : index
    %52 = vector.load %arg5[%c16_23, %c8] : memref<256x36xbf16, #tpu.memory_space<vmem>>, vector<240x4xbf16>
    tpu.vector_store %arg5[%c16_23, %c8], %51 {strides = array<i32>} : memref<256x36xbf16, #tpu.memory_space<vmem>>, vector<240x4xbf16>,
    %c0_24 = arith.constant 0 : index
    %c8_25 = arith.constant 8 : index
    %53 = vector.load %arg5[%c0_24, %c8_25] : memref<256x36xbf16, #tpu.memory_space<vmem>>, vector<16x4xbf16>
    tpu.vector_store %arg5[%c0_24, %c8_25], %19 {strides = array<i32>} : memref<256x36xbf16, #tpu.memory_space<vmem>>, vector<16x4xbf16>,
    %c0_26 = arith.constant 0 : index
    %c20 = arith.constant 20 : index
    %54 = vector.load %arg5[%c0_26, %c20] : memref<256x36xbf16, #tpu.memory_space<vmem>>, vector<256x4xbf16>
    tpu.vector_store %arg5[%c0_26, %c20], %50 {strides = array<i32>} : memref<256x36xbf16, #tpu.memory_space<vmem>>, vector<256x4xbf16>,
    %55 = vector.extract_strided_slice %50 {offsets = [16, 0], sizes = [240, 4], strides = [1, 1]} : vector<256x4xbf16> to vector<240x4xbf16>
    %c0_27 = arith.constant 0 : index
    %c32 = arith.constant 32 : index
    %56 = vector.load %arg5[%c0_27, %c32] : memref<256x36xbf16, #tpu.memory_space<vmem>>, vector<240x4xbf16>
    tpu.vector_store %arg5[%c0_27, %c32], %55 {strides = array<i32>} : memref<256x36xbf16, #tpu.memory_space<vmem>>, vector<240x4xbf16>,
    %c240_28 = arith.constant 240 : index
    %c32_29 = arith.constant 32 : index
    %57 = vector.load %arg5[%c240_28, %c32_29] : memref<256x36xbf16, #tpu.memory_space<vmem>>, vector<16x4xbf16>
    tpu.vector_store %arg5[%c240_28, %c32_29], %19 {strides = array<i32>} : memref<256x36xbf16, #tpu.memory_space<vmem>>, vector<16x4xbf16>,
    %c0_30 = arith.constant 0 : index
    %c0_31 = arith.constant 0 : index
    %58 = vector.load %arg5[%c0_30, %c0_31] : memref<256x36xbf16, #tpu.memory_space<vmem>>, vector<256x36xbf16>
    %c0_32 = arith.constant 0 : index
    %c0_33 = arith.constant 0 : index
    %59 = vector.load %arg2[%c0_32, %c0_33] : memref<36x8xbf16, #tpu.memory_space<vmem>>, vector<36x8xbf16>
    %cst_34 = arith.constant dense<0.000000e+00> : vector<256x8xf32>
    %60 = tpu.matmul %58, %59, %cst_34 {dimension_numbers = #tpu.dot_dimension_numbers<[1], [0], [0], [1], [0, 0, 1, 1], [], []>} : vector<256x36xbf16>, vector<36x8xbf16>, vector<256x8xf32> -> vector<256x8xf32>
    %c0_35 = arith.constant 0 : index
    %c0_36 = arith.constant 0 : index
    %c0_37 = arith.constant 0 : index
    %61 = vector.load %arg3[%c0_35, %c0_36, %c0_37] : memref<1x256x8xf32, #tpu.memory_space<vmem>>, vector<1x256x8xf32>
    %62 = vector.shape_cast %61 : vector<1x256x8xf32> to vector<256x8xf32>
    %63 = vector.shape_cast %60 : vector<256x8xf32> to vector<1x256x8xf32>
    tpu.vector_store %arg3[%c0_35, %c0_36, %c0_37], %63 {strides = array<i32>} : memref<1x256x8xf32, #tpu.memory_space<vmem>>, vector<1x256x8xf32>,
    %cst_38 = arith.constant dense<0.000000e+00> : vector<8xf32>
    %64 = vector.multi_reduction <add>, %60, %cst_38 [0] : vector<256x8xf32> to vector<8xf32>
    %65 = vector.shape_cast %64 : vector<8xf32> to vector<1x8xf32>
    %66 = arith.mulf %60, %60 : vector<256x8xf32>
    %cst_39 = arith.constant dense<0.000000e+00> : vector<8xf32>
    %67 = vector.multi_reduction <add>, %66, %cst_39 [0] : vector<256x8xf32> to vector<8xf32>
    %68 = vector.shape_cast %67 : vector<8xf32> to vector<1x8xf32>
    %69 = tpu.concatenate %65, %68 in 0 : vector<1x8xf32>, vector<1x8xf32> -> vector<2x8xf32>
    %c0_40 = arith.constant 0 : index
    %c0_41 = arith.constant 0 : index
    %c0_42 = arith.constant 0 : index
    %70 = vector.load %arg4[%c0_40, %c0_41, %c0_42] : memref<1x2x8xf32, #tpu.memory_space<vmem>>, vector<1x2x8xf32>
    %71 = vector.shape_cast %70 : vector<1x2x8xf32> to vector<2x8xf32>
    %72 = vector.shape_cast %69 : vector<2x8xf32> to vector<1x2x8xf32>
    tpu.vector_store %arg4[%c0_40, %c0_41, %c0_42], %72 {strides = array<i32>} : memref<1x2x8xf32, #tpu.memory_space<vmem>>, vector<1x2x8xf32>,
    return
  }
  func.func @transform_0(%arg0: i32) -> (i32, i32, i32) {
    %c0_i32 = arith.constant 0 : i32
    %c0_i32_0 = arith.constant 0 : i32
    %c0_i32_1 = arith.constant 0 : i32
    return %arg0, %c0_i32, %c0_i32_0 : i32, i32, i32
  }
  func.func @transform_1(%arg0: i32) -> (i32, i32) {
    %c0_i32 = arith.constant 0 : i32
    %c0_i32_0 = arith.constant 0 : i32
    %c0_i32_1 = arith.constant 0 : i32
    return %c0_i32, %c0_i32_0 : i32, i32
  }
  func.func @transform_2(%arg0: i32) -> (i32, i32, i32) {
    %c0_i32 = arith.constant 0 : i32
    %c0_i32_0 = arith.constant 0 : i32
    %c0_i32_1 = arith.constant 0 : i32
    return %arg0, %c0_i32, %c0_i32_0 : i32, i32, i32
  }
  func.func @transform_3(%arg0: i32) -> (i32, i32, i32) {
    %c0_i32 = arith.constant 0 : i32
    %c0_i32_0 = arith.constant 0 : i32
    %c0_i32_1 = arith.constant 0 : i32
    return %arg0, %c0_i32, %c0_i32_0 : i32, i32, i32
  }
}

</mosaic_0001>

<llo_original>
// kernel: tpu_custom_call.1
$region0: #{tpu_custom_call.1}
  #allocation0 [shape = 'u32[]', space=smem, size = 0x4, offset = 0x4, fixed_abs, tag = 'smem constant byte address 0x4 - core index']
  #allocation1 [shape = 'u32[144,128]{1,0:T(1,128)}', space=vmem, size = 0x12000, scoped, tag = 'internal scratch']
  #allocation2 [shape = 'bf16[256,36]{1,0:T(8,128)(2,1)}', space=vmem, size = 0x10000, scoped, tag = 'scratch operand']
  %s0 = inlined_call_operand.vmem [shape: f32[2,256,4], index: 0, kind: input, shape index: {}]
  %s1 = inlined_call_operand.vmem [shape: bf16[36,8], index: 1, kind: input, shape index: {}]
  %s2 = inlined_call_operand.vmem [shape: f32[2,256,8], index: 2, kind: output, shape index: {0}]
  %s3 = inlined_call_operand.hbm [shape: f32[2,2,8], index: 3, kind: output, shape index: {1}]
  %4 = xla_tuple %s2, %s3
  %s5 = sld [smem:[#allocation0]]
  $region49: #{tpu_custom_call.1} parent=0
    _
  %s7 = ssub.s32 1, %s5
  %s8 = scalar_select 0, %s7, %s5
  $region1: #{tpu_custom_call.1} parent=0
    #allocation3 [shape = 'u8[2048]{0}', space=vmem, size = 0x800, scoped, tag = 'output window, operand 1']
    #allocation4 [shape = 's32[2]{0}', space=sflag, size = 0x8, scoped, tag = 'scoped memory for tpu_custom_call.1']
    %9 = vsyncpa [#allocation4], 0
    %s10 = scalar_lea.sflag [#allocation4], 1
    %11 = vsyncpa %s10, 0
    loop: start=0, step=1, limit=4
    $region2: #{tpu_custom_call.1} parent=1 // loop_pre_header
      _
    $region3: #{tpu_custom_call.1} parent=1 // loop_header
      %s13 = sphi 0, %s17
      %p14 = scmp.ge.s32.totalorder %s13, 4
      %s23 = sphi 0, %s25
      %s26 = sphi 0, %s23
      %s27 = sphi 0, %s26
      %s43 = sphi 0, %s27
      %s47 = sphi 0, %s47
      %s49 = sphi 0, %s47
      %s50 = sphi 0, %s49
      %s64 = sphi 0, %s50
      %s70 = sphi 0, %s72
      %s73 = sphi 0, %s70
      %s74 = sphi 0, %s73
      %s90 = sphi 0, %s74
      %s96 = sphi 0, %s98
      %s99 = sphi 0, %s96
      %s100 = sphi 0, %s99
      %s116 = sphi 0, %s100
    $region4: #{tpu_custom_call.1} parent=1 // loop_header_branch
      %16 = sbr.rel (%p14) target = $region8
    $region5: #{tpu_custom_call.1} parent=1 // loop_body
      %s18 = ssub.s32 %s13, 1
      %s19 = ssub.s32 %s13, 2
      %s20 = sadd.s32 %s13, 1
      %s21 = ssub.s32 %s13, %s20
      %p22 = scmp.eq.s32.totalorder %s21, 0
      %s24 = sadd.s32 %s23, 1
      %s25 = scalar_select %p22, %s23, %s24
      %p28 = pneg %p22
      %p29 = scmp.eq.s32.totalorder %s13, 1
      %p30 = por %p28, %p29
      %p31 = scmp.ne.s32.totalorder %s23, %s26
      %p32 = scmp.eq.s32.totalorder %s13, 0
      %p33 = por %p31, %p32
      %p34 = scmp.ne.s32.totalorder %s23, %s26
      %p35 = scmp.eq.s32.totalorder %s18, 1
      %p36 = por %p34, %p35
      %p37 = scmp.ne.s32.totalorder %s26, %s27
      %p38 = scmp.eq.s32.totalorder %s18, 0
      %p39 = por %p37, %p38
      %p40 = scmp.ne.s32.totalorder %s26, %s27
      %p41 = scmp.eq.s32.totalorder %s19, 1
      %p42 = por %p40, %p41
      %p44 = scmp.ne.s32.totalorder %s27, %s43
      %p45 = scmp.eq.s32.totalorder %s19, 0
      %p46 = por %p44, %p45
      %s48 = sadd.s32 %s47, 1
      %p51 = scmp.eq.s32.totalorder %s13, 1
      %p52 = scmp.ne.s32.totalorder %s47, %s49
      %p53 = scmp.eq.s32.totalorder %s13, 0
      %p54 = por %p52, %p53
      %p55 = scmp.ne.s32.totalorder %s47, %s49
      %p56 = scmp.eq.s32.totalorder %s18, 1
      %p57 = por %p55, %p56
      %p58 = scmp.ne.s32.totalorder %s49, %s50
      %p59 = scmp.eq.s32.totalorder %s18, 0
      %p60 = por %p58, %p59
      %p61 = scmp.ne.s32.totalorder %s49, %s50
      %p62 = scmp.eq.s32.totalorder %s19, 1
      %p63 = por %p61, %p62
      %p65 = scmp.ne.s32.totalorder %s50, %s64
      %p66 = scmp.eq.s32.totalorder %s19, 0
      %p67 = por %p65, %p66
      %s68 = ssub.s32 %s13, %s20
      %p69 = scmp.eq.s32.totalorder %s68, 0
      %s71 = sadd.s32 %s70, 1
      %s72 = scalar_select %p69, %s70, %s71
      %p75 = pneg %p69
      %p76 = scmp.eq.s32.totalorder %s13, 1
      %p77 = por %p75, %p76
      %p78 = scmp.ne.s32.totalorder %s70, %s73
      %p79 = scmp.eq.s32.totalorder %s13, 0
      %p80 = por %p78, %p79
      %p81 = scmp.ne.s32.totalorder %s70, %s73
      %p82 = scmp.eq.s32.totalorder %s18, 1
      %p83 = por %p81, %p82
      %p84 = scmp.ne.s32.totalorder %s73, %s74
      %p85 = scmp.eq.s32.totalorder %s18, 0
      %p86 = por %p84, %p85
      %p87 = scmp.ne.s32.totalorder %s73, %s74
      %p88 = scmp.eq.s32.totalorder %s19, 1
      %p89 = por %p87, %p88
      %p91 = scmp.ne.s32.totalorder %s74, %s90
      %p92 = scmp.eq.s32.totalorder %s19, 0
      %p93 = por %p91, %p92
      %s94 = ssub.s32 %s13, %s20
      %p95 = scmp.eq.s32.totalorder %s94, 0
      %s97 = sadd.s32 %s96, 1
      %s98 = scalar_select %p95, %s96, %s97
      %p101 = pneg %p95
      %p102 = scmp.eq.s32.totalorder %s13, 1
      %p103 = por %p101, %p102
      %p104 = scmp.ne.s32.totalorder %s96, %s99
      %p105 = scmp.eq.s32.totalorder %s13, 0
      %p106 = por %p104, %p105
      %p107 = scmp.ne.s32.totalorder %s96, %s99
      %p108 = scmp.eq.s32.totalorder %s18, 1
      %p109 = por %p107, %p108
      %p110 = scmp.ne.s32.totalorder %s99, %s100
      %p111 = scmp.eq.s32.totalorder %s18, 0
      %p112 = por %p110, %p111
      %p113 = scmp.ne.s32.totalorder %s99, %s100
      %p114 = scmp.eq.s32.totalorder %s19, 1
      %p115 = por %p113, %p114
      %p117 = scmp.ne.s32.totalorder %s100, %s116
      %p118 = scmp.eq.s32.totalorder %s19, 0
      %p119 = por %p117, %p118
      %p120 = scmp.le.s32.totalorder 1, %s13
      %p121 = scmp.lt.s32.totalorder %s13, 3
      %p122 = pnand %p120, %p121
      %p123 = pneg %p122
      // Predicated region
      $region9: #{tpu_custom_call.1} parent=5 // pred_check
        _
      $region10: #{tpu_custom_call.1} parent=5 // pred_check_branch
        %125 = sbr.rel (%p122) target = $region12
      $region11: #{tpu_custom_call.1} parent=5 // pred_region
        %s126 = ssub.s32 %s13, 1
        // Predicated region
        $region13: #{tpu_custom_call.1} parent=11 // pred_check
          %p127 = pneg %p60
        $region14: #{tpu_custom_call.1} parent=11 // pred_check_branch
          %129 = sbr.rel (%p127) target = $region16
        $region15: #{tpu_custom_call.1} parent=11 // pred_region
          _
        $region16: #{tpu_custom_call.1} parent=11 // pred_fallthru
          _
      $region12: #{tpu_custom_call.1} parent=5 // pred_fallthru
        _
      %p130 = scmp.lt.s32.totalorder %s13, 2
      // Predicated region
      $region17: #{tpu_custom_call.1} parent=5 // pred_check
        %p131 = pneg %p130
      $region18: #{tpu_custom_call.1} parent=5 // pred_check_branch
        %133 = sbr.rel (%p131) target = $region20
      $region19: #{tpu_custom_call.1} parent=5 // pred_region
        // Predicated region
        $region21: #{tpu_custom_call.1} parent=19 // pred_check
          %p134 = pneg %p33
        $region22: #{tpu_custom_call.1} parent=19 // pred_check_branch
          %136 = sbr.rel (%p134) target = $region24
        $region23: #{tpu_custom_call.1} parent=19 // pred_region
          %p137 = scmp.lt.s32.totalorder %s13, 1
          %s138 = scalar_select %p137, %s13, 1
          %s139 = smul.addr %s138, 32
          %s140 = smul.addr %s139, 8
          %s141 = scalar_lea.vmem %s0, %s140
        $region24: #{tpu_custom_call.1} parent=19 // pred_fallthru
          _
      $region20: #{tpu_custom_call.1} parent=5 // pred_fallthru
        _
      %p142 = scmp.le.s32.totalorder 1, %s13
      %p143 = scmp.lt.s32.totalorder %s13, 3
      %p144 = pnand %p142, %p143
      %p145 = pneg %p144
      // Predicated region
      $region25: #{tpu_custom_call.1} parent=5 // pred_check
        _
      $region26: #{tpu_custom_call.1} parent=5 // pred_check_branch
        %147 = sbr.rel (%p144) target = $region28
      $region27: #{tpu_custom_call.1} parent=5 // pred_region
        %s148 = ssub.s32 %s13, 1
        %p149 = scmp.lt.s32.totalorder %s18, 1
        %s150 = scalar_select %p149, %s18, 1
        %s151 = smul.addr %s150, 32
        %s152 = smul.addr %s151, 8
        %s153 = scalar_lea.vmem %s0, %s152
        %p154 = pneg %p39
        %p155 = pneg %p36
        %p156 = pneg %p60
        %p157 = pneg %p57
        %p158 = pneg %p86
        %p159 = pneg %p83
        %p160 = scmp.lt.s32.totalorder %s18, 1
        %s161 = scalar_select %p160, %s18, 1
        %s162 = smul.addr %s161, 32
        %s163 = smul.addr %s162, 8
        %s164 = scalar_lea.vmem %s2, %s163
        %p165 = pneg %p112
        %p166 = pneg %p109
        %s167 = sand.u32 %s99, 1
        %s168 = scalar_lea.sflag [#allocation4], %s167
        %s169 = sand.u32 %s99, 1
        %s170 = smul.addr %s169, 2
        %s171 = scalar_lea.vmem [#allocation3], %s170
        %p172 = scmp.lt.s32.totalorder %s18, 1
        %s173 = scalar_select %p172, %s18, 1
        %s174 = smul.addr %s173, 32
        %s175 = smul.addr %s174, 8
        %s176 = scalar_lea.vmem %s0, %s175
        %p177 = scmp.lt.s32.totalorder %s18, 1
        %s178 = scalar_select %p177, %s18, 1
        %s179 = smul.addr %s178, 32
        %s180 = smul.addr %s179, 8
        %s181 = scalar_lea.vmem %s2, %s180
        %v183 = vld [vmem:[%s176] sm:$0xff]
        %v184 = vld [vmem:[%s176 + $0x8] sm:$0xff]
        %v185 = vld [vmem:[%s176 + $0x10] sm:$0xff]
        %v186 = vld [vmem:[%s176 + $0x18] sm:$0xff]
        %v187 = vld [vmem:[%s176 + $0x20] sm:$0xff]
        %v188 = vld [vmem:[%s176 + $0x28] sm:$0xff]
        %v189 = vld [vmem:[%s176 + $0x30] sm:$0xff]
        %v190 = vld [vmem:[%s176 + $0x38] sm:$0xff]
        %v191 = vld [vmem:[%s176 + $0x40] sm:$0xff]
        %v192 = vld [vmem:[%s176 + $0x48] sm:$0xff]
        %v193 = vld [vmem:[%s176 + $0x50] sm:$0xff]
        %v194 = vld [vmem:[%s176 + $0x58] sm:$0xff]
        %v195 = vld [vmem:[%s176 + $0x60] sm:$0xff]
        %v196 = vld [vmem:[%s176 + $0x68] sm:$0xff]
        %v197 = vld [vmem:[%s176 + $0x70] sm:$0xff]
        %v198 = vld [vmem:[%s176 + $0x78] sm:$0xff]
        %v199 = vld [vmem:[%s176 + $0x80] sm:$0xff]
        %v200 = vld [vmem:[%s176 + $0x88] sm:$0xff]
        %v201 = vld [vmem:[%s176 + $0x90] sm:$0xff]
        %v202 = vld [vmem:[%s176 + $0x98] sm:$0xff]
        %v203 = vld [vmem:[%s176 + $0xa0] sm:$0xff]
        %v204 = vld [vmem:[%s176 + $0xa8] sm:$0xff]
        %v205 = vld [vmem:[%s176 + $0xb0] sm:$0xff]
        %v206 = vld [vmem:[%s176 + $0xb8] sm:$0xff]
        %v207 = vld [vmem:[%s176 + $0xc0] sm:$0xff]
        %v208 = vld [vmem:[%s176 + $0xc8] sm:$0xff]
        %v209 = vld [vmem:[%s176 + $0xd0] sm:$0xff]
        %v210 = vld [vmem:[%s176 + $0xd8] sm:$0xff]
        %v211 = vld [vmem:[%s176 + $0xe0] sm:$0xff]
        %v212 = vld [vmem:[%s176 + $0xe8] sm:$0xff]
        %v213 = vld [vmem:[%s176 + $0xf0] sm:$0xff]
        %v214 = vld [vmem:[%s176 + $0xf8] sm:$0xff]
        %v215 = vlaneseq
        %v216 = vshrl.u32 %v215, 7
        %v217 = vadd.s32 %v216, 8
        %v218 = vadd.s32 %v216, 16
        %v219 = vadd.s32 %v216, 24
        %v220 = vadd.s32 %v216, 32
        %v221 = vadd.s32 %v216, 40
        %v222 = vadd.s32 %v216, 48
        %v223 = vadd.s32 %v216, 56
        %v224 = vadd.s32 %v216, 64
        %v225 = vadd.s32 %v216, 72
        %v226 = vadd.s32 %v216, 80
        %v227 = vadd.s32 %v216, 88
        %v228 = vadd.s32 %v216, 96
        %v229 = vadd.s32 %v216, 104
        %v230 = vadd.s32 %v216, 112
        %v231 = vadd.s32 %v216, 120
        %v232 = vadd.s32 %v216, 128
        %v233 = vadd.s32 %v216, 136
        %v234 = vadd.s32 %v216, 144
        %v235 = vadd.s32 %v216, 152
        %v236 = vadd.s32 %v216, 160
        %v237 = vadd.s32 %v216, 168
        %v238 = vadd.s32 %v216, 176
        %v239 = vadd.s32 %v216, 184
        %v240 = vadd.s32 %v216, 192
        %v241 = vadd.s32 %v216, 200
        %v242 = vadd.s32 %v216, 208
        %v243 = vadd.s32 %v216, 216
        %v244 = vadd.s32 %v216, 224
        %v245 = vadd.s32 %v216, 232
        %v246 = vadd.s32 %v216, 240
        %v247 = vadd.s32 %v216, 248
        %vm248 = vcmp.lt.s32.totalorder %v216, 0
        %v249 = vsub.s32 0, %v216
        %v250 = vsel %vm248, %v249, %v216
        %v251 = vshrl.u32 %v250, 4
        %v252 = vand.u32 %v250, 15
        %v253 = vsub.s32 0, %v252
        %v254 = vsel %vm248, %v253, %v252
        %vm255 = vcmp.lt.s32.totalorder %v217, 0
        %v256 = vsub.s32 0, %v217
        %v257 = vsel %vm255, %v256, %v217
        %v258 = vshrl.u32 %v257, 4
        %v259 = vand.u32 %v257, 15
        %v260 = vsub.s32 0, %v259
        %v261 = vsel %vm255, %v260, %v259
        %vm262 = vcmp.lt.s32.totalorder %v218, 0
        %v263 = vsub.s32 0, %v218
        %v264 = vsel %vm262, %v263, %v218
        %v265 = vshrl.u32 %v264, 4
        %v266 = vand.u32 %v264, 15
        %v267 = vsub.s32 0, %v266
        %v268 = vsel %vm262, %v267, %v266
        %vm269 = vcmp.lt.s32.totalorder %v219, 0
        %v270 = vsub.s32 0, %v219
        %v271 = vsel %vm269, %v270, %v219
        %v272 = vshrl.u32 %v271, 4
        %v273 = vand.u32 %v271, 15
        %v274 = vsub.s32 0, %v273
        %v275 = vsel %vm269, %v274, %v273
        %vm276 = vcmp.lt.s32.totalorder %v220, 0
        %v277 = vsub.s32 0, %v220
        %v278 = vsel %vm276, %v277, %v220
        %v279 = vshrl.u32 %v278, 4
        %v280 = vand.u32 %v278, 15
        %v281 = vsub.s32 0, %v280
        %v282 = vsel %vm276, %v281, %v280
        %vm283 = vcmp.lt.s32.totalorder %v221, 0
        %v284 = vsub.s32 0, %v221
        %v285 = vsel %vm283, %v284, %v221
        %v286 = vshrl.u32 %v285, 4
        %v287 = vand.u32 %v285, 15
        %v288 = vsub.s32 0, %v287
        %v289 = vsel %vm283, %v288, %v287
        %vm290 = vcmp.lt.s32.totalorder %v222, 0
        %v291 = vsub.s32 0, %v222
        %v292 = vsel %vm290, %v291, %v222
        %v293 = vshrl.u32 %v292, 4
        %v294 = vand.u32 %v292, 15
        %v295 = vsub.s32 0, %v294
        %v296 = vsel %vm290, %v295, %v294
        %vm297 = vcmp.lt.s32.totalorder %v223, 0
        %v298 = vsub.s32 0, %v223
        %v299 = vsel %vm297, %v298, %v223
        %v300 = vshrl.u32 %v299, 4
        %v301 = vand.u32 %v299, 15
        %v302 = vsub.s32 0, %v301
        %v303 = vsel %vm297, %v302, %v301
        %vm304 = vcmp.lt.s32.totalorder %v224, 0
        %v305 = vsub.s32 0, %v224
        %v306 = vsel %vm304, %v305, %v224
        %v307 = vshrl.u32 %v306, 4
        %v308 = vand.u32 %v306, 15
        %v309 = vsub.s32 0, %v308
        %v310 = vsel %vm304, %v309, %v308
        %vm311 = vcmp.lt.s32.totalorder %v225, 0
        %v312 = vsub.s32 0, %v225
        %v313 = vsel %vm311, %v312, %v225
        %v314 = vshrl.u32 %v313, 4
        %v315 = vand.u32 %v313, 15
        %v316 = vsub.s32 0, %v315
        %v317 = vsel %vm311, %v316, %v315
        %vm318 = vcmp.lt.s32.totalorder %v226, 0
        %v319 = vsub.s32 0, %v226
        %v320 = vsel %vm318, %v319, %v226
        %v321 = vshrl.u32 %v320, 4
        %v322 = vand.u32 %v320, 15
        %v323 = vsub.s32 0, %v322
        %v324 = vsel %vm318, %v323, %v322
        %vm325 = vcmp.lt.s32.totalorder %v227, 0
        %v326 = vsub.s32 0, %v227
        %v327 = vsel %vm325, %v326, %v227
        %v328 = vshrl.u32 %v327, 4
        %v329 = vand.u32 %v327, 15
        %v330 = vsub.s32 0, %v329
        %v331 = vsel %vm325, %v330, %v329
        %vm332 = vcmp.lt.s32.totalorder %v228, 0
        %v333 = vsub.s32 0, %v228
        %v334 = vsel %vm332, %v333, %v228
        %v335 = vshrl.u32 %v334, 4
        %v336 = vand.u32 %v334, 15
        %v337 = vsub.s32 0, %v336
        %v338 = vsel %vm332, %v337, %v336
        %vm339 = vcmp.lt.s32.totalorder %v229, 0
        %v340 = vsub.s32 0, %v229
        %v341 = vsel %vm339, %v340, %v229
        %v342 = vshrl.u32 %v341, 4
        %v343 = vand.u32 %v341, 15
        %v344 = vsub.s32 0, %v343
        %v345 = vsel %vm339, %v344, %v343
        %vm346 = vcmp.lt.s32.totalorder %v230, 0
        %v347 = vsub.s32 0, %v230
        %v348 = vsel %vm346, %v347, %v230
        %v349 = vshrl.u32 %v348, 4
        %v350 = vand.u32 %v348, 15
        %v351 = vsub.s32 0, %v350
        %v352 = vsel %vm346, %v351, %v350
        %vm353 = vcmp.lt.s32.totalorder %v231, 0
        %v354 = vsub.s32 0, %v231
        %v355 = vsel %vm353, %v354, %v231
        %v356 = vshrl.u32 %v355, 4
        %v357 = vand.u32 %v355, 15
        %v358 = vsub.s32 0, %v357
        %v359 = vsel %vm353, %v358, %v357
        %vm360 = vcmp.lt.s32.totalorder %v232, 0
        %v361 = vsub.s32 0, %v232
        %v362 = vsel %vm360, %v361, %v232
        %v363 = vshrl.u32 %v362, 4
        %v364 = vand.u32 %v362, 15
        %v365 = vsub.s32 0, %v364
        %v366 = vsel %vm360, %v365, %v364
        %vm367 = vcmp.lt.s32.totalorder %v233, 0
        %v368 = vsub.s32 0, %v233
        %v369 = vsel %vm367, %v368, %v233
        %v370 = vshrl.u32 %v369, 4
        %v371 = vand.u32 %v369, 15
        %v372 = vsub.s32 0, %v371
        %v373 = vsel %vm367, %v372, %v371
        %vm374 = vcmp.lt.s32.totalorder %v234, 0
        %v375 = vsub.s32 0, %v234
        %v376 = vsel %vm374, %v375, %v234
        %v377 = vshrl.u32 %v376, 4
        %v378 = vand.u32 %v376, 15
        %v379 = vsub.s32 0, %v378
        %v380 = vsel %vm374, %v379, %v378
        %vm381 = vcmp.lt.s32.totalorder %v235, 0
        %v382 = vsub.s32 0, %v235
        %v383 = vsel %vm381, %v382, %v235
        %v384 = vshrl.u32 %v383, 4
        %v385 = vand.u32 %v383, 15
        %v386 = vsub.s32 0, %v385
        %v387 = vsel %vm381, %v386, %v385
        %vm388 = vcmp.lt.s32.totalorder %v236, 0
        %v389 = vsub.s32 0, %v236
        %v390 = vsel %vm388, %v389, %v236
        %v391 = vshrl.u32 %v390, 4
        %v392 = vand.u32 %v390, 15
        %v393 = vsub.s32 0, %v392
        %v394 = vsel %vm388, %v393, %v392
        %vm395 = vcmp.lt.s32.totalorder %v237, 0
        %v396 = vsub.s32 0, %v237
        %v397 = vsel %vm395, %v396, %v237
        %v398 = vshrl.u32 %v397, 4
        %v399 = vand.u32 %v397, 15
        %v400 = vsub.s32 0, %v399
        %v401 = vsel %vm395, %v400, %v399
        %vm402 = vcmp.lt.s32.totalorder %v238, 0
        %v403 = vsub.s32 0, %v238
        %v404 = vsel %vm402, %v403, %v238
        %v405 = vshrl.u32 %v404, 4
        %v406 = vand.u32 %v404, 15
        %v407 = vsub.s32 0, %v406
        %v408 = vsel %vm402, %v407, %v406
        %vm409 = vcmp.lt.s32.totalorder %v239, 0
        %v410 = vsub.s32 0, %v239
        %v411 = vsel %vm409, %v410, %v239
        %v412 = vshrl.u32 %v411, 4
        %v413 = vand.u32 %v411, 15
        %v414 = vsub.s32 0, %v413
        %v415 = vsel %vm409, %v414, %v413
        %vm416 = vcmp.lt.s32.totalorder %v240, 0
        %v417 = vsub.s32 0, %v240
        %v418 = vsel %vm416, %v417, %v240
        %v419 = vshrl.u32 %v418, 4
        %v420 = vand.u32 %v418, 15
        %v421 = vsub.s32 0, %v420
        %v422 = vsel %vm416, %v421, %v420
        %vm423 = vcmp.lt.s32.totalorder %v241, 0
        %v424 = vsub.s32 0, %v241
        %v425 = vsel %vm423, %v424, %v241
        %v426 = vshrl.u32 %v425, 4
        %v427 = vand.u32 %v425, 15
        %v428 = vsub.s32 0, %v427
        %v429 = vsel %vm423, %v428, %v427
        %vm430 = vcmp.lt.s32.totalorder %v242, 0
        %v431 = vsub.s32 0, %v242
        %v432 = vsel %vm430, %v431, %v242
        %v433 = vshrl.u32 %v432, 4
        %v434 = vand.u32 %v432, 15
        %v435 = vsub.s32 0, %v434
        %v436 = vsel %vm430, %v435, %v434
        %vm437 = vcmp.lt.s32.totalorder %v243, 0
        %v438 = vsub.s32 0, %v243
        %v439 = vsel %vm437, %v438, %v243
        %v440 = vshrl.u32 %v439, 4
        %v441 = vand.u32 %v439, 15
        %v442 = vsub.s32 0, %v441
        %v443 = vsel %vm437, %v442, %v441
        %vm444 = vcmp.lt.s32.totalorder %v244, 0
        %v445 = vsub.s32 0, %v244
        %v446 = vsel %vm444, %v445, %v244
        %v447 = vshrl.u32 %v446, 4
        %v448 = vand.u32 %v446, 15
        %v449 = vsub.s32 0, %v448
        %v450 = vsel %vm444, %v449, %v448
        %vm451 = vcmp.lt.s32.totalorder %v245, 0
        %v452 = vsub.s32 0, %v245
        %v453 = vsel %vm451, %v452, %v245
        %v454 = vshrl.u32 %v453, 4
        %v455 = vand.u32 %v453, 15
        %v456 = vsub.s32 0, %v455
        %v457 = vsel %vm451, %v456, %v455
        %vm458 = vcmp.lt.s32.totalorder %v246, 0
        %v459 = vsub.s32 0, %v246
        %v460 = vsel %vm458, %v459, %v246
        %v461 = vshrl.u32 %v460, 4
        %v462 = vand.u32 %v460, 15
        %v463 = vsub.s32 0, %v462
        %v464 = vsel %vm458, %v463, %v462
        %vm465 = vcmp.lt.s32.totalorder %v247, 0
        %v466 = vsub.s32 0, %v247
        %v467 = vsel %vm465, %v466, %v247
        %v468 = vshrl.u32 %v467, 4
        %v469 = vand.u32 %v467, 15
        %v470 = vsub.s32 0, %v469
        %v471 = vsel %vm465, %v470, %v469
        %vm472 = vcmp.ne.s32.totalorder %v254, 0
        %vm473 = vcmp.ne.s32.totalorder %v261, 0
        %vm474 = vcmp.ne.s32.totalorder %v268, 0
        %vm475 = vcmp.ne.s32.totalorder %v275, 0
        %vm476 = vcmp.ne.s32.totalorder %v282, 0
        %vm477 = vcmp.ne.s32.totalorder %v289, 0
        %vm478 = vcmp.ne.s32.totalorder %v296, 0
        %vm479 = vcmp.ne.s32.totalorder %v303, 0
        %vm480 = vcmp.ne.s32.totalorder %v310, 0
        %vm481 = vcmp.ne.s32.totalorder %v317, 0
        %vm482 = vcmp.ne.s32.totalorder %v324, 0
        %vm483 = vcmp.ne.s32.totalorder %v331, 0
        %vm484 = vcmp.ne.s32.totalorder %v338, 0
        %vm485 = vcmp.ne.s32.totalorder %v345, 0
        %vm486 = vcmp.ne.s32.totalorder %v352, 0
        %vm487 = vcmp.ne.s32.totalorder %v359, 0
        %vm488 = vcmp.ne.s32.totalorder %v366, 0
        %vm489 = vcmp.ne.s32.totalorder %v373, 0
        %vm490 = vcmp.ne.s32.totalorder %v380, 0
        %vm491 = vcmp.ne.s32.totalorder %v387, 0
        %vm492 = vcmp.ne.s32.totalorder %v394, 0
        %vm493 = vcmp.ne.s32.totalorder %v401, 0
        %vm494 = vcmp.ne.s32.totalorder %v408, 0
        %vm495 = vcmp.ne.s32.totalorder %v415, 0
        %vm496 = vcmp.ne.s32.totalorder %v422, 0
        %vm497 = vcmp.ne.s32.totalorder %v429, 0
        %vm498 = vcmp.ne.s32.totalorder %v436, 0
        %vm499 = vcmp.ne.s32.totalorder %v443, 0
        %vm500 = vcmp.ne.s32.totalorder %v450, 0
        %vm501 = vcmp.ne.s32.totalorder %v457, 0
        %vm502 = vcmp.ne.s32.totalorder %v464, 0
        %vm503 = vcmp.ne.s32.totalorder %v471, 0
        %vm504 = vcmp.lt.s32.totalorder %v254, 0
        %vm505 = vcmp.lt.s32.totalorder %v261, 0
        %vm506 = vcmp.lt.s32.totalorder %v268, 0
        %vm507 = vcmp.lt.s32.totalorder %v275, 0
        %vm508 = vcmp.lt.s32.totalorder %v282, 0
        %vm509 = vcmp.lt.s32.totalorder %v289, 0
        %vm510 = vcmp.lt.s32.totalorder %v296, 0
        %vm511 = vcmp.lt.s32.totalorder %v303, 0
        %vm512 = vcmp.lt.s32.totalorder %v310, 0
        %vm513 = vcmp.lt.s32.totalorder %v317, 0
        %vm514 = vcmp.lt.s32.totalorder %v324, 0
        %vm515 = vcmp.lt.s32.totalorder %v331, 0
        %vm516 = vcmp.lt.s32.totalorder %v338, 0
        %vm517 = vcmp.lt.s32.totalorder %v345, 0
        %vm518 = vcmp.lt.s32.totalorder %v352, 0
        %vm519 = vcmp.lt.s32.totalorder %v359, 0
        %vm520 = vcmp.lt.s32.totalorder %v366, 0
        %vm521 = vcmp.lt.s32.totalorder %v373, 0
        %vm522 = vcmp.lt.s32.totalorder %v380, 0
        %vm523 = vcmp.lt.s32.totalorder %v387, 0
        %vm524 = vcmp.lt.s32.totalorder %v394, 0
        %vm525 = vcmp.lt.s32.totalorder %v401, 0
        %vm526 = vcmp.lt.s32.totalorder %v408, 0
        %vm527 = vcmp.lt.s32.totalorder %v415, 0
        %vm528 = vcmp.lt.s32.totalorder %v422, 0
        %vm529 = vcmp.lt.s32.totalorder %v429, 0
        %vm530 = vcmp.lt.s32.totalorder %v436, 0
        %vm531 = vcmp.lt.s32.totalorder %v443, 0
        %vm532 = vcmp.lt.s32.totalorder %v450, 0
        %vm533 = vcmp.lt.s32.totalorder %v457, 0
        %vm534 = vcmp.lt.s32.totalorder %v464, 0
        %vm535 = vcmp.lt.s32.totalorder %v471, 0
        %vm536 = vmand %vm504, %vm472
        %vm537 = vmand %vm505, %vm473
        %vm538 = vmand %vm506, %vm474
        %vm539 = vmand %vm507, %vm475
        %vm540 = vmand %vm508, %vm476
        %vm541 = vmand %vm509, %vm477
        %vm542 = vmand %vm510, %vm478
        %vm543 = vmand %vm511, %vm479
        %vm544 = vmand %vm512, %vm480
        %vm545 = vmand %vm513, %vm481
        %vm546 = vmand %vm514, %vm482
        %vm547 = vmand %vm515, %vm483
        %vm548 = vmand %vm516, %vm484
        %vm549 = vmand %vm517, %vm485
        %vm550 = vmand %vm518, %vm486
        %vm551 = vmand %vm519, %vm487
        %vm552 = vmand %vm520, %vm488
        %vm553 = vmand %vm521, %vm489
        %vm554 = vmand %vm522, %vm490
        %vm555 = vmand %vm523, %vm491
        %vm556 = vmand %vm524, %vm492
        %vm557 = vmand %vm525, %vm493
        %vm558 = vmand %vm526, %vm494
        %vm559 = vmand %vm527, %vm495
        %vm560 = vmand %vm528, %vm496
        %vm561 = vmand %vm529, %vm497
        %vm562 = vmand %vm530, %vm498
        %vm563 = vmand %vm531, %vm499
        %vm564 = vmand %vm532, %vm500
        %vm565 = vmand %vm533, %vm501
        %vm566 = vmand %vm534, %vm502
        %vm567 = vmand %vm535, %vm503
        %v568 = vadd.s32 %v254, 16
        %v569 = vadd.s32 %v261, 16
        %v570 = vadd.s32 %v268, 16
        %v571 = vadd.s32 %v275, 16
        %v572 = vadd.s32 %v282, 16
        %v573 = vadd.s32 %v289, 16
        %v574 = vadd.s32 %v296, 16
        %v575 = vadd.s32 %v303, 16
        %v576 = vadd.s32 %v310, 16
        %v577 = vadd.s32 %v317, 16
        %v578 = vadd.s32 %v324, 16
        %v579 = vadd.s32 %v331, 16
        %v580 = vadd.s32 %v338, 16
        %v581 = vadd.s32 %v345, 16
        %v582 = vadd.s32 %v352, 16
        %v583 = vadd.s32 %v359, 16
        %v584 = vadd.s32 %v366, 16
        %v585 = vadd.s32 %v373, 16
        %v586 = vadd.s32 %v380, 16
        %v587 = vadd.s32 %v387, 16
        %v588 = vadd.s32 %v394, 16
        %v589 = vadd.s32 %v401, 16
        %v590 = vadd.s32 %v408, 16
        %v591 = vadd.s32 %v415, 16
        %v592 = vadd.s32 %v422, 16
        %v593 = vadd.s32 %v429, 16
        %v594 = vadd.s32 %v436, 16
        %v595 = vadd.s32 %v443, 16
        %v596 = vadd.s32 %v450, 16
        %v597 = vadd.s32 %v457, 16
        %v598 = vadd.s32 %v464, 16
        %v599 = vadd.s32 %v471, 16
        %v600 = vsel %vm536, %v568, %v254
        %v601 = vsel %vm537, %v569, %v261
        %v602 = vsel %vm538, %v570, %v268
        %v603 = vsel %vm539, %v571, %v275
        %v604 = vsel %vm540, %v572, %v282
        %v605 = vsel %vm541, %v573, %v289
        %v606 = vsel %vm542, %v574, %v296
        %v607 = vsel %vm543, %v575, %v303
        %v608 = vsel %vm544, %v576, %v310
        %v609 = vsel %vm545, %v577, %v317
        %v610 = vsel %vm546, %v578, %v324
        %v611 = vsel %vm547, %v579, %v331
        %v612 = vsel %vm548, %v580, %v338
        %v613 = vsel %vm549, %v581, %v345
        %v614 = vsel %vm550, %v582, %v352
        %v615 = vsel %vm551, %v583, %v359
        %v616 = vsel %vm552, %v584, %v366
        %v617 = vsel %vm553, %v585, %v373
        %v618 = vsel %vm554, %v586, %v380
        %v619 = vsel %vm555, %v587, %v387
        %v620 = vsel %vm556, %v588, %v394
        %v621 = vsel %vm557, %v589, %v401
        %v622 = vsel %vm558, %v590, %v408
        %v623 = vsel %vm559, %v591, %v415
        %v624 = vsel %vm560, %v592, %v422
        %v625 = vsel %vm561, %v593, %v429
        %v626 = vsel %vm562, %v594, %v436
        %v627 = vsel %vm563, %v595, %v443
        %v628 = vsel %vm564, %v596, %v450
        %v629 = vsel %vm565, %v597, %v457
        %v630 = vsel %vm566, %v598, %v464
        %v631 = vsel %vm567, %v599, %v471
        %v632 = vrot.slane %v183, 7
        %v633 = vrot.slane %v184, 7
        %v634 = vrot.slane %v185, 7
        %v635 = vrot.slane %v186, 7
        %v636 = vrot.slane %v187, 7
        %v637 = vrot.slane %v188, 7
        %v638 = vrot.slane %v189, 7
        %v639 = vrot.slane %v190, 7
        %v640 = vrot.slane %v191, 7
        %v641 = vrot.slane %v192, 7
        %v642 = vrot.slane %v193, 7
        %v643 = vrot.slane %v194, 7
        %v644 = vrot.slane %v195, 7
        %v645 = vrot.slane %v196, 7
        %v646 = vrot.slane %v197, 7
        %v647 = vrot.slane %v198, 7
        %v648 = vrot.slane %v199, 7
        %v649 = vrot.slane %v200, 7
        %v650 = vrot.slane %v201, 7
        %v651 = vrot.slane %v202, 7
        %v652 = vrot.slane %v203, 7
        %v653 = vrot.slane %v204, 7
        %v654 = vrot.slane %v205, 7
        %v655 = vrot.slane %v206, 7
        %v656 = vrot.slane %v207, 7
        %v657 = vrot.slane %v208, 7
        %v658 = vrot.slane %v209, 7
        %v659 = vrot.slane %v210, 7
        %v660 = vrot.slane %v211, 7
        %v661 = vrot.slane %v212, 7
        %v662 = vrot.slane %v213, 7
        %v663 = vrot.slane %v214, 7
        %vm664 = vcmp.lt.s32.totalorder %v216, 1
        %v665 = vsel %vm664, %v662, %v663
        %v666 = vsel %vm664, %v661, %v662
        %v667 = vsel %vm664, %v660, %v661
        %v668 = vsel %vm664, %v659, %v660
        %v669 = vsel %vm664, %v658, %v659
        %v670 = vsel %vm664, %v657, %v658
        %v671 = vsel %vm664, %v656, %v657
        %v672 = vsel %vm664, %v655, %v656
        %v673 = vsel %vm664, %v654, %v655
        %v674 = vsel %vm664, %v653, %v654
        %v675 = vsel %vm664, %v652, %v653
        %v676 = vsel %vm664, %v651, %v652
        %v677 = vsel %vm664, %v650, %v651
        %v678 = vsel %vm664, %v649, %v650
        %v679 = vsel %vm664, %v648, %v649
        %v680 = vsel %vm664, %v647, %v648
        %v681 = vsel %vm664, %v646, %v647
        %v682 = vsel %vm664, %v645, %v646
        %v683 = vsel %vm664, %v644, %v645
        %v684 = vsel %vm664, %v643, %v644
        %v685 = vsel %vm664, %v642, %v643
        %v686 = vsel %vm664, %v641, %v642
        %v687 = vsel %vm664, %v640, %v641
        %v688 = vsel %vm664, %v639, %v640
        %v689 = vsel %vm664, %v638, %v639
        %v690 = vsel %vm664, %v637, %v638
        %v691 = vsel %vm664, %v636, %v637
        %v692 = vsel %vm664, %v635, %v636
        %v693 = vsel %vm664, %v634, %v635
        %v694 = vsel %vm664, %v633, %v634
        %v695 = vsel %vm664, %v632, %v633
        %v696 = vsel %vm664, %v663, %v632
        %vm697 = vcmp.gt.s32.totalorder %v600, 0
        %vm698 = vcmp.gt.s32.totalorder %v601, 0
        %vm699 = vcmp.gt.s32.totalorder %v602, 0
        %vm700 = vcmp.gt.s32.totalorder %v603, 0
        %vm701 = vcmp.gt.s32.totalorder %v604, 0
        %vm702 = vcmp.gt.s32.totalorder %v605, 0
        %vm703 = vcmp.gt.s32.totalorder %v606, 0
        %vm704 = vcmp.gt.s32.totalorder %v607, 0
        %vm705 = vcmp.gt.s32.totalorder %v608, 0
        %vm706 = vcmp.gt.s32.totalorder %v609, 0
        %vm707 = vcmp.gt.s32.totalorder %v610, 0
        %vm708 = vcmp.gt.s32.totalorder %v611, 0
        %vm709 = vcmp.gt.s32.totalorder %v612, 0
        %vm710 = vcmp.gt.s32.totalorder %v613, 0
        %vm711 = vcmp.gt.s32.totalorder %v614, 0
        %vm712 = vcmp.gt.s32.totalorder %v615, 0
        %vm713 = vcmp.gt.s32.totalorder %v616, 0
        %vm714 = vcmp.gt.s32.totalorder %v617, 0
        %vm715 = vcmp.gt.s32.totalorder %v618, 0
        %vm716 = vcmp.gt.s32.totalorder %v619, 0
        %vm717 = vcmp.gt.s32.totalorder %v620, 0
        %vm718 = vcmp.gt.s32.totalorder %v621, 0
        %vm719 = vcmp.gt.s32.totalorder %v622, 0
        %vm720 = vcmp.gt.s32.totalorder %v623, 0
        %vm721 = vcmp.gt.s32.totalorder %v624, 0
        %vm722 = vcmp.gt.s32.totalorder %v625, 0
        %vm723 = vcmp.gt.s32.totalorder %v626, 0
        %vm724 = vcmp.gt.s32.totalorder %v627, 0
        %vm725 = vcmp.gt.s32.totalorder %v628, 0
        %vm726 = vcmp.gt.s32.totalorder %v629, 0
        %vm727 = vcmp.gt.s32.totalorder %v630, 0
        %vm728 = vcmp.gt.s32.totalorder %v631, 0
        %v729 = vsel %vm697, 1, 0
        %v730 = vsel %vm698, 1, 0
        %v731 = vsel %vm699, 1, 0
        %v732 = vsel %vm700, 1, 0
        %v733 = vsel %vm701, 1, 0
        %v734 = vsel %vm702, 1, 0
        %v735 = vsel %vm703, 1, 0
        %v736 = vsel %vm704, 1, 0
        %v737 = vsel %vm705, 1, 0
        %v738 = vsel %vm706, 1, 0
        %v739 = vsel %vm707, 1, 0
        %v740 = vsel %vm708, 1, 0
        %v741 = vsel %vm709, 1, 0
        %v742 = vsel %vm710, 1, 0
        %v743 = vsel %vm711, 1, 0
        %v744 = vsel %vm712, 1, 0
        %v745 = vsel %vm713, 1, 0
        %v746 = vsel %vm714, 1, 0
        %v747 = vsel %vm715, 1, 0
        %v748 = vsel %vm716, 1, 0
        %v749 = vsel %vm717, 1, 0
        %v750 = vsel %vm718, 1, 0
        %v751 = vsel %vm719, 1, 0
        %v752 = vsel %vm720, 1, 0
        %v753 = vsel %vm721, 1, 0
        %v754 = vsel %vm722, 1, 0
        %v755 = vsel %vm723, 1, 0
        %v756 = vsel %vm724, 1, 0
        %v757 = vsel %vm725, 1, 0
        %v758 = vsel %vm726, 1, 0
        %v759 = vsel %vm727, 1, 0
        %v760 = vsel %vm728, 1, 0
        %vm761 = vcmp.eq.s32.totalorder %v729, 1
        %vm762 = vcmp.eq.s32.totalorder %v730, 1
        %vm763 = vcmp.eq.s32.totalorder %v731, 1
        %vm764 = vcmp.eq.s32.totalorder %v732, 1
        %vm765 = vcmp.eq.s32.totalorder %v733, 1
        %vm766 = vcmp.eq.s32.totalorder %v734, 1
        %vm767 = vcmp.eq.s32.totalorder %v735, 1
        %vm768 = vcmp.eq.s32.totalorder %v736, 1
        %vm769 = vcmp.eq.s32.totalorder %v737, 1
        %vm770 = vcmp.eq.s32.totalorder %v738, 1
        %vm771 = vcmp.eq.s32.totalorder %v739, 1
        %vm772 = vcmp.eq.s32.totalorder %v740, 1
        %vm773 = vcmp.eq.s32.totalorder %v741, 1
        %vm774 = vcmp.eq.s32.totalorder %v742, 1
        %vm775 = vcmp.eq.s32.totalorder %v743, 1
        %vm776 = vcmp.eq.s32.totalorder %v744, 1
        %vm777 = vcmp.eq.s32.totalorder %v745, 1
        %vm778 = vcmp.eq.s32.totalorder %v746, 1
        %vm779 = vcmp.eq.s32.totalorder %v747, 1
        %vm780 = vcmp.eq.s32.totalorder %v748, 1
        %vm781 = vcmp.eq.s32.totalorder %v749, 1
        %vm782 = vcmp.eq.s32.totalorder %v750, 1
        %vm783 = vcmp.eq.s32.totalorder %v751, 1
        %vm784 = vcmp.eq.s32.totalorder %v752, 1
        %vm785 = vcmp.eq.s32.totalorder %v753, 1
        %vm786 = vcmp.eq.s32.totalorder %v754, 1
        %vm787 = vcmp.eq.s32.totalorder %v755, 1
        %vm788 = vcmp.eq.s32.totalorder %v756, 1
        %vm789 = vcmp.eq.s32.totalorder %v757, 1
        %vm790 = vcmp.eq.s32.totalorder %v758, 1
        %vm791 = vcmp.eq.s32.totalorder %v759, 1
        %vm792 = vcmp.eq.s32.totalorder %v760, 1
        %v793 = vsel %vm761, %v696, 0.0
        %v794 = vsel %vm762, %v695, 0.0
        %v795 = vsel %vm763, %v694, 0.0
        %v796 = vsel %vm764, %v693, 0.0
        %v797 = vsel %vm765, %v692, 0.0
        %v798 = vsel %vm766, %v691, 0.0
        %v799 = vsel %vm767, %v690, 0.0
        %v800 = vsel %vm768, %v689, 0.0
        %v801 = vsel %vm769, %v688, 0.0
        %v802 = vsel %vm770, %v687, 0.0
        %v803 = vsel %vm771, %v686, 0.0
        %v804 = vsel %vm772, %v685, 0.0
        %v805 = vsel %vm773, %v684, 0.0
        %v806 = vsel %vm774, %v683, 0.0
        %v807 = vsel %vm775, %v682, 0.0
        %v808 = vsel %vm776, %v681, 0.0
        %v809 = vsel %vm777, %v680, 0.0
        %v810 = vsel %vm778, %v679, 0.0
        %v811 = vsel %vm779, %v678, 0.0
        %v812 = vsel %vm780, %v677, 0.0
        %v813 = vsel %vm781, %v676, 0.0
        %v814 = vsel %vm782, %v675, 0.0
        %v815 = vsel %vm783, %v674, 0.0
        %v816 = vsel %vm784, %v673, 0.0
        %v817 = vsel %vm785, %v672, 0.0
        %v818 = vsel %vm786, %v671, 0.0
        %v819 = vsel %vm787, %v670, 0.0
        %v820 = vsel %vm788, %v669, 0.0
        %v821 = vsel %vm789, %v668, 0.0
        %v822 = vsel %vm790, %v667, 0.0
        %v823 = vsel %vm791, %v666, 0.0
        %v824 = vsel %vm792, %v665, 0.0
        %v825 = vpack.c.bf16 %v794, %v793
        %v826 = vpack.c.bf16 %v796, %v795
        %v827 = vpack.c.bf16 %v798, %v797
        %v828 = vpack.c.bf16 %v800, %v799
        %v829 = vpack.c.bf16 %v802, %v801
        %v830 = vpack.c.bf16 %v804, %v803
        %v831 = vpack.c.bf16 %v806, %v805
        %v832 = vpack.c.bf16 %v808, %v807
        %v833 = vpack.c.bf16 %v810, %v809
        %v834 = vpack.c.bf16 %v812, %v811
        %v835 = vpack.c.bf16 %v814, %v813
        %v836 = vpack.c.bf16 %v816, %v815
        %v837 = vpack.c.bf16 %v818, %v817
        %v838 = vpack.c.bf16 %v820, %v819
        %v839 = vpack.c.bf16 %v822, %v821
        %v840 = vpack.c.bf16 %v824, %v823
        %v856 = vunpack.c.l.b16 %v825
        %v857 = vunpack.c.h.b16 %v825
        %v858 = vunpack.c.l.b16 %v826
        %v859 = vunpack.c.h.b16 %v826
        %v860 = vunpack.c.l.b16 %v827
        %v861 = vunpack.c.h.b16 %v827
        %v862 = vunpack.c.l.b16 %v828
        %v863 = vunpack.c.h.b16 %v828
        %v864 = vunpack.c.l.b16 %v829
        %v865 = vunpack.c.h.b16 %v829
        %v866 = vunpack.c.l.b16 %v830
        %v867 = vunpack.c.h.b16 %v830
        %v868 = vunpack.c.l.b16 %v831
        %v869 = vunpack.c.h.b16 %v831
        %v870 = vunpack.c.l.b16 %v832
        %v871 = vunpack.c.h.b16 %v832
        %v872 = vunpack.c.l.b16 %v833
        %v873 = vunpack.c.h.b16 %v833
        %v874 = vunpack.c.l.b16 %v834
        %v875 = vunpack.c.h.b16 %v834
        %v876 = vunpack.c.l.b16 %v835
        %v877 = vunpack.c.h.b16 %v835
        %v878 = vunpack.c.l.b16 %v836
        %v879 = vunpack.c.h.b16 %v836
        %v880 = vunpack.c.l.b16 %v837
        %v881 = vunpack.c.h.b16 %v837
        %v882 = vunpack.c.l.b16 %v838
        %v883 = vunpack.c.h.b16 %v838
        %v884 = vunpack.c.l.b16 %v839
        %v885 = vunpack.c.h.b16 %v839
        %v886 = vpack.c.b16 %v856, %v856
        %v887 = vpack.c.b16 %v857, %v857
        %v888 = vpack.c.b16 %v858, %v858
        %v889 = vpack.c.b16 %v859, %v859
        %v890 = vpack.c.b16 %v860, %v860
        %v891 = vpack.c.b16 %v861, %v861
        %v892 = vpack.c.b16 %v862, %v862
        %v893 = vpack.c.b16 %v863, %v863
        %v894 = vpack.c.b16 %v864, %v864
        %v895 = vpack.c.b16 %v865, %v865
        %v896 = vpack.c.b16 %v866, %v866
        %v897 = vpack.c.b16 %v867, %v867
        %v898 = vpack.c.b16 %v868, %v868
        %v899 = vpack.c.b16 %v869, %v869
        %v900 = vpack.c.b16 %v870, %v870
        %v901 = vpack.c.b16 %v871, %v871
        %v902 = vpack.c.b16 %v872, %v872
        %v903 = vpack.c.b16 %v873, %v873
        %v904 = vpack.c.b16 %v874, %v874
        %v905 = vpack.c.b16 %v875, %v875
        %v906 = vpack.c.b16 %v876, %v876
        %v907 = vpack.c.b16 %v877, %v877
        %v908 = vpack.c.b16 %v878, %v878
        %v909 = vpack.c.b16 %v879, %v879
        %v910 = vpack.c.b16 %v880, %v880
        %v911 = vpack.c.b16 %v881, %v881
        %v912 = vpack.c.b16 %v882, %v882
        %v913 = vpack.c.b16 %v883, %v883
        %v914 = vpack.c.b16 %v884, %v884
        %v915 = vpack.c.b16 %v885, %v885
        %vm946 = vcmask 27648
        %947 = vst.msk [vmem:[#allocation2 + $0x8] sm:$0xf] %vm946, %v886
        %948 = vst.msk [vmem:[#allocation2 + $0xc] sm:$0xf] %vm946, %v887
        %949 = vst.msk [vmem:[#allocation2 + $0x10] sm:$0xf] %vm946, %v888
        %950 = vst.msk [vmem:[#allocation2 + $0x14] sm:$0xf] %vm946, %v889
        %951 = vst.msk [vmem:[#allocation2 + $0x18] sm:$0xf] %vm946, %v890
        %952 = vst.msk [vmem:[#allocation2 + $0x1c] sm:$0xf] %vm946, %v891
        %953 = vst.msk [vmem:[#allocation2 + $0x20] sm:$0xf] %vm946, %v892
        %954 = vst.msk [vmem:[#allocation2 + $0x24] sm:$0xf] %vm946, %v893
        %955 = vst.msk [vmem:[#allocation2 + $0x28] sm:$0xf] %vm946, %v894
        %956 = vst.msk [vmem:[#allocation2 + $0x2c] sm:$0xf] %vm946, %v895
        %957 = vst.msk [vmem:[#allocation2 + $0x30] sm:$0xf] %vm946, %v896
        %958 = vst.msk [vmem:[#allocation2 + $0x34] sm:$0xf] %vm946, %v897
        %959 = vst.msk [vmem:[#allocation2 + $0x38] sm:$0xf] %vm946, %v898
        %960 = vst.msk [vmem:[#allocation2 + $0x3c] sm:$0xf] %vm946, %v899
        %961 = vst.msk [vmem:[#allocation2 + $0x40] sm:$0xf] %vm946, %v900
        %962 = vst.msk [vmem:[#allocation2 + $0x44] sm:$0xf] %vm946, %v901
        %963 = vst.msk [vmem:[#allocation2 + $0x48] sm:$0xf] %vm946, %v902
        %964 = vst.msk [vmem:[#allocation2 + $0x4c] sm:$0xf] %vm946, %v903
        %965 = vst.msk [vmem:[#allocation2 + $0x50] sm:$0xf] %vm946, %v904
        %966 = vst.msk [vmem:[#allocation2 + $0x54] sm:$0xf] %vm946, %v905
        %967 = vst.msk [vmem:[#allocation2 + $0x58] sm:$0xf] %vm946, %v906
        %968 = vst.msk [vmem:[#allocation2 + $0x5c] sm:$0xf] %vm946, %v907
        %969 = vst.msk [vmem:[#allocation2 + $0x60] sm:$0xf] %vm946, %v908
        %970 = vst.msk [vmem:[#allocation2 + $0x64] sm:$0xf] %vm946, %v909
        %971 = vst.msk [vmem:[#allocation2 + $0x68] sm:$0xf] %vm946, %v910
        %972 = vst.msk [vmem:[#allocation2 + $0x6c] sm:$0xf] %vm946, %v911
        %973 = vst.msk [vmem:[#allocation2 + $0x70] sm:$0xf] %vm946, %v912
        %974 = vst.msk [vmem:[#allocation2 + $0x74] sm:$0xf] %vm946, %v913
        %975 = vst.msk [vmem:[#allocation2 + $0x78] sm:$0xf] %vm946, %v914
        %976 = vst.msk [vmem:[#allocation2 + $0x7c] sm:$0xf] %vm946, %v915
        %977 = vst.msk [vmem:[#allocation2] sm:$0xf] %vm946, 0
        %978 = vst.msk [vmem:[#allocation2 + $0x4] sm:$0xf] %vm946, 0
        %v980 = vunpack.c.l.b16 %v840
        %v981 = vunpack.c.h.b16 %v840
        %v982 = vpack.c.b16 %v980, %v980
        %v983 = vpack.c.b16 %v981, %v981
        %984 = vrot.lane.b32.xlu0 %v886, 12
        %v985 = vpop.permute.xlu0 %984
        %986 = vrot.lane.b32.xlu0 %v887, 12
        %v987 = vpop.permute.xlu0 %986
        %988 = vrot.lane.b32.xlu0 %v888, 12
        %v989 = vpop.permute.xlu0 %988
        %990 = vrot.lane.b32.xlu0 %v889, 12
        %v991 = vpop.permute.xlu0 %990
        %992 = vrot.lane.b32.xlu0 %v890, 12
        %v993 = vpop.permute.xlu0 %992
        %994 = vrot.lane.b32.xlu0 %v891, 12
        %v995 = vpop.permute.xlu0 %994
        %996 = vrot.lane.b32.xlu0 %v892, 12
        %v997 = vpop.permute.xlu0 %996
        %998 = vrot.lane.b32.xlu0 %v893, 12
        %v999 = vpop.permute.xlu0 %998
        %1000 = vrot.lane.b32.xlu0 %v894, 12
        %v1001 = vpop.permute.xlu0 %1000
        %1002 = vrot.lane.b32.xlu0 %v895, 12
        %v1003 = vpop.permute.xlu0 %1002
        %1004 = vrot.lane.b32.xlu0 %v896, 12
        %v1005 = vpop.permute.xlu0 %1004
        %1006 = vrot.lane.b32.xlu0 %v897, 12
        %v1007 = vpop.permute.xlu0 %1006
        %1008 = vrot.lane.b32.xlu0 %v898, 12
        %v1009 = vpop.permute.xlu0 %1008
        %1010 = vrot.lane.b32.xlu0 %v899, 12
        %v1011 = vpop.permute.xlu0 %1010
        %1012 = vrot.lane.b32.xlu0 %v900, 12
        %v1013 = vpop.permute.xlu0 %1012
        %1014 = vrot.lane.b32.xlu0 %v901, 12
        %v1015 = vpop.permute.xlu0 %1014
        %1016 = vrot.lane.b32.xlu0 %v902, 12
        %v1017 = vpop.permute.xlu0 %1016
        %1018 = vrot.lane.b32.xlu0 %v903, 12
        %v1019 = vpop.permute.xlu0 %1018
        %1020 = vrot.lane.b32.xlu0 %v904, 12
        %v1021 = vpop.permute.xlu0 %1020
        %1022 = vrot.lane.b32.xlu0 %v905, 12
        %v1023 = vpop.permute.xlu0 %1022
        %1024 = vrot.lane.b32.xlu0 %v906, 12
        %v1025 = vpop.permute.xlu0 %1024
        %1026 = vrot.lane.b32.xlu0 %v907, 12
        %v1027 = vpop.permute.xlu0 %1026
        %1028 = vrot.lane.b32.xlu0 %v908, 12
        %v1029 = vpop.permute.xlu0 %1028
        %1030 = vrot.lane.b32.xlu0 %v909, 12
        %v1031 = vpop.permute.xlu0 %1030
        %1032 = vrot.lane.b32.xlu0 %v910, 12
        %v1033 = vpop.permute.xlu0 %1032
        %1034 = vrot.lane.b32.xlu0 %v911, 12
        %v1035 = vpop.permute.xlu0 %1034
        %1036 = vrot.lane.b32.xlu0 %v912, 12
        %v1037 = vpop.permute.xlu0 %1036
        %1038 = vrot.lane.b32.xlu0 %v913, 12
        %v1039 = vpop.permute.xlu0 %1038
        %1040 = vrot.lane.b32.xlu0 %v914, 12
        %v1041 = vpop.permute.xlu0 %1040
        %1042 = vrot.lane.b32.xlu0 %v915, 12
        %v1043 = vpop.permute.xlu0 %1042
        %1044 = vrot.lane.b32.xlu0 %v982, 12
        %v1045 = vpop.permute.xlu0 %1044
        %1046 = vrot.lane.b32.xlu0 %v983, 12
        %v1047 = vpop.permute.xlu0 %1046
        %vm1080 = vcmask 126048
        %1081 = vst.msk [vmem:[#allocation2] sm:$0xf] %vm1080, %v985
        %1082 = vst.msk [vmem:[#allocation2 + $0x4] sm:$0xf] %vm1080, %v987
        %1083 = vst.msk [vmem:[#allocation2 + $0x8] sm:$0xf] %vm1080, %v989
        %1084 = vst.msk [vmem:[#allocation2 + $0xc] sm:$0xf] %vm1080, %v991
        %1085 = vst.msk [vmem:[#allocation2 + $0x10] sm:$0xf] %vm1080, %v993
        %1086 = vst.msk [vmem:[#allocation2 + $0x14] sm:$0xf] %vm1080, %v995
        %1087 = vst.msk [vmem:[#allocation2 + $0x18] sm:$0xf] %vm1080, %v997
        %1088 = vst.msk [vmem:[#allocation2 + $0x1c] sm:$0xf] %vm1080, %v999
        %1089 = vst.msk [vmem:[#allocation2 + $0x20] sm:$0xf] %vm1080, %v1001
        %1090 = vst.msk [vmem:[#allocation2 + $0x24] sm:$0xf] %vm1080, %v1003
        %1091 = vst.msk [vmem:[#allocation2 + $0x28] sm:$0xf] %vm1080, %v1005
        %1092 = vst.msk [vmem:[#allocation2 + $0x2c] sm:$0xf] %vm1080, %v1007
        %1093 = vst.msk [vmem:[#allocation2 + $0x30] sm:$0xf] %vm1080, %v1009
        %1094 = vst.msk [vmem:[#allocation2 + $0x34] sm:$0xf] %vm1080, %v1011
        %1095 = vst.msk [vmem:[#allocation2 + $0x38] sm:$0xf] %vm1080, %v1013
        %1096 = vst.msk [vmem:[#allocation2 + $0x3c] sm:$0xf] %vm1080, %v1015
        %1097 = vst.msk [vmem:[#allocation2 + $0x40] sm:$0xf] %vm1080, %v1017
        %1098 = vst.msk [vmem:[#allocation2 + $0x44] sm:$0xf] %vm1080, %v1019
        %1099 = vst.msk [vmem:[#allocation2 + $0x48] sm:$0xf] %vm1080, %v1021
        %1100 = vst.msk [vmem:[#allocation2 + $0x4c] sm:$0xf] %vm1080, %v1023
        %1101 = vst.msk [vmem:[#allocation2 + $0x50] sm:$0xf] %vm1080, %v1025
        %1102 = vst.msk [vmem:[#allocation2 + $0x54] sm:$0xf] %vm1080, %v1027
        %1103 = vst.msk [vmem:[#allocation2 + $0x58] sm:$0xf] %vm1080, %v1029
        %1104 = vst.msk [vmem:[#allocation2 + $0x5c] sm:$0xf] %vm1080, %v1031
        %1105 = vst.msk [vmem:[#allocation2 + $0x60] sm:$0xf] %vm1080, %v1033
        %1106 = vst.msk [vmem:[#allocation2 + $0x64] sm:$0xf] %vm1080, %v1035
        %1107 = vst.msk [vmem:[#allocation2 + $0x68] sm:$0xf] %vm1080, %v1037
        %1108 = vst.msk [vmem:[#allocation2 + $0x6c] sm:$0xf] %vm1080, %v1039
        %1109 = vst.msk [vmem:[#allocation2 + $0x70] sm:$0xf] %vm1080, %v1041
        %1110 = vst.msk [vmem:[#allocation2 + $0x74] sm:$0xf] %vm1080, %v1043
        %1111 = vst.msk [vmem:[#allocation2 + $0x78] sm:$0xf] %vm1080, %v1045
        %1112 = vst.msk [vmem:[#allocation2 + $0x7c] sm:$0xf] %vm1080, %v1047
        %1113 = vrot.lane.b32.xlu0 %v888, 24
        %v1114 = vpop.permute.xlu0 %1113
        %1115 = vrot.lane.b32.xlu0 %v889, 24
        %v1116 = vpop.permute.xlu0 %1115
        %1117 = vrot.lane.b32.xlu0 %v890, 24
        %v1118 = vpop.permute.xlu0 %1117
        %1119 = vrot.lane.b32.xlu0 %v891, 24
        %v1120 = vpop.permute.xlu0 %1119
        %1121 = vrot.lane.b32.xlu0 %v892, 24
        %v1122 = vpop.permute.xlu0 %1121
        %1123 = vrot.lane.b32.xlu0 %v893, 24
        %v1124 = vpop.permute.xlu0 %1123
        %1125 = vrot.lane.b32.xlu0 %v894, 24
        %v1126 = vpop.permute.xlu0 %1125
        %1127 = vrot.lane.b32.xlu0 %v895, 24
        %v1128 = vpop.permute.xlu0 %1127
        %1129 = vrot.lane.b32.xlu0 %v896, 24
        %v1130 = vpop.permute.xlu0 %1129
        %1131 = vrot.lane.b32.xlu0 %v897, 24
        %v1132 = vpop.permute.xlu0 %1131
        %1133 = vrot.lane.b32.xlu0 %v898, 24
        %v1134 = vpop.permute.xlu0 %1133
        %1135 = vrot.lane.b32.xlu0 %v899, 24
        %v1136 = vpop.permute.xlu0 %1135
        %1137 = vrot.lane.b32.xlu0 %v900, 24
        %v1138 = vpop.permute.xlu0 %1137
        %1139 = vrot.lane.b32.xlu0 %v901, 24
        %v1140 = vpop.permute.xlu0 %1139
        %1141 = vrot.lane.b32.xlu0 %v902, 24
        %v1142 = vpop.permute.xlu0 %1141
        %1143 = vrot.lane.b32.xlu0 %v903, 24
        %v1144 = vpop.permute.xlu0 %1143
        %1145 = vrot.lane.b32.xlu0 %v904, 24
        %v1146 = vpop.permute.xlu0 %1145
        %1147 = vrot.lane.b32.xlu0 %v905, 24
        %v1148 = vpop.permute.xlu0 %1147
        %1149 = vrot.lane.b32.xlu0 %v906, 24
        %v1150 = vpop.permute.xlu0 %1149
        %1151 = vrot.lane.b32.xlu0 %v907, 24
        %v1152 = vpop.permute.xlu0 %1151
        %1153 = vrot.lane.b32.xlu0 %v908, 24
        %v1154 = vpop.permute.xlu0 %1153
        %1155 = vrot.lane.b32.xlu0 %v909, 24
        %v1156 = vpop.permute.xlu0 %1155
        %1157 = vrot.lane.b32.xlu0 %v910, 24
        %v1158 = vpop.permute.xlu0 %1157
        %1159 = vrot.lane.b32.xlu0 %v911, 24
        %v1160 = vpop.permute.xlu0 %1159
        %1161 = vrot.lane.b32.xlu0 %v912, 24
        %v1162 = vpop.permute.xlu0 %1161
        %1163 = vrot.lane.b32.xlu0 %v913, 24
        %v1164 = vpop.permute.xlu0 %1163
        %1165 = vrot.lane.b32.xlu0 %v914, 24
        %v1166 = vpop.permute.xlu0 %1165
        %1167 = vrot.lane.b32.xlu0 %v915, 24
        %v1168 = vpop.permute.xlu0 %1167
        %1169 = vrot.lane.b32.xlu0 %v982, 24
        %v1170 = vpop.permute.xlu0 %1169
        %1171 = vrot.lane.b32.xlu0 %v983, 24
        %v1172 = vpop.permute.xlu0 %1171
        %vm1203 = vcmask 224448
        %1204 = vst.msk [vmem:[#allocation2] sm:$0xf] %vm1203, %v1114
        %1205 = vst.msk [vmem:[#allocation2 + $0x4] sm:$0xf] %vm1203, %v1116
        %1206 = vst.msk [vmem:[#allocation2 + $0x8] sm:$0xf] %vm1203, %v1118
        %1207 = vst.msk [vmem:[#allocation2 + $0xc] sm:$0xf] %vm1203, %v1120
        %1208 = vst.msk [vmem:[#allocation2 + $0x10] sm:$0xf] %vm1203, %v1122
        %1209 = vst.msk [vmem:[#allocation2 + $0x14] sm:$0xf] %vm1203, %v1124
        %1210 = vst.msk [vmem:[#allocation2 + $0x18] sm:$0xf] %vm1203, %v1126
        %1211 = vst.msk [vmem:[#allocation2 + $0x1c] sm:$0xf] %vm1203, %v1128
        %1212 = vst.msk [vmem:[#allocation2 + $0x20] sm:$0xf] %vm1203, %v1130
        %1213 = vst.msk [vmem:[#allocation2 + $0x24] sm:$0xf] %vm1203, %v1132
        %1214 = vst.msk [vmem:[#allocation2 + $0x28] sm:$0xf] %vm1203, %v1134
        %1215 = vst.msk [vmem:[#allocation2 + $0x2c] sm:$0xf] %vm1203, %v1136
        %1216 = vst.msk [vmem:[#allocation2 + $0x30] sm:$0xf] %vm1203, %v1138
        %1217 = vst.msk [vmem:[#allocation2 + $0x34] sm:$0xf] %vm1203, %v1140
        %1218 = vst.msk [vmem:[#allocation2 + $0x38] sm:$0xf] %vm1203, %v1142
        %1219 = vst.msk [vmem:[#allocation2 + $0x3c] sm:$0xf] %vm1203, %v1144
        %1220 = vst.msk [vmem:[#allocation2 + $0x40] sm:$0xf] %vm1203, %v1146
        %1221 = vst.msk [vmem:[#allocation2 + $0x44] sm:$0xf] %vm1203, %v1148
        %1222 = vst.msk [vmem:[#allocation2 + $0x48] sm:$0xf] %vm1203, %v1150
        %1223 = vst.msk [vmem:[#allocation2 + $0x4c] sm:$0xf] %vm1203, %v1152
        %1224 = vst.msk [vmem:[#allocation2 + $0x50] sm:$0xf] %vm1203, %v1154
        %1225 = vst.msk [vmem:[#allocation2 + $0x54] sm:$0xf] %vm1203, %v1156
        %1226 = vst.msk [vmem:[#allocation2 + $0x58] sm:$0xf] %vm1203, %v1158
        %1227 = vst.msk [vmem:[#allocation2 + $0x5c] sm:$0xf] %vm1203, %v1160
        %1228 = vst.msk [vmem:[#allocation2 + $0x60] sm:$0xf] %vm1203, %v1162
        %1229 = vst.msk [vmem:[#allocation2 + $0x64] sm:$0xf] %vm1203, %v1164
        %1230 = vst.msk [vmem:[#allocation2 + $0x68] sm:$0xf] %vm1203, %v1166
        %1231 = vst.msk [vmem:[#allocation2 + $0x6c] sm:$0xf] %vm1203, %v1168
        %1232 = vst.msk [vmem:[#allocation2 + $0x70] sm:$0xf] %vm1203, %v1170
        %1233 = vst.msk [vmem:[#allocation2 + $0x74] sm:$0xf] %vm1203, %v1172
        %1234 = vst.msk [vmem:[#allocation2 + $0x78] sm:$0xf] %vm1203, 0
        %1235 = vst.msk [vmem:[#allocation2 + $0x7c] sm:$0xf] %vm1203, 0
        %v1236 = vpack.c.bf16 %v184, %v183
        %v1237 = vpack.c.bf16 %v186, %v185
        %v1238 = vpack.c.bf16 %v188, %v187
        %v1239 = vpack.c.bf16 %v190, %v189
        %v1240 = vpack.c.bf16 %v192, %v191
        %v1241 = vpack.c.bf16 %v194, %v193
        %v1242 = vpack.c.bf16 %v196, %v195
        %v1243 = vpack.c.bf16 %v198, %v197
        %v1244 = vpack.c.bf16 %v200, %v199
        %v1245 = vpack.c.bf16 %v202, %v201
        %v1246 = vpack.c.bf16 %v204, %v203
        %v1247 = vpack.c.bf16 %v206, %v205
        %v1248 = vpack.c.bf16 %v208, %v207
        %v1249 = vpack.c.bf16 %v210, %v209
        %v1250 = vpack.c.bf16 %v212, %v211
        %v1251 = vpack.c.bf16 %v214, %v213
        %v1267 = vunpack.c.l.b16 %v1236
        %v1268 = vunpack.c.h.b16 %v1236
        %v1269 = vunpack.c.l.b16 %v1237
        %v1270 = vunpack.c.h.b16 %v1237
        %v1271 = vunpack.c.l.b16 %v1238
        %v1272 = vunpack.c.h.b16 %v1238
        %v1273 = vunpack.c.l.b16 %v1239
        %v1274 = vunpack.c.h.b16 %v1239
        %v1275 = vunpack.c.l.b16 %v1240
        %v1276 = vunpack.c.h.b16 %v1240
        %v1277 = vunpack.c.l.b16 %v1241
        %v1278 = vunpack.c.h.b16 %v1241
        %v1279 = vunpack.c.l.b16 %v1242
        %v1280 = vunpack.c.h.b16 %v1242
        %v1281 = vunpack.c.l.b16 %v1243
        %v1282 = vunpack.c.h.b16 %v1243
        %v1283 = vunpack.c.l.b16 %v1244
        %v1284 = vunpack.c.h.b16 %v1244
        %v1285 = vunpack.c.l.b16 %v1245
        %v1286 = vunpack.c.h.b16 %v1245
        %v1287 = vunpack.c.l.b16 %v1246
        %v1288 = vunpack.c.h.b16 %v1246
        %v1289 = vunpack.c.l.b16 %v1247
        %v1290 = vunpack.c.h.b16 %v1247
        %v1291 = vunpack.c.l.b16 %v1248
        %v1292 = vunpack.c.h.b16 %v1248
        %v1293 = vunpack.c.l.b16 %v1249
        %v1294 = vunpack.c.h.b16 %v1249
        %v1295 = vunpack.c.l.b16 %v1250
        %v1296 = vunpack.c.h.b16 %v1250
        %v1297 = vpack.c.b16 %v1267, %v1267
        %v1298 = vpack.c.b16 %v1268, %v1268
        %v1299 = vpack.c.b16 %v1269, %v1269
        %v1300 = vpack.c.b16 %v1270, %v1270
        %v1301 = vpack.c.b16 %v1271, %v1271
        %v1302 = vpack.c.b16 %v1272, %v1272
        %v1303 = vpack.c.b16 %v1273, %v1273
        %v1304 = vpack.c.b16 %v1274, %v1274
        %v1305 = vpack.c.b16 %v1275, %v1275
        %v1306 = vpack.c.b16 %v1276, %v1276
        %v1307 = vpack.c.b16 %v1277, %v1277
        %v1308 = vpack.c.b16 %v1278, %v1278
        %v1309 = vpack.c.b16 %v1279, %v1279
        %v1310 = vpack.c.b16 %v1280, %v1280
        %v1311 = vpack.c.b16 %v1281, %v1281
        %v1312 = vpack.c.b16 %v1282, %v1282
        %v1313 = vpack.c.b16 %v1283, %v1283
        %v1314 = vpack.c.b16 %v1284, %v1284
        %v1315 = vpack.c.b16 %v1285, %v1285
        %v1316 = vpack.c.b16 %v1286, %v1286
        %v1317 = vpack.c.b16 %v1287, %v1287
        %v1318 = vpack.c.b16 %v1288, %v1288
        %v1319 = vpack.c.b16 %v1289, %v1289
        %v1320 = vpack.c.b16 %v1290, %v1290
        %v1321 = vpack.c.b16 %v1291, %v1291
        %v1322 = vpack.c.b16 %v1292, %v1292
        %v1323 = vpack.c.b16 %v1293, %v1293
        %v1324 = vpack.c.b16 %v1294, %v1294
        %v1325 = vpack.c.b16 %v1295, %v1295
        %v1326 = vpack.c.b16 %v1296, %v1296
        %1327 = vrot.lane.b32.xlu0 %v1297, 4
        %v1328 = vpop.permute.xlu0 %1327
        %1329 = vrot.lane.b32.xlu0 %v1298, 4
        %v1330 = vpop.permute.xlu0 %1329
        %1331 = vrot.lane.b32.xlu0 %v1299, 4
        %v1332 = vpop.permute.xlu0 %1331
        %1333 = vrot.lane.b32.xlu0 %v1300, 4
        %v1334 = vpop.permute.xlu0 %1333
        %1335 = vrot.lane.b32.xlu0 %v1301, 4
        %v1336 = vpop.permute.xlu0 %1335
        %1337 = vrot.lane.b32.xlu0 %v1302, 4
        %v1338 = vpop.permute.xlu0 %1337
        %1339 = vrot.lane.b32.xlu0 %v1303, 4
        %v1340 = vpop.permute.xlu0 %1339
        %1341 = vrot.lane.b32.xlu0 %v1304, 4
        %v1342 = vpop.permute.xlu0 %1341
        %1343 = vrot.lane.b32.xlu0 %v1305, 4
        %v1344 = vpop.permute.xlu0 %1343
        %1345 = vrot.lane.b32.xlu0 %v1306, 4
        %v1346 = vpop.permute.xlu0 %1345
        %1347 = vrot.lane.b32.xlu0 %v1307, 4
        %v1348 = vpop.permute.xlu0 %1347
        %1349 = vrot.lane.b32.xlu0 %v1308, 4
        %v1350 = vpop.permute.xlu0 %1349
        %1351 = vrot.lane.b32.xlu0 %v1309, 4
        %v1352 = vpop.permute.xlu0 %1351
        %1353 = vrot.lane.b32.xlu0 %v1310, 4
        %v1354 = vpop.permute.xlu0 %1353
        %1355 = vrot.lane.b32.xlu0 %v1311, 4
        %v1356 = vpop.permute.xlu0 %1355
        %1357 = vrot.lane.b32.xlu0 %v1312, 4
        %v1358 = vpop.permute.xlu0 %1357
        %1359 = vrot.lane.b32.xlu0 %v1313, 4
        %v1360 = vpop.permute.xlu0 %1359
        %1361 = vrot.lane.b32.xlu0 %v1314, 4
        %v1362 = vpop.permute.xlu0 %1361
        %1363 = vrot.lane.b32.xlu0 %v1315, 4
        %v1364 = vpop.permute.xlu0 %1363
        %1365 = vrot.lane.b32.xlu0 %v1316, 4
        %v1366 = vpop.permute.xlu0 %1365
        %1367 = vrot.lane.b32.xlu0 %v1317, 4
        %v1368 = vpop.permute.xlu0 %1367
        %1369 = vrot.lane.b32.xlu0 %v1318, 4
        %v1370 = vpop.permute.xlu0 %1369
        %1371 = vrot.lane.b32.xlu0 %v1319, 4
        %v1372 = vpop.permute.xlu0 %1371
        %1373 = vrot.lane.b32.xlu0 %v1320, 4
        %v1374 = vpop.permute.xlu0 %1373
        %1375 = vrot.lane.b32.xlu0 %v1321, 4
        %v1376 = vpop.permute.xlu0 %1375
        %1377 = vrot.lane.b32.xlu0 %v1322, 4
        %v1378 = vpop.permute.xlu0 %1377
        %1379 = vrot.lane.b32.xlu0 %v1323, 4
        %v1380 = vpop.permute.xlu0 %1379
        %1381 = vrot.lane.b32.xlu0 %v1324, 4
        %v1382 = vpop.permute.xlu0 %1381
        %1383 = vrot.lane.b32.xlu0 %v1325, 4
        %v1384 = vpop.permute.xlu0 %1383
        %1385 = vrot.lane.b32.xlu0 %v1326, 4
        %v1386 = vpop.permute.xlu0 %1385
        %vm1417 = vcmask 60448
        %1418 = vst.msk [vmem:[#allocation2 + $0x8] sm:$0xf] %vm1417, %v1328
        %1419 = vst.msk [vmem:[#allocation2 + $0xc] sm:$0xf] %vm1417, %v1330
        %1420 = vst.msk [vmem:[#allocation2 + $0x10] sm:$0xf] %vm1417, %v1332
        %1421 = vst.msk [vmem:[#allocation2 + $0x14] sm:$0xf] %vm1417, %v1334
        %1422 = vst.msk [vmem:[#allocation2 + $0x18] sm:$0xf] %vm1417, %v1336
        %1423 = vst.msk [vmem:[#allocation2 + $0x1c] sm:$0xf] %vm1417, %v1338
        %1424 = vst.msk [vmem:[#allocation2 + $0x20] sm:$0xf] %vm1417, %v1340
        %1425 = vst.msk [vmem:[#allocation2 + $0x24] sm:$0xf] %vm1417, %v1342
        %1426 = vst.msk [vmem:[#allocation2 + $0x28] sm:$0xf] %vm1417, %v1344
        %1427 = vst.msk [vmem:[#allocation2 + $0x2c] sm:$0xf] %vm1417, %v1346
        %1428 = vst.msk [vmem:[#allocation2 + $0x30] sm:$0xf] %vm1417, %v1348
        %1429 = vst.msk [vmem:[#allocation2 + $0x34] sm:$0xf] %vm1417, %v1350
        %1430 = vst.msk [vmem:[#allocation2 + $0x38] sm:$0xf] %vm1417, %v1352
        %1431 = vst.msk [vmem:[#allocation2 + $0x3c] sm:$0xf] %vm1417, %v1354
        %1432 = vst.msk [vmem:[#allocation2 + $0x40] sm:$0xf] %vm1417, %v1356
        %1433 = vst.msk [vmem:[#allocation2 + $0x44] sm:$0xf] %vm1417, %v1358
        %1434 = vst.msk [vmem:[#allocation2 + $0x48] sm:$0xf] %vm1417, %v1360
        %1435 = vst.msk [vmem:[#allocation2 + $0x4c] sm:$0xf] %vm1417, %v1362
        %1436 = vst.msk [vmem:[#allocation2 + $0x50] sm:$0xf] %vm1417, %v1364
        %1437 = vst.msk [vmem:[#allocation2 + $0x54] sm:$0xf] %vm1417, %v1366
        %1438 = vst.msk [vmem:[#allocation2 + $0x58] sm:$0xf] %vm1417, %v1368
        %1439 = vst.msk [vmem:[#allocation2 + $0x5c] sm:$0xf] %vm1417, %v1370
        %1440 = vst.msk [vmem:[#allocation2 + $0x60] sm:$0xf] %vm1417, %v1372
        %1441 = vst.msk [vmem:[#allocation2 + $0x64] sm:$0xf] %vm1417, %v1374
        %1442 = vst.msk [vmem:[#allocation2 + $0x68] sm:$0xf] %vm1417, %v1376
        %1443 = vst.msk [vmem:[#allocation2 + $0x6c] sm:$0xf] %vm1417, %v1378
        %1444 = vst.msk [vmem:[#allocation2 + $0x70] sm:$0xf] %vm1417, %v1380
        %1445 = vst.msk [vmem:[#allocation2 + $0x74] sm:$0xf] %vm1417, %v1382
        %1446 = vst.msk [vmem:[#allocation2 + $0x78] sm:$0xf] %vm1417, %v1384
        %1447 = vst.msk [vmem:[#allocation2 + $0x7c] sm:$0xf] %vm1417, %v1386
        %1448 = vst.msk [vmem:[#allocation2] sm:$0xf] %vm1417, 0
        %1449 = vst.msk [vmem:[#allocation2 + $0x4] sm:$0xf] %vm1417, 0
        %v1451 = vunpack.c.l.b16 %v1251
        %v1452 = vunpack.c.h.b16 %v1251
        %v1453 = vpack.c.b16 %v1451, %v1451
        %v1454 = vpack.c.b16 %v1452, %v1452
        %1455 = vrot.lane.b32.xlu0 %v1297, 16
        %v1456 = vpop.permute.xlu0 %1455
        %1457 = vrot.lane.b32.xlu0 %v1298, 16
        %v1458 = vpop.permute.xlu0 %1457
        %1459 = vrot.lane.b32.xlu0 %v1299, 16
        %v1460 = vpop.permute.xlu0 %1459
        %1461 = vrot.lane.b32.xlu0 %v1300, 16
        %v1462 = vpop.permute.xlu0 %1461
        %1463 = vrot.lane.b32.xlu0 %v1301, 16
        %v1464 = vpop.permute.xlu0 %1463
        %1465 = vrot.lane.b32.xlu0 %v1302, 16
        %v1466 = vpop.permute.xlu0 %1465
        %1467 = vrot.lane.b32.xlu0 %v1303, 16
        %v1468 = vpop.permute.xlu0 %1467
        %1469 = vrot.lane.b32.xlu0 %v1304, 16
        %v1470 = vpop.permute.xlu0 %1469
        %1471 = vrot.lane.b32.xlu0 %v1305, 16
        %v1472 = vpop.permute.xlu0 %1471
        %1473 = vrot.lane.b32.xlu0 %v1306, 16
        %v1474 = vpop.permute.xlu0 %1473
        %1475 = vrot.lane.b32.xlu0 %v1307, 16
        %v1476 = vpop.permute.xlu0 %1475
        %1477 = vrot.lane.b32.xlu0 %v1308, 16
        %v1478 = vpop.permute.xlu0 %1477
        %1479 = vrot.lane.b32.xlu0 %v1309, 16
        %v1480 = vpop.permute.xlu0 %1479
        %1481 = vrot.lane.b32.xlu0 %v1310, 16
        %v1482 = vpop.permute.xlu0 %1481
        %1483 = vrot.lane.b32.xlu0 %v1311, 16
        %v1484 = vpop.permute.xlu0 %1483
        %1485 = vrot.lane.b32.xlu0 %v1312, 16
        %v1486 = vpop.permute.xlu0 %1485
        %1487 = vrot.lane.b32.xlu0 %v1313, 16
        %v1488 = vpop.permute.xlu0 %1487
        %1489 = vrot.lane.b32.xlu0 %v1314, 16
        %v1490 = vpop.permute.xlu0 %1489
        %1491 = vrot.lane.b32.xlu0 %v1315, 16
        %v1492 = vpop.permute.xlu0 %1491
        %1493 = vrot.lane.b32.xlu0 %v1316, 16
        %v1494 = vpop.permute.xlu0 %1493
        %1495 = vrot.lane.b32.xlu0 %v1317, 16
        %v1496 = vpop.permute.xlu0 %1495
        %1497 = vrot.lane.b32.xlu0 %v1318, 16
        %v1498 = vpop.permute.xlu0 %1497
        %1499 = vrot.lane.b32.xlu0 %v1319, 16
        %v1500 = vpop.permute.xlu0 %1499
        %1501 = vrot.lane.b32.xlu0 %v1320, 16
        %v1502 = vpop.permute.xlu0 %1501
        %1503 = vrot.lane.b32.xlu0 %v1321, 16
        %v1504 = vpop.permute.xlu0 %1503
        %1505 = vrot.lane.b32.xlu0 %v1322, 16
        %v1506 = vpop.permute.xlu0 %1505
        %1507 = vrot.lane.b32.xlu0 %v1323, 16
        %v1508 = vpop.permute.xlu0 %1507
        %1509 = vrot.lane.b32.xlu0 %v1324, 16
        %v1510 = vpop.permute.xlu0 %1509
        %1511 = vrot.lane.b32.xlu0 %v1325, 16
        %v1512 = vpop.permute.xlu0 %1511
        %1513 = vrot.lane.b32.xlu0 %v1326, 16
        %v1514 = vpop.permute.xlu0 %1513
        %1515 = vrot.lane.b32.xlu0 %v1453, 16
        %v1516 = vpop.permute.xlu0 %1515
        %1517 = vrot.lane.b32.xlu0 %v1454, 16
        %v1518 = vpop.permute.xlu0 %1517
        %vm1551 = vcmask 158848
        %1552 = vst.msk [vmem:[#allocation2] sm:$0xf] %vm1551, %v1456
        %1553 = vst.msk [vmem:[#allocation2 + $0x4] sm:$0xf] %vm1551, %v1458
        %1554 = vst.msk [vmem:[#allocation2 + $0x8] sm:$0xf] %vm1551, %v1460
        %1555 = vst.msk [vmem:[#allocation2 + $0xc] sm:$0xf] %vm1551, %v1462
        %1556 = vst.msk [vmem:[#allocation2 + $0x10] sm:$0xf] %vm1551, %v1464
        %1557 = vst.msk [vmem:[#allocation2 + $0x14] sm:$0xf] %vm1551, %v1466
        %1558 = vst.msk [vmem:[#allocation2 + $0x18] sm:$0xf] %vm1551, %v1468
        %1559 = vst.msk [vmem:[#allocation2 + $0x1c] sm:$0xf] %vm1551, %v1470
        %1560 = vst.msk [vmem:[#allocation2 + $0x20] sm:$0xf] %vm1551, %v1472
        %1561 = vst.msk [vmem:[#allocation2 + $0x24] sm:$0xf] %vm1551, %v1474
        %1562 = vst.msk [vmem:[#allocation2 + $0x28] sm:$0xf] %vm1551, %v1476
        %1563 = vst.msk [vmem:[#allocation2 + $0x2c] sm:$0xf] %vm1551, %v1478
        %1564 = vst.msk [vmem:[#allocation2 + $0x30] sm:$0xf] %vm1551, %v1480
        %1565 = vst.msk [vmem:[#allocation2 + $0x34] sm:$0xf] %vm1551, %v1482
        %1566 = vst.msk [vmem:[#allocation2 + $0x38] sm:$0xf] %vm1551, %v1484
        %1567 = vst.msk [vmem:[#allocation2 + $0x3c] sm:$0xf] %vm1551, %v1486
        %1568 = vst.msk [vmem:[#allocation2 + $0x40] sm:$0xf] %vm1551, %v1488
        %1569 = vst.msk [vmem:[#allocation2 + $0x44] sm:$0xf] %vm1551, %v1490
        %1570 = vst.msk [vmem:[#allocation2 + $0x48] sm:$0xf] %vm1551, %v1492
        %1571 = vst.msk [vmem:[#allocation2 + $0x4c] sm:$0xf] %vm1551, %v1494
        %1572 = vst.msk [vmem:[#allocation2 + $0x50] sm:$0xf] %vm1551, %v1496
        %1573 = vst.msk [vmem:[#allocation2 + $0x54] sm:$0xf] %vm1551, %v1498
        %1574 = vst.msk [vmem:[#allocation2 + $0x58] sm:$0xf] %vm1551, %v1500
        %1575 = vst.msk [vmem:[#allocation2 + $0x5c] sm:$0xf] %vm1551, %v1502
        %1576 = vst.msk [vmem:[#allocation2 + $0x60] sm:$0xf] %vm1551, %v1504
        %1577 = vst.msk [vmem:[#allocation2 + $0x64] sm:$0xf] %vm1551, %v1506
        %1578 = vst.msk [vmem:[#allocation2 + $0x68] sm:$0xf] %vm1551, %v1508
        %1579 = vst.msk [vmem:[#allocation2 + $0x6c] sm:$0xf] %vm1551, %v1510
        %1580 = vst.msk [vmem:[#allocation2 + $0x70] sm:$0xf] %vm1551, %v1512
        %1581 = vst.msk [vmem:[#allocation2 + $0x74] sm:$0xf] %vm1551, %v1514
        %1582 = vst.msk [vmem:[#allocation2 + $0x78] sm:$0xf] %vm1551, %v1516
        %1583 = vst.msk [vmem:[#allocation2 + $0x7c] sm:$0xf] %vm1551, %v1518
        %1584 = vrot.lane.b32.xlu0 %v1299, 28
        %v1585 = vpop.permute.xlu0 %1584
        %1586 = vrot.lane.b32.xlu0 %v1300, 28
        %v1587 = vpop.permute.xlu0 %1586
        %1588 = vrot.lane.b32.xlu0 %v1301, 28
        %v1589 = vpop.permute.xlu0 %1588
        %1590 = vrot.lane.b32.xlu0 %v1302, 28
        %v1591 = vpop.permute.xlu0 %1590
        %1592 = vrot.lane.b32.xlu0 %v1303, 28
        %v1593 = vpop.permute.xlu0 %1592
        %1594 = vrot.lane.b32.xlu0 %v1304, 28
        %v1595 = vpop.permute.xlu0 %1594
        %1596 = vrot.lane.b32.xlu0 %v1305, 28
        %v1597 = vpop.permute.xlu0 %1596
        %1598 = vrot.lane.b32.xlu0 %v1306, 28
        %v1599 = vpop.permute.xlu0 %1598
        %1600 = vrot.lane.b32.xlu0 %v1307, 28
        %v1601 = vpop.permute.xlu0 %1600
        %1602 = vrot.lane.b32.xlu0 %v1308, 28
        %v1603 = vpop.permute.xlu0 %1602
        %1604 = vrot.lane.b32.xlu0 %v1309, 28
        %v1605 = vpop.permute.xlu0 %1604
        %1606 = vrot.lane.b32.xlu0 %v1310, 28
        %v1607 = vpop.permute.xlu0 %1606
        %1608 = vrot.lane.b32.xlu0 %v1311, 28
        %v1609 = vpop.permute.xlu0 %1608
        %1610 = vrot.lane.b32.xlu0 %v1312, 28
        %v1611 = vpop.permute.xlu0 %1610
        %1612 = vrot.lane.b32.xlu0 %v1313, 28
        %v1613 = vpop.permute.xlu0 %1612
        %1614 = vrot.lane.b32.xlu0 %v1314, 28
        %v1615 = vpop.permute.xlu0 %1614
        %1616 = vrot.lane.b32.xlu0 %v1315, 28
        %v1617 = vpop.permute.xlu0 %1616
        %1618 = vrot.lane.b32.xlu0 %v1316, 28
        %v1619 = vpop.permute.xlu0 %1618
        %1620 = vrot.lane.b32.xlu0 %v1317, 28
        %v1621 = vpop.permute.xlu0 %1620
        %1622 = vrot.lane.b32.xlu0 %v1318, 28
        %v1623 = vpop.permute.xlu0 %1622
        %1624 = vrot.lane.b32.xlu0 %v1319, 28
        %v1625 = vpop.permute.xlu0 %1624
        %1626 = vrot.lane.b32.xlu0 %v1320, 28
        %v1627 = vpop.permute.xlu0 %1626
        %1628 = vrot.lane.b32.xlu0 %v1321, 28
        %v1629 = vpop.permute.xlu0 %1628
        %1630 = vrot.lane.b32.xlu0 %v1322, 28
        %v1631 = vpop.permute.xlu0 %1630
        %1632 = vrot.lane.b32.xlu0 %v1323, 28
        %v1633 = vpop.permute.xlu0 %1632
        %1634 = vrot.lane.b32.xlu0 %v1324, 28
        %v1635 = vpop.permute.xlu0 %1634
        %1636 = vrot.lane.b32.xlu0 %v1325, 28
        %v1637 = vpop.permute.xlu0 %1636
        %1638 = vrot.lane.b32.xlu0 %v1326, 28
        %v1639 = vpop.permute.xlu0 %1638
        %1640 = vrot.lane.b32.xlu0 %v1453, 28
        %v1641 = vpop.permute.xlu0 %1640
        %1642 = vrot.lane.b32.xlu0 %v1454, 28
        %v1643 = vpop.permute.xlu0 %1642
        %vm1674 = vcmask 257248
        %1675 = vst.msk [vmem:[#allocation2] sm:$0xf] %vm1674, %v1585
        %1676 = vst.msk [vmem:[#allocation2 + $0x4] sm:$0xf] %vm1674, %v1587
        %1677 = vst.msk [vmem:[#allocation2 + $0x8] sm:$0xf] %vm1674, %v1589
        %1678 = vst.msk [vmem:[#allocation2 + $0xc] sm:$0xf] %vm1674, %v1591
        %1679 = vst.msk [vmem:[#allocation2 + $0x10] sm:$0xf] %vm1674, %v1593
        %1680 = vst.msk [vmem:[#allocation2 + $0x14] sm:$0xf] %vm1674, %v1595
        %1681 = vst.msk [vmem:[#allocation2 + $0x18] sm:$0xf] %vm1674, %v1597
        %1682 = vst.msk [vmem:[#allocation2 + $0x1c] sm:$0xf] %vm1674, %v1599
        %1683 = vst.msk [vmem:[#allocation2 + $0x20] sm:$0xf] %vm1674, %v1601
        %1684 = vst.msk [vmem:[#allocation2 + $0x24] sm:$0xf] %vm1674, %v1603
        %1685 = vst.msk [vmem:[#allocation2 + $0x28] sm:$0xf] %vm1674, %v1605
        %1686 = vst.msk [vmem:[#allocation2 + $0x2c] sm:$0xf] %vm1674, %v1607
        %1687 = vst.msk [vmem:[#allocation2 + $0x30] sm:$0xf] %vm1674, %v1609
        %1688 = vst.msk [vmem:[#allocation2 + $0x34] sm:$0xf] %vm1674, %v1611
        %1689 = vst.msk [vmem:[#allocation2 + $0x38] sm:$0xf] %vm1674, %v1613
        %1690 = vst.msk [vmem:[#allocation2 + $0x3c] sm:$0xf] %vm1674, %v1615
        %1691 = vst.msk [vmem:[#allocation2 + $0x40] sm:$0xf] %vm1674, %v1617
        %1692 = vst.msk [vmem:[#allocation2 + $0x44] sm:$0xf] %vm1674, %v1619
        %1693 = vst.msk [vmem:[#allocation2 + $0x48] sm:$0xf] %vm1674, %v1621
        %1694 = vst.msk [vmem:[#allocation2 + $0x4c] sm:$0xf] %vm1674, %v1623
        %1695 = vst.msk [vmem:[#allocation2 + $0x50] sm:$0xf] %vm1674, %v1625
        %1696 = vst.msk [vmem:[#allocation2 + $0x54] sm:$0xf] %vm1674, %v1627
        %1697 = vst.msk [vmem:[#allocation2 + $0x58] sm:$0xf] %vm1674, %v1629
        %1698 = vst.msk [vmem:[#allocation2 + $0x5c] sm:$0xf] %vm1674, %v1631
        %1699 = vst.msk [vmem:[#allocation2 + $0x60] sm:$0xf] %vm1674, %v1633
        %1700 = vst.msk [vmem:[#allocation2 + $0x64] sm:$0xf] %vm1674, %v1635
        %1701 = vst.msk [vmem:[#allocation2 + $0x68] sm:$0xf] %vm1674, %v1637
        %1702 = vst.msk [vmem:[#allocation2 + $0x6c] sm:$0xf] %vm1674, %v1639
        %1703 = vst.msk [vmem:[#allocation2 + $0x70] sm:$0xf] %vm1674, %v1641
        %1704 = vst.msk [vmem:[#allocation2 + $0x74] sm:$0xf] %vm1674, %v1643
        %1705 = vst.msk [vmem:[#allocation2 + $0x78] sm:$0xf] %vm1674, 0
        %1706 = vst.msk [vmem:[#allocation2 + $0x7c] sm:$0xf] %vm1674, 0
        %v1707 = vrot.slane %v183, 1
        %v1708 = vrot.slane %v184, 1
        %v1709 = vrot.slane %v185, 1
        %v1710 = vrot.slane %v186, 1
        %v1711 = vrot.slane %v187, 1
        %v1712 = vrot.slane %v188, 1
        %v1713 = vrot.slane %v189, 1
        %v1714 = vrot.slane %v190, 1
        %v1715 = vrot.slane %v191, 1
        %v1716 = vrot.slane %v192, 1
        %v1717 = vrot.slane %v193, 1
        %v1718 = vrot.slane %v194, 1
        %v1719 = vrot.slane %v195, 1
        %v1720 = vrot.slane %v196, 1
        %v1721 = vrot.slane %v197, 1
        %v1722 = vrot.slane %v198, 1
        %v1723 = vrot.slane %v199, 1
        %v1724 = vrot.slane %v200, 1
        %v1725 = vrot.slane %v201, 1
        %v1726 = vrot.slane %v202, 1
        %v1727 = vrot.slane %v203, 1
        %v1728 = vrot.slane %v204, 1
        %v1729 = vrot.slane %v205, 1
        %v1730 = vrot.slane %v206, 1
        %v1731 = vrot.slane %v207, 1
        %v1732 = vrot.slane %v208, 1
        %v1733 = vrot.slane %v209, 1
        %v1734 = vrot.slane %v210, 1
        %v1735 = vrot.slane %v211, 1
        %v1736 = vrot.slane %v212, 1
        %v1737 = vrot.slane %v213, 1
        %v1738 = vrot.slane %v214, 1
        %vm1739 = vcmp.lt.s32.totalorder %v216, 7
        %v1740 = vsel %vm1739, %v1737, %v1738
        %v1741 = vsel %vm1739, %v1736, %v1737
        %v1742 = vsel %vm1739, %v1735, %v1736
        %v1743 = vsel %vm1739, %v1734, %v1735
        %v1744 = vsel %vm1739, %v1733, %v1734
        %v1745 = vsel %vm1739, %v1732, %v1733
        %v1746 = vsel %vm1739, %v1731, %v1732
        %v1747 = vsel %vm1739, %v1730, %v1731
        %v1748 = vsel %vm1739, %v1729, %v1730
        %v1749 = vsel %vm1739, %v1728, %v1729
        %v1750 = vsel %vm1739, %v1727, %v1728
        %v1751 = vsel %vm1739, %v1726, %v1727
        %v1752 = vsel %vm1739, %v1725, %v1726
        %v1753 = vsel %vm1739, %v1724, %v1725
        %v1754 = vsel %vm1739, %v1723, %v1724
        %v1755 = vsel %vm1739, %v1722, %v1723
        %v1756 = vsel %vm1739, %v1721, %v1722
        %v1757 = vsel %vm1739, %v1720, %v1721
        %v1758 = vsel %vm1739, %v1719, %v1720
        %v1759 = vsel %vm1739, %v1718, %v1719
        %v1760 = vsel %vm1739, %v1717, %v1718
        %v1761 = vsel %vm1739, %v1716, %v1717
        %v1762 = vsel %vm1739, %v1715, %v1716
        %v1763 = vsel %vm1739, %v1714, %v1715
        %v1764 = vsel %vm1739, %v1713, %v1714
        %v1765 = vsel %vm1739, %v1712, %v1713
        %v1766 = vsel %vm1739, %v1711, %v1712
        %v1767 = vsel %vm1739, %v1710, %v1711
        %v1768 = vsel %vm1739, %v1709, %v1710
        %v1769 = vsel %vm1739, %v1708, %v1709
        %v1770 = vsel %vm1739, %v1707, %v1708
        %v1771 = vsel %vm1739, %v1738, %v1707
        %vm1772 = vcmp.lt.s32.totalorder %v600, 15
        %vm1773 = vcmp.lt.s32.totalorder %v601, 15
        %vm1774 = vcmp.lt.s32.totalorder %v602, 15
        %vm1775 = vcmp.lt.s32.totalorder %v603, 15
        %vm1776 = vcmp.lt.s32.totalorder %v604, 15
        %vm1777 = vcmp.lt.s32.totalorder %v605, 15
        %vm1778 = vcmp.lt.s32.totalorder %v606, 15
        %vm1779 = vcmp.lt.s32.totalorder %v607, 15
        %vm1780 = vcmp.lt.s32.totalorder %v608, 15
        %vm1781 = vcmp.lt.s32.totalorder %v609, 15
        %vm1782 = vcmp.lt.s32.totalorder %v610, 15
        %vm1783 = vcmp.lt.s32.totalorder %v611, 15
        %vm1784 = vcmp.lt.s32.totalorder %v612, 15
        %vm1785 = vcmp.lt.s32.totalorder %v613, 15
        %vm1786 = vcmp.lt.s32.totalorder %v614, 15
        %vm1787 = vcmp.lt.s32.totalorder %v615, 15
        %vm1788 = vcmp.lt.s32.totalorder %v616, 15
        %vm1789 = vcmp.lt.s32.totalorder %v617, 15
        %vm1790 = vcmp.lt.s32.totalorder %v618, 15
        %vm1791 = vcmp.lt.s32.totalorder %v619, 15
        %vm1792 = vcmp.lt.s32.totalorder %v620, 15
        %vm1793 = vcmp.lt.s32.totalorder %v621, 15
        %vm1794 = vcmp.lt.s32.totalorder %v622, 15
        %vm1795 = vcmp.lt.s32.totalorder %v623, 15
        %vm1796 = vcmp.lt.s32.totalorder %v624, 15
        %vm1797 = vcmp.lt.s32.totalorder %v625, 15
        %vm1798 = vcmp.lt.s32.totalorder %v626, 15
        %vm1799 = vcmp.lt.s32.totalorder %v627, 15
        %vm1800 = vcmp.lt.s32.totalorder %v628, 15
        %vm1801 = vcmp.lt.s32.totalorder %v629, 15
        %vm1802 = vcmp.lt.s32.totalorder %v630, 15
        %vm1803 = vcmp.lt.s32.totalorder %v631, 15
        %v1804 = vsel %vm1772, 1, 0
        %v1805 = vsel %vm1773, 1, 0
        %v1806 = vsel %vm1774, 1, 0
        %v1807 = vsel %vm1775, 1, 0
        %v1808 = vsel %vm1776, 1, 0
        %v1809 = vsel %vm1777, 1, 0
        %v1810 = vsel %vm1778, 1, 0
        %v1811 = vsel %vm1779, 1, 0
        %v1812 = vsel %vm1780, 1, 0
        %v1813 = vsel %vm1781, 1, 0
        %v1814 = vsel %vm1782, 1, 0
        %v1815 = vsel %vm1783, 1, 0
        %v1816 = vsel %vm1784, 1, 0
        %v1817 = vsel %vm1785, 1, 0
        %v1818 = vsel %vm1786, 1, 0
        %v1819 = vsel %vm1787, 1, 0
        %v1820 = vsel %vm1788, 1, 0
        %v1821 = vsel %vm1789, 1, 0
        %v1822 = vsel %vm1790, 1, 0
        %v1823 = vsel %vm1791, 1, 0
        %v1824 = vsel %vm1792, 1, 0
        %v1825 = vsel %vm1793, 1, 0
        %v1826 = vsel %vm1794, 1, 0
        %v1827 = vsel %vm1795, 1, 0
        %v1828 = vsel %vm1796, 1, 0
        %v1829 = vsel %vm1797, 1, 0
        %v1830 = vsel %vm1798, 1, 0
        %v1831 = vsel %vm1799, 1, 0
        %v1832 = vsel %vm1800, 1, 0
        %v1833 = vsel %vm1801, 1, 0
        %v1834 = vsel %vm1802, 1, 0
        %v1835 = vsel %vm1803, 1, 0
        %vm1836 = vcmp.eq.s32.totalorder %v1804, 1
        %vm1837 = vcmp.eq.s32.totalorder %v1805, 1
        %vm1838 = vcmp.eq.s32.totalorder %v1806, 1
        %vm1839 = vcmp.eq.s32.totalorder %v1807, 1
        %vm1840 = vcmp.eq.s32.totalorder %v1808, 1
        %vm1841 = vcmp.eq.s32.totalorder %v1809, 1
        %vm1842 = vcmp.eq.s32.totalorder %v1810, 1
        %vm1843 = vcmp.eq.s32.totalorder %v1811, 1
        %vm1844 = vcmp.eq.s32.totalorder %v1812, 1
        %vm1845 = vcmp.eq.s32.totalorder %v1813, 1
        %vm1846 = vcmp.eq.s32.totalorder %v1814, 1
        %vm1847 = vcmp.eq.s32.totalorder %v1815, 1
        %vm1848 = vcmp.eq.s32.totalorder %v1816, 1
        %vm1849 = vcmp.eq.s32.totalorder %v1817, 1
        %vm1850 = vcmp.eq.s32.totalorder %v1818, 1
        %vm1851 = vcmp.eq.s32.totalorder %v1819, 1
        %vm1852 = vcmp.eq.s32.totalorder %v1820, 1
        %vm1853 = vcmp.eq.s32.totalorder %v1821, 1
        %vm1854 = vcmp.eq.s32.totalorder %v1822, 1
        %vm1855 = vcmp.eq.s32.totalorder %v1823, 1
        %vm1856 = vcmp.eq.s32.totalorder %v1824, 1
        %vm1857 = vcmp.eq.s32.totalorder %v1825, 1
        %vm1858 = vcmp.eq.s32.totalorder %v1826, 1
        %vm1859 = vcmp.eq.s32.totalorder %v1827, 1
        %vm1860 = vcmp.eq.s32.totalorder %v1828, 1
        %vm1861 = vcmp.eq.s32.totalorder %v1829, 1
        %vm1862 = vcmp.eq.s32.totalorder %v1830, 1
        %vm1863 = vcmp.eq.s32.totalorder %v1831, 1
        %vm1864 = vcmp.eq.s32.totalorder %v1832, 1
        %vm1865 = vcmp.eq.s32.totalorder %v1833, 1
        %vm1866 = vcmp.eq.s32.totalorder %v1834, 1
        %vm1867 = vcmp.eq.s32.totalorder %v1835, 1
        %v1868 = vsel %vm1836, %v1770, 0.0
        %v1869 = vsel %vm1837, %v1769, 0.0
        %v1870 = vsel %vm1838, %v1768, 0.0
        %v1871 = vsel %vm1839, %v1767, 0.0
        %v1872 = vsel %vm1840, %v1766, 0.0
        %v1873 = vsel %vm1841, %v1765, 0.0
        %v1874 = vsel %vm1842, %v1764, 0.0
        %v1875 = vsel %vm1843, %v1763, 0.0
        %v1876 = vsel %vm1844, %v1762, 0.0
        %v1877 = vsel %vm1845, %v1761, 0.0
        %v1878 = vsel %vm1846, %v1760, 0.0
        %v1879 = vsel %vm1847, %v1759, 0.0
        %v1880 = vsel %vm1848, %v1758, 0.0
        %v1881 = vsel %vm1849, %v1757, 0.0
        %v1882 = vsel %vm1850, %v1756, 0.0
        %v1883 = vsel %vm1851, %v1755, 0.0
        %v1884 = vsel %vm1852, %v1754, 0.0
        %v1885 = vsel %vm1853, %v1753, 0.0
        %v1886 = vsel %vm1854, %v1752, 0.0
        %v1887 = vsel %vm1855, %v1751, 0.0
        %v1888 = vsel %vm1856, %v1750, 0.0
        %v1889 = vsel %vm1857, %v1749, 0.0
        %v1890 = vsel %vm1858, %v1748, 0.0
        %v1891 = vsel %vm1859, %v1747, 0.0
        %v1892 = vsel %vm1860, %v1746, 0.0
        %v1893 = vsel %vm1861, %v1745, 0.0
        %v1894 = vsel %vm1862, %v1744, 0.0
        %v1895 = vsel %vm1863, %v1743, 0.0
        %v1896 = vsel %vm1864, %v1742, 0.0
        %v1897 = vsel %vm1865, %v1741, 0.0
        %v1898 = vsel %vm1866, %v1740, 0.0
        %v1899 = vsel %vm1867, %v1771, 0.0
        %v1900 = vpack.c.bf16 %v1869, %v1868
        %v1901 = vpack.c.bf16 %v1871, %v1870
        %v1902 = vpack.c.bf16 %v1873, %v1872
        %v1903 = vpack.c.bf16 %v1875, %v1874
        %v1904 = vpack.c.bf16 %v1877, %v1876
        %v1905 = vpack.c.bf16 %v1879, %v1878
        %v1906 = vpack.c.bf16 %v1881, %v1880
        %v1907 = vpack.c.bf16 %v1883, %v1882
        %v1908 = vpack.c.bf16 %v1885, %v1884
        %v1909 = vpack.c.bf16 %v1887, %v1886
        %v1910 = vpack.c.bf16 %v1889, %v1888
        %v1911 = vpack.c.bf16 %v1891, %v1890
        %v1912 = vpack.c.bf16 %v1893, %v1892
        %v1913 = vpack.c.bf16 %v1895, %v1894
        %v1914 = vpack.c.bf16 %v1897, %v1896
        %v1915 = vpack.c.bf16 %v1899, %v1898
        %v1931 = vunpack.c.l.b16 %v1900
        %v1932 = vunpack.c.h.b16 %v1900
        %v1933 = vunpack.c.l.b16 %v1901
        %v1934 = vunpack.c.h.b16 %v1901
        %v1935 = vunpack.c.l.b16 %v1902
        %v1936 = vunpack.c.h.b16 %v1902
        %v1937 = vunpack.c.l.b16 %v1903
        %v1938 = vunpack.c.h.b16 %v1903
        %v1939 = vunpack.c.l.b16 %v1904
        %v1940 = vunpack.c.h.b16 %v1904
        %v1941 = vunpack.c.l.b16 %v1905
        %v1942 = vunpack.c.h.b16 %v1905
        %v1943 = vunpack.c.l.b16 %v1906
        %v1944 = vunpack.c.h.b16 %v1906
        %v1945 = vunpack.c.l.b16 %v1907
        %v1946 = vunpack.c.h.b16 %v1907
        %v1947 = vunpack.c.l.b16 %v1908
        %v1948 = vunpack.c.h.b16 %v1908
        %v1949 = vunpack.c.l.b16 %v1909
        %v1950 = vunpack.c.h.b16 %v1909
        %v1951 = vunpack.c.l.b16 %v1910
        %v1952 = vunpack.c.h.b16 %v1910
        %v1953 = vunpack.c.l.b16 %v1911
        %v1954 = vunpack.c.h.b16 %v1911
        %v1955 = vunpack.c.l.b16 %v1912
        %v1956 = vunpack.c.h.b16 %v1912
        %v1957 = vunpack.c.l.b16 %v1913
        %v1958 = vunpack.c.h.b16 %v1913
        %v1959 = vunpack.c.l.b16 %v1914
        %v1960 = vunpack.c.h.b16 %v1914
        %v1961 = vpack.c.b16 %v1931, %v1931
        %v1962 = vpack.c.b16 %v1932, %v1932
        %v1963 = vpack.c.b16 %v1933, %v1933
        %v1964 = vpack.c.b16 %v1934, %v1934
        %v1965 = vpack.c.b16 %v1935, %v1935
        %v1966 = vpack.c.b16 %v1936, %v1936
        %v1967 = vpack.c.b16 %v1937, %v1937
        %v1968 = vpack.c.b16 %v1938, %v1938
        %v1969 = vpack.c.b16 %v1939, %v1939
        %v1970 = vpack.c.b16 %v1940, %v1940
        %v1971 = vpack.c.b16 %v1941, %v1941
        %v1972 = vpack.c.b16 %v1942, %v1942
        %v1973 = vpack.c.b16 %v1943, %v1943
        %v1974 = vpack.c.b16 %v1944, %v1944
        %v1975 = vpack.c.b16 %v1945, %v1945
        %v1976 = vpack.c.b16 %v1946, %v1946
        %v1977 = vpack.c.b16 %v1947, %v1947
        %v1978 = vpack.c.b16 %v1948, %v1948
        %v1979 = vpack.c.b16 %v1949, %v1949
        %v1980 = vpack.c.b16 %v1950, %v1950
        %v1981 = vpack.c.b16 %v1951, %v1951
        %v1982 = vpack.c.b16 %v1952, %v1952
        %v1983 = vpack.c.b16 %v1953, %v1953
        %v1984 = vpack.c.b16 %v1954, %v1954
        %v1985 = vpack.c.b16 %v1955, %v1955
        %v1986 = vpack.c.b16 %v1956, %v1956
        %v1987 = vpack.c.b16 %v1957, %v1957
        %v1988 = vpack.c.b16 %v1958, %v1958
        %v1989 = vpack.c.b16 %v1959, %v1959
        %v1990 = vpack.c.b16 %v1960, %v1960
        %1991 = vrot.lane.b32.xlu0 %v1961, 8
        %v1992 = vpop.permute.xlu0 %1991
        %1993 = vrot.lane.b32.xlu0 %v1962, 8
        %v1994 = vpop.permute.xlu0 %1993
        %1995 = vrot.lane.b32.xlu0 %v1963, 8
        %v1996 = vpop.permute.xlu0 %1995
        %1997 = vrot.lane.b32.xlu0 %v1964, 8
        %v1998 = vpop.permute.xlu0 %1997
        %1999 = vrot.lane.b32.xlu0 %v1965, 8
        %v2000 = vpop.permute.xlu0 %1999
        %2001 = vrot.lane.b32.xlu0 %v1966, 8
        %v2002 = vpop.permute.xlu0 %2001
        %2003 = vrot.lane.b32.xlu0 %v1967, 8
        %v2004 = vpop.permute.xlu0 %2003
        %2005 = vrot.lane.b32.xlu0 %v1968, 8
        %v2006 = vpop.permute.xlu0 %2005
        %2007 = vrot.lane.b32.xlu0 %v1969, 8
        %v2008 = vpop.permute.xlu0 %2007
        %2009 = vrot.lane.b32.xlu0 %v1970, 8
        %v2010 = vpop.permute.xlu0 %2009
        %2011 = vrot.lane.b32.xlu0 %v1971, 8
        %v2012 = vpop.permute.xlu0 %2011
        %2013 = vrot.lane.b32.xlu0 %v1972, 8
        %v2014 = vpop.permute.xlu0 %2013
        %2015 = vrot.lane.b32.xlu0 %v1973, 8
        %v2016 = vpop.permute.xlu0 %2015
        %2017 = vrot.lane.b32.xlu0 %v1974, 8
        %v2018 = vpop.permute.xlu0 %2017
        %2019 = vrot.lane.b32.xlu0 %v1975, 8
        %v2020 = vpop.permute.xlu0 %2019
        %2021 = vrot.lane.b32.xlu0 %v1976, 8
        %v2022 = vpop.permute.xlu0 %2021
        %2023 = vrot.lane.b32.xlu0 %v1977, 8
        %v2024 = vpop.permute.xlu0 %2023
        %2025 = vrot.lane.b32.xlu0 %v1978, 8
        %v2026 = vpop.permute.xlu0 %2025
        %2027 = vrot.lane.b32.xlu0 %v1979, 8
        %v2028 = vpop.permute.xlu0 %2027
        %2029 = vrot.lane.b32.xlu0 %v1980, 8
        %v2030 = vpop.permute.xlu0 %2029
        %2031 = vrot.lane.b32.xlu0 %v1981, 8
        %v2032 = vpop.permute.xlu0 %2031
        %2033 = vrot.lane.b32.xlu0 %v1982, 8
        %v2034 = vpop.permute.xlu0 %2033
        %2035 = vrot.lane.b32.xlu0 %v1983, 8
        %v2036 = vpop.permute.xlu0 %2035
        %2037 = vrot.lane.b32.xlu0 %v1984, 8
        %v2038 = vpop.permute.xlu0 %2037
        %2039 = vrot.lane.b32.xlu0 %v1985, 8
        %v2040 = vpop.permute.xlu0 %2039
        %2041 = vrot.lane.b32.xlu0 %v1986, 8
        %v2042 = vpop.permute.xlu0 %2041
        %2043 = vrot.lane.b32.xlu0 %v1987, 8
        %v2044 = vpop.permute.xlu0 %2043
        %2045 = vrot.lane.b32.xlu0 %v1988, 8
        %v2046 = vpop.permute.xlu0 %2045
        %2047 = vrot.lane.b32.xlu0 %v1989, 8
        %v2048 = vpop.permute.xlu0 %2047
        %2049 = vrot.lane.b32.xlu0 %v1990, 8
        %v2050 = vpop.permute.xlu0 %2049
        %vm2081 = vcmask 93248
        %2082 = vst.msk [vmem:[#allocation2 + $0x8] sm:$0xf] %vm2081, %v1992
        %2083 = vst.msk [vmem:[#allocation2 + $0xc] sm:$0xf] %vm2081, %v1994
        %2084 = vst.msk [vmem:[#allocation2 + $0x10] sm:$0xf] %vm2081, %v1996
        %2085 = vst.msk [vmem:[#allocation2 + $0x14] sm:$0xf] %vm2081, %v1998
        %2086 = vst.msk [vmem:[#allocation2 + $0x18] sm:$0xf] %vm2081, %v2000
        %2087 = vst.msk [vmem:[#allocation2 + $0x1c] sm:$0xf] %vm2081, %v2002
        %2088 = vst.msk [vmem:[#allocation2 + $0x20] sm:$0xf] %vm2081, %v2004
        %2089 = vst.msk [vmem:[#allocation2 + $0x24] sm:$0xf] %vm2081, %v2006
        %2090 = vst.msk [vmem:[#allocation2 + $0x28] sm:$0xf] %vm2081, %v2008
        %2091 = vst.msk [vmem:[#allocation2 + $0x2c] sm:$0xf] %vm2081, %v2010
        %2092 = vst.msk [vmem:[#allocation2 + $0x30] sm:$0xf] %vm2081, %v2012
        %2093 = vst.msk [vmem:[#allocation2 + $0x34] sm:$0xf] %vm2081, %v2014
        %2094 = vst.msk [vmem:[#allocation2 + $0x38] sm:$0xf] %vm2081, %v2016
        %2095 = vst.msk [vmem:[#allocation2 + $0x3c] sm:$0xf] %vm2081, %v2018
        %2096 = vst.msk [vmem:[#allocation2 + $0x40] sm:$0xf] %vm2081, %v2020
        %2097 = vst.msk [vmem:[#allocation2 + $0x44] sm:$0xf] %vm2081, %v2022
        %2098 = vst.msk [vmem:[#allocation2 + $0x48] sm:$0xf] %vm2081, %v2024
        %2099 = vst.msk [vmem:[#allocation2 + $0x4c] sm:$0xf] %vm2081, %v2026
        %2100 = vst.msk [vmem:[#allocation2 + $0x50] sm:$0xf] %vm2081, %v2028
        %2101 = vst.msk [vmem:[#allocation2 + $0x54] sm:$0xf] %vm2081, %v2030
        %2102 = vst.msk [vmem:[#allocation2 + $0x58] sm:$0xf] %vm2081, %v2032
        %2103 = vst.msk [vmem:[#allocation2 + $0x5c] sm:$0xf] %vm2081, %v2034
        %2104 = vst.msk [vmem:[#allocation2 + $0x60] sm:$0xf] %vm2081, %v2036
        %2105 = vst.msk [vmem:[#allocation2 + $0x64] sm:$0xf] %vm2081, %v2038
        %2106 = vst.msk [vmem:[#allocation2 + $0x68] sm:$0xf] %vm2081, %v2040
        %2107 = vst.msk [vmem:[#allocation2 + $0x6c] sm:$0xf] %vm2081, %v2042
        %2108 = vst.msk [vmem:[#allocation2 + $0x70] sm:$0xf] %vm2081, %v2044
        %2109 = vst.msk [vmem:[#allocation2 + $0x74] sm:$0xf] %vm2081, %v2046
        %2110 = vst.msk [vmem:[#allocation2 + $0x78] sm:$0xf] %vm2081, %v2048
        %2111 = vst.msk [vmem:[#allocation2 + $0x7c] sm:$0xf] %vm2081, %v2050
        %2112 = vst.msk [vmem:[#allocation2] sm:$0xf] %vm2081, 0
        %2113 = vst.msk [vmem:[#allocation2 + $0x4] sm:$0xf] %vm2081, 0
        %v2115 = vunpack.c.l.b16 %v1915
        %v2116 = vunpack.c.h.b16 %v1915
        %v2117 = vpack.c.b16 %v2115, %v2115
        %v2118 = vpack.c.b16 %v2116, %v2116
        %2119 = vrot.lane.b32.xlu0 %v1961, 20
        %v2120 = vpop.permute.xlu0 %2119
        %2121 = vrot.lane.b32.xlu0 %v1962, 20
        %v2122 = vpop.permute.xlu0 %2121
        %2123 = vrot.lane.b32.xlu0 %v1963, 20
        %v2124 = vpop.permute.xlu0 %2123
        %2125 = vrot.lane.b32.xlu0 %v1964, 20
        %v2126 = vpop.permute.xlu0 %2125
        %2127 = vrot.lane.b32.xlu0 %v1965, 20
        %v2128 = vpop.permute.xlu0 %2127
        %2129 = vrot.lane.b32.xlu0 %v1966, 20
        %v2130 = vpop.permute.xlu0 %2129
        %2131 = vrot.lane.b32.xlu0 %v1967, 20
        %v2132 = vpop.permute.xlu0 %2131
        %2133 = vrot.lane.b32.xlu0 %v1968, 20
        %v2134 = vpop.permute.xlu0 %2133
        %2135 = vrot.lane.b32.xlu0 %v1969, 20
        %v2136 = vpop.permute.xlu0 %2135
        %2137 = vrot.lane.b32.xlu0 %v1970, 20
        %v2138 = vpop.permute.xlu0 %2137
        %2139 = vrot.lane.b32.xlu0 %v1971, 20
        %v2140 = vpop.permute.xlu0 %2139
        %2141 = vrot.lane.b32.xlu0 %v1972, 20
        %v2142 = vpop.permute.xlu0 %2141
        %2143 = vrot.lane.b32.xlu0 %v1973, 20
        %v2144 = vpop.permute.xlu0 %2143
        %2145 = vrot.lane.b32.xlu0 %v1974, 20
        %v2146 = vpop.permute.xlu0 %2145
        %2147 = vrot.lane.b32.xlu0 %v1975, 20
        %v2148 = vpop.permute.xlu0 %2147
        %2149 = vrot.lane.b32.xlu0 %v1976, 20
        %v2150 = vpop.permute.xlu0 %2149
        %2151 = vrot.lane.b32.xlu0 %v1977, 20
        %v2152 = vpop.permute.xlu0 %2151
        %2153 = vrot.lane.b32.xlu0 %v1978, 20
        %v2154 = vpop.permute.xlu0 %2153
        %2155 = vrot.lane.b32.xlu0 %v1979, 20
        %v2156 = vpop.permute.xlu0 %2155
        %2157 = vrot.lane.b32.xlu0 %v1980, 20
        %v2158 = vpop.permute.xlu0 %2157
        %2159 = vrot.lane.b32.xlu0 %v1981, 20
        %v2160 = vpop.permute.xlu0 %2159
        %2161 = vrot.lane.b32.xlu0 %v1982, 20
        %v2162 = vpop.permute.xlu0 %2161
        %2163 = vrot.lane.b32.xlu0 %v1983, 20
        %v2164 = vpop.permute.xlu0 %2163
        %2165 = vrot.lane.b32.xlu0 %v1984, 20
        %v2166 = vpop.permute.xlu0 %2165
        %2167 = vrot.lane.b32.xlu0 %v1985, 20
        %v2168 = vpop.permute.xlu0 %2167
        %2169 = vrot.lane.b32.xlu0 %v1986, 20
        %v2170 = vpop.permute.xlu0 %2169
        %2171 = vrot.lane.b32.xlu0 %v1987, 20
        %v2172 = vpop.permute.xlu0 %2171
        %2173 = vrot.lane.b32.xlu0 %v1988, 20
        %v2174 = vpop.permute.xlu0 %2173
        %2175 = vrot.lane.b32.xlu0 %v1989, 20
        %v2176 = vpop.permute.xlu0 %2175
        %2177 = vrot.lane.b32.xlu0 %v1990, 20
        %v2178 = vpop.permute.xlu0 %2177
        %2179 = vrot.lane.b32.xlu0 %v2117, 20
        %v2180 = vpop.permute.xlu0 %2179
        %2181 = vrot.lane.b32.xlu0 %v2118, 20
        %v2182 = vpop.permute.xlu0 %2181
        %vm2215 = vcmask 191648
        %2216 = vst.msk [vmem:[#allocation2] sm:$0xf] %vm2215, %v2120
        %2217 = vst.msk [vmem:[#allocation2 + $0x4] sm:$0xf] %vm2215, %v2122
        %2218 = vst.msk [vmem:[#allocation2 + $0x8] sm:$0xf] %vm2215, %v2124
        %2219 = vst.msk [vmem:[#allocation2 + $0xc] sm:$0xf] %vm2215, %v2126
        %2220 = vst.msk [vmem:[#allocation2 + $0x10] sm:$0xf] %vm2215, %v2128
        %2221 = vst.msk [vmem:[#allocation2 + $0x14] sm:$0xf] %vm2215, %v2130
        %2222 = vst.msk [vmem:[#allocation2 + $0x18] sm:$0xf] %vm2215, %v2132
        %2223 = vst.msk [vmem:[#allocation2 + $0x1c] sm:$0xf] %vm2215, %v2134
        %2224 = vst.msk [vmem:[#allocation2 + $0x20] sm:$0xf] %vm2215, %v2136
        %2225 = vst.msk [vmem:[#allocation2 + $0x24] sm:$0xf] %vm2215, %v2138
        %2226 = vst.msk [vmem:[#allocation2 + $0x28] sm:$0xf] %vm2215, %v2140
        %2227 = vst.msk [vmem:[#allocation2 + $0x2c] sm:$0xf] %vm2215, %v2142
        %2228 = vst.msk [vmem:[#allocation2 + $0x30] sm:$0xf] %vm2215, %v2144
        %2229 = vst.msk [vmem:[#allocation2 + $0x34] sm:$0xf] %vm2215, %v2146
        %2230 = vst.msk [vmem:[#allocation2 + $0x38] sm:$0xf] %vm2215, %v2148
        %2231 = vst.msk [vmem:[#allocation2 + $0x3c] sm:$0xf] %vm2215, %v2150
        %2232 = vst.msk [vmem:[#allocation2 + $0x40] sm:$0xf] %vm2215, %v2152
        %2233 = vst.msk [vmem:[#allocation2 + $0x44] sm:$0xf] %vm2215, %v2154
        %2234 = vst.msk [vmem:[#allocation2 + $0x48] sm:$0xf] %vm2215, %v2156
        %2235 = vst.msk [vmem:[#allocation2 + $0x4c] sm:$0xf] %vm2215, %v2158
        %2236 = vst.msk [vmem:[#allocation2 + $0x50] sm:$0xf] %vm2215, %v2160
        %2237 = vst.msk [vmem:[#allocation2 + $0x54] sm:$0xf] %vm2215, %v2162
        %2238 = vst.msk [vmem:[#allocation2 + $0x58] sm:$0xf] %vm2215, %v2164
        %2239 = vst.msk [vmem:[#allocation2 + $0x5c] sm:$0xf] %vm2215, %v2166
        %2240 = vst.msk [vmem:[#allocation2 + $0x60] sm:$0xf] %vm2215, %v2168
        %2241 = vst.msk [vmem:[#allocation2 + $0x64] sm:$0xf] %vm2215, %v2170
        %2242 = vst.msk [vmem:[#allocation2 + $0x68] sm:$0xf] %vm2215, %v2172
        %2243 = vst.msk [vmem:[#allocation2 + $0x6c] sm:$0xf] %vm2215, %v2174
        %2244 = vst.msk [vmem:[#allocation2 + $0x70] sm:$0xf] %vm2215, %v2176
        %2245 = vst.msk [vmem:[#allocation2 + $0x74] sm:$0xf] %vm2215, %v2178
        %2246 = vst.msk [vmem:[#allocation2 + $0x78] sm:$0xf] %vm2215, %v2180
        %2247 = vst.msk [vmem:[#allocation2 + $0x7c] sm:$0xf] %vm2215, %v2182
        %2248 = vrot.lane.b32.xlu0 %v1963, 32
        %v2249 = vpop.permute.xlu0 %2248
        %2250 = vrot.lane.b32.xlu0 %v1964, 32
        %v2251 = vpop.permute.xlu0 %2250
        %2252 = vrot.lane.b32.xlu0 %v1965, 32
        %v2253 = vpop.permute.xlu0 %2252
        %2254 = vrot.lane.b32.xlu0 %v1966, 32
        %v2255 = vpop.permute.xlu0 %2254
        %2256 = vrot.lane.b32.xlu0 %v1967, 32
        %v2257 = vpop.permute.xlu0 %2256
        %2258 = vrot.lane.b32.xlu0 %v1968, 32
        %v2259 = vpop.permute.xlu0 %2258
        %2260 = vrot.lane.b32.xlu0 %v1969, 32
        %v2261 = vpop.permute.xlu0 %2260
        %2262 = vrot.lane.b32.xlu0 %v1970, 32
        %v2263 = vpop.permute.xlu0 %2262
        %2264 = vrot.lane.b32.xlu0 %v1971, 32
        %v2265 = vpop.permute.xlu0 %2264
        %2266 = vrot.lane.b32.xlu0 %v1972, 32
        %v2267 = vpop.permute.xlu0 %2266
        %2268 = vrot.lane.b32.xlu0 %v1973, 32
        %v2269 = vpop.permute.xlu0 %2268
        %2270 = vrot.lane.b32.xlu0 %v1974, 32
        %v2271 = vpop.permute.xlu0 %2270
        %2272 = vrot.lane.b32.xlu0 %v1975, 32
        %v2273 = vpop.permute.xlu0 %2272
        %2274 = vrot.lane.b32.xlu0 %v1976, 32
        %v2275 = vpop.permute.xlu0 %2274
        %2276 = vrot.lane.b32.xlu0 %v1977, 32
        %v2277 = vpop.permute.xlu0 %2276
        %2278 = vrot.lane.b32.xlu0 %v1978, 32
        %v2279 = vpop.permute.xlu0 %2278
        %2280 = vrot.lane.b32.xlu0 %v1979, 32
        %v2281 = vpop.permute.xlu0 %2280
        %2282 = vrot.lane.b32.xlu0 %v1980, 32
        %v2283 = vpop.permute.xlu0 %2282
        %2284 = vrot.lane.b32.xlu0 %v1981, 32
        %v2285 = vpop.permute.xlu0 %2284
        %2286 = vrot.lane.b32.xlu0 %v1982, 32
        %v2287 = vpop.permute.xlu0 %2286
        %2288 = vrot.lane.b32.xlu0 %v1983, 32
        %v2289 = vpop.permute.xlu0 %2288
        %2290 = vrot.lane.b32.xlu0 %v1984, 32
        %v2291 = vpop.permute.xlu0 %2290
        %2292 = vrot.lane.b32.xlu0 %v1985, 32
        %v2293 = vpop.permute.xlu0 %2292
        %2294 = vrot.lane.b32.xlu0 %v1986, 32
        %v2295 = vpop.permute.xlu0 %2294
        %2296 = vrot.lane.b32.xlu0 %v1987, 32
        %v2297 = vpop.permute.xlu0 %2296
        %2298 = vrot.lane.b32.xlu0 %v1988, 32
        %v2299 = vpop.permute.xlu0 %2298
        %2300 = vrot.lane.b32.xlu0 %v1989, 32
        %v2301 = vpop.permute.xlu0 %2300
        %2302 = vrot.lane.b32.xlu0 %v1990, 32
        %v2303 = vpop.permute.xlu0 %2302
        %2304 = vrot.lane.b32.xlu0 %v2117, 32
        %v2305 = vpop.permute.xlu0 %2304
        %2306 = vrot.lane.b32.xlu0 %v2118, 32
        %v2307 = vpop.permute.xlu0 %2306
        %vm2338 = vcmask 290048
        %2339 = vst.msk [vmem:[#allocation2] sm:$0xf] %vm2338, %v2249
        %2340 = vst.msk [vmem:[#allocation2 + $0x4] sm:$0xf] %vm2338, %v2251
        %2341 = vst.msk [vmem:[#allocation2 + $0x8] sm:$0xf] %vm2338, %v2253
        %2342 = vst.msk [vmem:[#allocation2 + $0xc] sm:$0xf] %vm2338, %v2255
        %2343 = vst.msk [vmem:[#allocation2 + $0x10] sm:$0xf] %vm2338, %v2257
        %2344 = vst.msk [vmem:[#allocation2 + $0x14] sm:$0xf] %vm2338, %v2259
        %2345 = vst.msk [vmem:[#allocation2 + $0x18] sm:$0xf] %vm2338, %v2261
        %2346 = vst.msk [vmem:[#allocation2 + $0x1c] sm:$0xf] %vm2338, %v2263
        %2347 = vst.msk [vmem:[#allocation2 + $0x20] sm:$0xf] %vm2338, %v2265
        %2348 = vst.msk [vmem:[#allocation2 + $0x24] sm:$0xf] %vm2338, %v2267
        %2349 = vst.msk [vmem:[#allocation2 + $0x28] sm:$0xf] %vm2338, %v2269
        %2350 = vst.msk [vmem:[#allocation2 + $0x2c] sm:$0xf] %vm2338, %v2271
        %2351 = vst.msk [vmem:[#allocation2 + $0x30] sm:$0xf] %vm2338, %v2273
        %2352 = vst.msk [vmem:[#allocation2 + $0x34] sm:$0xf] %vm2338, %v2275
        %2353 = vst.msk [vmem:[#allocation2 + $0x38] sm:$0xf] %vm2338, %v2277
        %2354 = vst.msk [vmem:[#allocation2 + $0x3c] sm:$0xf] %vm2338, %v2279
        %2355 = vst.msk [vmem:[#allocation2 + $0x40] sm:$0xf] %vm2338, %v2281
        %2356 = vst.msk [vmem:[#allocation2 + $0x44] sm:$0xf] %vm2338, %v2283
        %2357 = vst.msk [vmem:[#allocation2 + $0x48] sm:$0xf] %vm2338, %v2285
        %2358 = vst.msk [vmem:[#allocation2 + $0x4c] sm:$0xf] %vm2338, %v2287
        %2359 = vst.msk [vmem:[#allocation2 + $0x50] sm:$0xf] %vm2338, %v2289
        %2360 = vst.msk [vmem:[#allocation2 + $0x54] sm:$0xf] %vm2338, %v2291
        %2361 = vst.msk [vmem:[#allocation2 + $0x58] sm:$0xf] %vm2338, %v2293
        %2362 = vst.msk [vmem:[#allocation2 + $0x5c] sm:$0xf] %vm2338, %v2295
        %2363 = vst.msk [vmem:[#allocation2 + $0x60] sm:$0xf] %vm2338, %v2297
        %2364 = vst.msk [vmem:[#allocation2 + $0x64] sm:$0xf] %vm2338, %v2299
        %2365 = vst.msk [vmem:[#allocation2 + $0x68] sm:$0xf] %vm2338, %v2301
        %2366 = vst.msk [vmem:[#allocation2 + $0x6c] sm:$0xf] %vm2338, %v2303
        %2367 = vst.msk [vmem:[#allocation2 + $0x70] sm:$0xf] %vm2338, %v2305
        %2368 = vst.msk [vmem:[#allocation2 + $0x74] sm:$0xf] %vm2338, %v2307
        %2369 = vst.msk [vmem:[#allocation2 + $0x78] sm:$0xf] %vm2338, 0
        %2370 = vst.msk [vmem:[#allocation2 + $0x7c] sm:$0xf] %vm2338, 0
        %v2371 = vld [vmem:[#allocation2] sm:$0xf]
        %v2372 = vld [vmem:[#allocation2 + $0x4] sm:$0xf]
        %v2373 = vld [vmem:[#allocation2 + $0x8] sm:$0xf]
        %v2374 = vld [vmem:[#allocation2 + $0xc] sm:$0xf]
        %v2375 = vld [vmem:[#allocation2 + $0x10] sm:$0xf]
        %v2376 = vld [vmem:[#allocation2 + $0x14] sm:$0xf]
        %v2377 = vld [vmem:[#allocation2 + $0x18] sm:$0xf]
        %v2378 = vld [vmem:[#allocation2 + $0x1c] sm:$0xf]
        %v2379 = vld [vmem:[#allocation2 + $0x20] sm:$0xf]
        %v2380 = vld [vmem:[#allocation2 + $0x24] sm:$0xf]
        %v2381 = vld [vmem:[#allocation2 + $0x28] sm:$0xf]
        %v2382 = vld [vmem:[#allocation2 + $0x2c] sm:$0xf]
        %v2383 = vld [vmem:[#allocation2 + $0x30] sm:$0xf]
        %v2384 = vld [vmem:[#allocation2 + $0x34] sm:$0xf]
        %v2385 = vld [vmem:[#allocation2 + $0x38] sm:$0xf]
        %v2386 = vld [vmem:[#allocation2 + $0x3c] sm:$0xf]
        %v2387 = vld [vmem:[#allocation2 + $0x40] sm:$0xf]
        %v2388 = vld [vmem:[#allocation2 + $0x44] sm:$0xf]
        %v2389 = vld [vmem:[#allocation2 + $0x48] sm:$0xf]
        %v2390 = vld [vmem:[#allocation2 + $0x4c] sm:$0xf]
        %v2391 = vld [vmem:[#allocation2 + $0x50] sm:$0xf]
        %v2392 = vld [vmem:[#allocation2 + $0x54] sm:$0xf]
        %v2393 = vld [vmem:[#allocation2 + $0x58] sm:$0xf]
        %v2394 = vld [vmem:[#allocation2 + $0x5c] sm:$0xf]
        %v2395 = vld [vmem:[#allocation2 + $0x60] sm:$0xf]
        %v2396 = vld [vmem:[#allocation2 + $0x64] sm:$0xf]
        %v2397 = vld [vmem:[#allocation2 + $0x68] sm:$0xf]
        %v2398 = vld [vmem:[#allocation2 + $0x6c] sm:$0xf]
        %v2399 = vld [vmem:[#allocation2 + $0x70] sm:$0xf]
        %v2400 = vld [vmem:[#allocation2 + $0x74] sm:$0xf]
        %v2401 = vld [vmem:[#allocation2 + $0x78] sm:$0xf]
        %v2402 = vld [vmem:[#allocation2 + $0x7c] sm:$0xf]
        %v2403 = vld [vmem:[%s1] sm:$0xf]
        %v2404 = vld [vmem:[%s1 + $0x4] sm:$0xf]
        %v2405 = vld [vmem:[%s1 + $0x8] sm:$0xf]
        %v2406 = vld [vmem:[%s1 + $0xc] sm:$0xf]
        %v2407 = vld [vmem:[%s1 + $0x10] sm:$0x3]
        %v2440 = vunpack.c.l.b16 %v2371
        %v2441 = vunpack.c.l.b16 %v2372
        %v2442 = vunpack.c.l.b16 %v2373
        %v2443 = vunpack.c.l.b16 %v2374
        %v2444 = vunpack.c.l.b16 %v2375
        %v2445 = vunpack.c.l.b16 %v2376
        %v2446 = vunpack.c.l.b16 %v2377
        %v2447 = vunpack.c.l.b16 %v2378
        %v2448 = vunpack.c.l.b16 %v2379
        %v2449 = vunpack.c.l.b16 %v2380
        %v2450 = vunpack.c.l.b16 %v2381
        %v2451 = vunpack.c.l.b16 %v2382
        %v2452 = vunpack.c.l.b16 %v2383
        %v2453 = vunpack.c.l.b16 %v2384
        %v2454 = vunpack.c.l.b16 %v2385
        %v2455 = vunpack.c.l.b16 %v2386
        %v2456 = vunpack.c.l.b16 %v2387
        %v2457 = vunpack.c.l.b16 %v2388
        %v2458 = vunpack.c.l.b16 %v2389
        %v2459 = vunpack.c.l.b16 %v2390
        %v2460 = vunpack.c.l.b16 %v2391
        %v2461 = vunpack.c.l.b16 %v2392
        %v2462 = vunpack.c.l.b16 %v2393
        %v2463 = vunpack.c.l.b16 %v2394
        %v2464 = vunpack.c.l.b16 %v2395
        %v2465 = vunpack.c.l.b16 %v2396
        %v2466 = vunpack.c.l.b16 %v2397
        %v2467 = vunpack.c.l.b16 %v2398
        %v2468 = vunpack.c.l.b16 %v2399
        %v2469 = vunpack.c.l.b16 %v2400
        %v2470 = vunpack.c.l.b16 %v2401
        %v2471 = vunpack.c.l.b16 %v2402
        %v2472 = vpack.c.b16 %v2441, %v2440
        %v2473 = vpack.c.b16 %v2443, %v2442
        %v2474 = vpack.c.b16 %v2445, %v2444
        %v2475 = vpack.c.b16 %v2447, %v2446
        %v2476 = vpack.c.b16 %v2449, %v2448
        %v2477 = vpack.c.b16 %v2451, %v2450
        %v2478 = vpack.c.b16 %v2453, %v2452
        %v2479 = vpack.c.b16 %v2455, %v2454
        %v2480 = vpack.c.b16 %v2457, %v2456
        %v2481 = vpack.c.b16 %v2459, %v2458
        %v2482 = vpack.c.b16 %v2461, %v2460
        %v2483 = vpack.c.b16 %v2463, %v2462
        %v2484 = vpack.c.b16 %v2465, %v2464
        %v2485 = vpack.c.b16 %v2467, %v2466
        %v2486 = vpack.c.b16 %v2469, %v2468
        %v2487 = vpack.c.b16 %v2471, %v2470
        %v2493 = vunpack.c.l.b16 %v2403
        %v2494 = vunpack.c.l.b16 %v2404
        %v2495 = vunpack.c.l.b16 %v2405
        %v2496 = vunpack.c.l.b16 %v2406
        %v2497 = vunpack.c.l.b16 %v2407
        %v2498 = vpack.c.b16 %v2494, %v2493
        %v2499 = vpack.c.b16 %v2496, %v2495
        %v2500 = vpack.c.b16 %v2497, %v2497
        %vm2503 = vcmask 293888
        %v2505 = vsel %vm2503, %v2472, 0
        %v2508 = vsel %vm2503, %v2473, 0
        %v2511 = vsel %vm2503, %v2474, 0
        %v2514 = vsel %vm2503, %v2475, 0
        %v2517 = vsel %vm2503, %v2476, 0
        %v2520 = vsel %vm2503, %v2477, 0
        %v2523 = vsel %vm2503, %v2478, 0
        %v2526 = vsel %vm2503, %v2479, 0
        %v2529 = vsel %vm2503, %v2480, 0
        %v2532 = vsel %vm2503, %v2481, 0
        %v2535 = vsel %vm2503, %v2482, 0
        %v2538 = vsel %vm2503, %v2483, 0
        %v2541 = vsel %vm2503, %v2484, 0
        %v2544 = vsel %vm2503, %v2485, 0
        %v2547 = vsel %vm2503, %v2486, 0
        %v2550 = vsel %vm2503, %v2487, 0
        %vm2552 = vcmask 1041408
        %v2554 = vsel %vm2552, %v2500, 0
        %2556 = vmatprep.subr.bf16.mxu0 0
        %2557 = vmatpush1.bf16.msra.mxu0 0
        %2558 = vmatprep.subr.bf16.mxu0 0
        %2559 = vmatpush1.bf16.msra.mxu0 0
        %2560 = vmatprep.subr.bf16.mxu0 0
        %2561 = vmatpush1.bf16.msra.mxu0 0
        %2562 = vmatprep.subr.bf16.mxu0 0
        %2563 = vmatpush1.bf16.msra.mxu0 0
        %2564 = vmatprep.subr.bf16.mxu0 0
        %2565 = vmatpush1.bf16.msra.mxu0 0
        %2566 = vmatprep.subr.bf16.mxu0 0
        %2567 = vmatpush1.bf16.msra.mxu0 %v2554
        %2568 = vmatprep.subr.bf16.mxu0 0
        %2569 = vmatpush1.bf16.msra.mxu0 %v2499
        %2570 = vmatprep.subr.bf16.mxu0 0
        %2571 = vmatpush1.bf16.msra.mxu0 %v2498
        %2572 = vmatprep.subr.bf16.mxu0 0
        %2573 = vmatpush2.bf16.msra.mxu0 0
        %2574 = vmatprep.subr.bf16.mxu0 0
        %2575 = vmatpush2.bf16.msra.mxu0 0
        %2576 = vmatprep.subr.bf16.mxu0 0
        %2577 = vmatpush2.bf16.msra.mxu0 0
        %2578 = vmatprep.subr.bf16.mxu0 0
        %2579 = vmatpush2.bf16.msra.mxu0 0
        %2580 = vmatprep.subr.bf16.mxu0 0
        %2581 = vmatpush2.bf16.msra.mxu0 0
        %2582 = vmatprep.subr.bf16.mxu0 0
        %2583 = vmatpush2.bf16.msra.mxu0 0
        %2584 = vmatprep.subr.bf16.mxu0 0
        %2585 = vmatpush2.bf16.msra.mxu0 0
        %2586 = vmatprep.subr.bf16.mxu0 0
        %2587 = vmatpush2.bf16.msra.mxu0 0
        %2588 = vmatprep.mubr.bf16.mxu0 0
        %2589 = vmatmul.mubr.bf16.gmra.mxu0 %v2505
        %v2590 = vpop.f32.mrf.mxu0
        %v2591 = vadd.f32 0.0, %v2590
        %v2592 = vpop.f32.mrf.mxu0
        %v2593 = vpop.f32.mrf.mxu0
        %v2594 = vadd.f32 0.0, %v2593
        %v2595 = vpop.f32.mrf.mxu0
        %2596 = vmatprep.mubr.bf16.mxu0 0
        %2597 = vmatmul.mubr.bf16.gmra.mxu0 %v2508
        %v2598 = vpop.f32.mrf.mxu0
        %v2599 = vadd.f32 0.0, %v2598
        %v2600 = vpop.f32.mrf.mxu0
        %v2601 = vpop.f32.mrf.mxu0
        %v2602 = vadd.f32 0.0, %v2601
        %v2603 = vpop.f32.mrf.mxu0
        %2604 = vmatprep.mubr.bf16.mxu0 0
        %2605 = vmatmul.mubr.bf16.gmra.mxu0 %v2511
        %v2606 = vpop.f32.mrf.mxu0
        %v2607 = vadd.f32 0.0, %v2606
        %v2608 = vpop.f32.mrf.mxu0
        %v2609 = vpop.f32.mrf.mxu0
        %v2610 = vadd.f32 0.0, %v2609
        %v2611 = vpop.f32.mrf.mxu0
        %2612 = vmatprep.mubr.bf16.mxu0 0
        %2613 = vmatmul.mubr.bf16.gmra.mxu0 %v2514
        %v2614 = vpop.f32.mrf.mxu0
        %v2615 = vadd.f32 0.0, %v2614
        %v2616 = vpop.f32.mrf.mxu0
        %v2617 = vpop.f32.mrf.mxu0
        %v2618 = vadd.f32 0.0, %v2617
        %v2619 = vpop.f32.mrf.mxu0
        %2620 = vmatprep.mubr.bf16.mxu0 0
        %2621 = vmatmul.mubr.bf16.gmra.mxu0 %v2517
        %v2622 = vpop.f32.mrf.mxu0
        %v2623 = vadd.f32 0.0, %v2622
        %v2624 = vpop.f32.mrf.mxu0
        %v2625 = vpop.f32.mrf.mxu0
        %v2626 = vadd.f32 0.0, %v2625
        %v2627 = vpop.f32.mrf.mxu0
        %2628 = vmatprep.mubr.bf16.mxu0 0
        %2629 = vmatmul.mubr.bf16.gmra.mxu0 %v2520
        %v2630 = vpop.f32.mrf.mxu0
        %v2631 = vadd.f32 0.0, %v2630
        %v2632 = vpop.f32.mrf.mxu0
        %v2633 = vpop.f32.mrf.mxu0
        %v2634 = vadd.f32 0.0, %v2633
        %v2635 = vpop.f32.mrf.mxu0
        %2636 = vmatprep.mubr.bf16.mxu0 0
        %2637 = vmatmul.mubr.bf16.gmra.mxu0 %v2523
        %v2638 = vpop.f32.mrf.mxu0
        %v2639 = vadd.f32 0.0, %v2638
        %v2640 = vpop.f32.mrf.mxu0
        %v2641 = vpop.f32.mrf.mxu0
        %v2642 = vadd.f32 0.0, %v2641
        %v2643 = vpop.f32.mrf.mxu0
        %2644 = vmatprep.mubr.bf16.mxu0 0
        %2645 = vmatmul.mubr.bf16.gmra.mxu0 %v2526
        %v2646 = vpop.f32.mrf.mxu0
        %v2647 = vadd.f32 0.0, %v2646
        %v2648 = vpop.f32.mrf.mxu0
        %v2649 = vpop.f32.mrf.mxu0
        %v2650 = vadd.f32 0.0, %v2649
        %v2651 = vpop.f32.mrf.mxu0
        %2652 = vmatprep.mubr.bf16.mxu0 0
        %2653 = vmatmul.mubr.bf16.gmra.mxu0 %v2529
        %v2654 = vpop.f32.mrf.mxu0
        %v2655 = vadd.f32 0.0, %v2654
        %v2656 = vpop.f32.mrf.mxu0
        %v2657 = vpop.f32.mrf.mxu0
        %v2658 = vadd.f32 0.0, %v2657
        %v2659 = vpop.f32.mrf.mxu0
        %2660 = vmatprep.mubr.bf16.mxu0 0
        %2661 = vmatmul.mubr.bf16.gmra.mxu0 %v2532
        %v2662 = vpop.f32.mrf.mxu0
        %v2663 = vadd.f32 0.0, %v2662
        %v2664 = vpop.f32.mrf.mxu0
        %v2665 = vpop.f32.mrf.mxu0
        %v2666 = vadd.f32 0.0, %v2665
        %v2667 = vpop.f32.mrf.mxu0
        %2668 = vmatprep.mubr.bf16.mxu0 0
        %2669 = vmatmul.mubr.bf16.gmra.mxu0 %v2535
        %v2670 = vpop.f32.mrf.mxu0
        %v2671 = vadd.f32 0.0, %v2670
        %v2672 = vpop.f32.mrf.mxu0
        %v2673 = vpop.f32.mrf.mxu0
        %v2674 = vadd.f32 0.0, %v2673
        %v2675 = vpop.f32.mrf.mxu0
        %2676 = vmatprep.mubr.bf16.mxu0 0
        %2677 = vmatmul.mubr.bf16.gmra.mxu0 %v2538
        %v2678 = vpop.f32.mrf.mxu0
        %v2679 = vadd.f32 0.0, %v2678
        %v2680 = vpop.f32.mrf.mxu0
        %v2681 = vpop.f32.mrf.mxu0
        %v2682 = vadd.f32 0.0, %v2681
        %v2683 = vpop.f32.mrf.mxu0
        %2684 = vmatprep.mubr.bf16.mxu0 0
        %2685 = vmatmul.mubr.bf16.gmra.mxu0 %v2541
        %v2686 = vpop.f32.mrf.mxu0
        %v2687 = vadd.f32 0.0, %v2686
        %v2688 = vpop.f32.mrf.mxu0
        %v2689 = vpop.f32.mrf.mxu0
        %v2690 = vadd.f32 0.0, %v2689
        %v2691 = vpop.f32.mrf.mxu0
        %2692 = vmatprep.mubr.bf16.mxu0 0
        %2693 = vmatmul.mubr.bf16.gmra.mxu0 %v2544
        %v2694 = vpop.f32.mrf.mxu0
        %v2695 = vadd.f32 0.0, %v2694
        %v2696 = vpop.f32.mrf.mxu0
        %v2697 = vpop.f32.mrf.mxu0
        %v2698 = vadd.f32 0.0, %v2697
        %v2699 = vpop.f32.mrf.mxu0
        %2700 = vmatprep.mubr.bf16.mxu0 0
        %2701 = vmatmul.mubr.bf16.gmra.mxu0 %v2547
        %v2702 = vpop.f32.mrf.mxu0
        %v2703 = vadd.f32 0.0, %v2702
        %v2704 = vpop.f32.mrf.mxu0
        %v2705 = vpop.f32.mrf.mxu0
        %v2706 = vadd.f32 0.0, %v2705
        %v2707 = vpop.f32.mrf.mxu0
        %2708 = vmatprep.mubr.bf16.mxu0 0
        %2709 = vmatmul.mubr.bf16.gmra.mxu0 %v2550
        %v2710 = vpop.f32.mrf.mxu0
        %v2711 = vadd.f32 0.0, %v2710
        %v2712 = vpop.f32.mrf.mxu0
        %v2713 = vpop.f32.mrf.mxu0
        %v2714 = vadd.f32 0.0, %v2713
        %v2715 = vpop.f32.mrf.mxu0
        %2716 = vdwg.mxu0
        %vm2717 = vcmask 64512
        %2718 = vst.msk [vmem:[%s181] sm:$0xff] %vm2717, %v2591
        %2719 = vst.msk [vmem:[%s181 + $0x8] sm:$0xff] %vm2717, %v2594
        %2720 = vst.msk [vmem:[%s181 + $0x10] sm:$0xff] %vm2717, %v2599
        %2721 = vst.msk [vmem:[%s181 + $0x18] sm:$0xff] %vm2717, %v2602
        %2722 = vst.msk [vmem:[%s181 + $0x20] sm:$0xff] %vm2717, %v2607
        %2723 = vst.msk [vmem:[%s181 + $0x28] sm:$0xff] %vm2717, %v2610
        %2724 = vst.msk [vmem:[%s181 + $0x30] sm:$0xff] %vm2717, %v2615
        %2725 = vst.msk [vmem:[%s181 + $0x38] sm:$0xff] %vm2717, %v2618
        %2726 = vst.msk [vmem:[%s181 + $0x40] sm:$0xff] %vm2717, %v2623
        %2727 = vst.msk [vmem:[%s181 + $0x48] sm:$0xff] %vm2717, %v2626
        %2728 = vst.msk [vmem:[%s181 + $0x50] sm:$0xff] %vm2717, %v2631
        %2729 = vst.msk [vmem:[%s181 + $0x58] sm:$0xff] %vm2717, %v2634
        %2730 = vst.msk [vmem:[%s181 + $0x60] sm:$0xff] %vm2717, %v2639
        %2731 = vst.msk [vmem:[%s181 + $0x68] sm:$0xff] %vm2717, %v2642
        %2732 = vst.msk [vmem:[%s181 + $0x70] sm:$0xff] %vm2717, %v2647
        %2733 = vst.msk [vmem:[%s181 + $0x78] sm:$0xff] %vm2717, %v2650
        %2734 = vst.msk [vmem:[%s181 + $0x80] sm:$0xff] %vm2717, %v2655
        %2735 = vst.msk [vmem:[%s181 + $0x88] sm:$0xff] %vm2717, %v2658
        %2736 = vst.msk [vmem:[%s181 + $0x90] sm:$0xff] %vm2717, %v2663
        %2737 = vst.msk [vmem:[%s181 + $0x98] sm:$0xff] %vm2717, %v2666
        %2738 = vst.msk [vmem:[%s181 + $0xa0] sm:$0xff] %vm2717, %v2671
        %2739 = vst.msk [vmem:[%s181 + $0xa8] sm:$0xff] %vm2717, %v2674
        %2740 = vst.msk [vmem:[%s181 + $0xb0] sm:$0xff] %vm2717, %v2679
        %2741 = vst.msk [vmem:[%s181 + $0xb8] sm:$0xff] %vm2717, %v2682
        %2742 = vst.msk [vmem:[%s181 + $0xc0] sm:$0xff] %vm2717, %v2687
        %2743 = vst.msk [vmem:[%s181 + $0xc8] sm:$0xff] %vm2717, %v2690
        %2744 = vst.msk [vmem:[%s181 + $0xd0] sm:$0xff] %vm2717, %v2695
        %2745 = vst.msk [vmem:[%s181 + $0xd8] sm:$0xff] %vm2717, %v2698
        %2746 = vst.msk [vmem:[%s181 + $0xe0] sm:$0xff] %vm2717, %v2703
        %2747 = vst.msk [vmem:[%s181 + $0xe8] sm:$0xff] %vm2717, %v2706
        %2748 = vst.msk [vmem:[%s181 + $0xf0] sm:$0xff] %vm2717, %v2711
        %2749 = vst.msk [vmem:[%s181 + $0xf8] sm:$0xff] %vm2717, %v2714
        %v2750 = vsel %vm2717, %v2591, 0.0
        %v2751 = vsel %vm2717, %v2594, 0.0
        %v2752 = vadd.f32 %v2750, %v2751
        %v2753 = vsel %vm2717, %v2599, 0.0
        %v2754 = vadd.f32 %v2752, %v2753
        %v2755 = vsel %vm2717, %v2602, 0.0
        %v2756 = vadd.f32 %v2754, %v2755
        %v2757 = vsel %vm2717, %v2607, 0.0
        %v2758 = vadd.f32 %v2756, %v2757
        %v2759 = vsel %vm2717, %v2610, 0.0
        %v2760 = vadd.f32 %v2758, %v2759
        %v2761 = vsel %vm2717, %v2615, 0.0
        %v2762 = vadd.f32 %v2760, %v2761
        %v2763 = vsel %vm2717, %v2618, 0.0
        %v2764 = vadd.f32 %v2762, %v2763
        %v2765 = vsel %vm2717, %v2623, 0.0
        %v2766 = vadd.f32 %v2764, %v2765
        %v2767 = vsel %vm2717, %v2626, 0.0
        %v2768 = vadd.f32 %v2766, %v2767
        %v2769 = vsel %vm2717, %v2631, 0.0
        %v2770 = vadd.f32 %v2768, %v2769
        %v2771 = vsel %vm2717, %v2634, 0.0
        %v2772 = vadd.f32 %v2770, %v2771
        %v2773 = vsel %vm2717, %v2639, 0.0
        %v2774 = vadd.f32 %v2772, %v2773
        %v2775 = vsel %vm2717, %v2642, 0.0
        %v2776 = vadd.f32 %v2774, %v2775
        %v2777 = vsel %vm2717, %v2647, 0.0
        %v2778 = vadd.f32 %v2776, %v2777
        %v2779 = vsel %vm2717, %v2650, 0.0
        %v2780 = vadd.f32 %v2778, %v2779
        %v2781 = vsel %vm2717, %v2655, 0.0
        %v2782 = vadd.f32 %v2780, %v2781
        %v2783 = vsel %vm2717, %v2658, 0.0
        %v2784 = vadd.f32 %v2782, %v2783
        %v2785 = vsel %vm2717, %v2663, 0.0
        %v2786 = vadd.f32 %v2784, %v2785
        %v2787 = vsel %vm2717, %v2666, 0.0
        %v2788 = vadd.f32 %v2786, %v2787
        %v2789 = vsel %vm2717, %v2671, 0.0
        %v2790 = vadd.f32 %v2788, %v2789
        %v2791 = vsel %vm2717, %v2674, 0.0
        %v2792 = vadd.f32 %v2790, %v2791
        %v2793 = vsel %vm2717, %v2679, 0.0
        %v2794 = vadd.f32 %v2792, %v2793
        %v2795 = vsel %vm2717, %v2682, 0.0
        %v2796 = vadd.f32 %v2794, %v2795
        %v2797 = vsel %vm2717, %v2687, 0.0
        %v2798 = vadd.f32 %v2796, %v2797
        %v2799 = vsel %vm2717, %v2690, 0.0
        %v2800 = vadd.f32 %v2798, %v2799
        %v2801 = vsel %vm2717, %v2695, 0.0
        %v2802 = vadd.f32 %v2800, %v2801
        %v2803 = vsel %vm2717, %v2698, 0.0
        %v2804 = vadd.f32 %v2802, %v2803
        %v2805 = vsel %vm2717, %v2703, 0.0
        %v2806 = vadd.f32 %v2804, %v2805
        %v2807 = vsel %vm2717, %v2706, 0.0
        %v2808 = vadd.f32 %v2806, %v2807
        %v2809 = vsel %vm2717, %v2711, 0.0
        %v2810 = vadd.f32 %v2808, %v2809
        %v2811 = vsel %vm2717, %v2714, 0.0
        %v2812 = vadd.f32 %v2810, %v2811
        %v2813 = vrot.slane %v2812, 4
        %v2814 = vadd.f32 %v2812, %v2813
        %v2815 = vrot.slane %v2814, 2
        %v2816 = vadd.f32 %v2814, %v2815
        %v2817 = vrot.slane %v2816, 1
        %v2818 = vadd.f32 %v2816, %v2817
        %v2819 = vmul.f32 %v2591, %v2591
        %v2820 = vmul.f32 %v2594, %v2594
        %v2821 = vmul.f32 %v2599, %v2599
        %v2822 = vmul.f32 %v2602, %v2602
        %v2823 = vmul.f32 %v2607, %v2607
        %v2824 = vmul.f32 %v2610, %v2610
        %v2825 = vmul.f32 %v2615, %v2615
        %v2826 = vmul.f32 %v2618, %v2618
        %v2827 = vmul.f32 %v2623, %v2623
        %v2828 = vmul.f32 %v2626, %v2626
        %v2829 = vmul.f32 %v2631, %v2631
        %v2830 = vmul.f32 %v2634, %v2634
        %v2831 = vmul.f32 %v2639, %v2639
        %v2832 = vmul.f32 %v2642, %v2642
        %v2833 = vmul.f32 %v2647, %v2647
        %v2834 = vmul.f32 %v2650, %v2650
        %v2835 = vmul.f32 %v2655, %v2655
        %v2836 = vmul.f32 %v2658, %v2658
        %v2837 = vmul.f32 %v2663, %v2663
        %v2838 = vmul.f32 %v2666, %v2666
        %v2839 = vmul.f32 %v2671, %v2671
        %v2840 = vmul.f32 %v2674, %v2674
        %v2841 = vmul.f32 %v2679, %v2679
        %v2842 = vmul.f32 %v2682, %v2682
        %v2843 = vmul.f32 %v2687, %v2687
        %v2844 = vmul.f32 %v2690, %v2690
        %v2845 = vmul.f32 %v2695, %v2695
        %v2846 = vmul.f32 %v2698, %v2698
        %v2847 = vmul.f32 %v2703, %v2703
        %v2848 = vmul.f32 %v2706, %v2706
        %v2849 = vmul.f32 %v2711, %v2711
        %v2850 = vmul.f32 %v2714, %v2714
        %v2851 = vsel %vm2717, %v2819, 0.0
        %v2852 = vsel %vm2717, %v2820, 0.0
        %v2853 = vadd.f32 %v2851, %v2852
        %v2854 = vsel %vm2717, %v2821, 0.0
        %v2855 = vadd.f32 %v2853, %v2854
        %v2856 = vsel %vm2717, %v2822, 0.0
        %v2857 = vadd.f32 %v2855, %v2856
        %v2858 = vsel %vm2717, %v2823, 0.0
        %v2859 = vadd.f32 %v2857, %v2858
        %v2860 = vsel %vm2717, %v2824, 0.0
        %v2861 = vadd.f32 %v2859, %v2860
        %v2862 = vsel %vm2717, %v2825, 0.0
        %v2863 = vadd.f32 %v2861, %v2862
        %v2864 = vsel %vm2717, %v2826, 0.0
        %v2865 = vadd.f32 %v2863, %v2864
        %v2866 = vsel %vm2717, %v2827, 0.0
        %v2867 = vadd.f32 %v2865, %v2866
        %v2868 = vsel %vm2717, %v2828, 0.0
        %v2869 = vadd.f32 %v2867, %v2868
        %v2870 = vsel %vm2717, %v2829, 0.0
        %v2871 = vadd.f32 %v2869, %v2870
        %v2872 = vsel %vm2717, %v2830, 0.0
        %v2873 = vadd.f32 %v2871, %v2872
        %v2874 = vsel %vm2717, %v2831, 0.0
        %v2875 = vadd.f32 %v2873, %v2874
        %v2876 = vsel %vm2717, %v2832, 0.0
        %v2877 = vadd.f32 %v2875, %v2876
        %v2878 = vsel %vm2717, %v2833, 0.0
        %v2879 = vadd.f32 %v2877, %v2878
        %v2880 = vsel %vm2717, %v2834, 0.0
        %v2881 = vadd.f32 %v2879, %v2880
        %v2882 = vsel %vm2717, %v2835, 0.0
        %v2883 = vadd.f32 %v2881, %v2882
        %v2884 = vsel %vm2717, %v2836, 0.0
        %v2885 = vadd.f32 %v2883, %v2884
        %v2886 = vsel %vm2717, %v2837, 0.0
        %v2887 = vadd.f32 %v2885, %v2886
        %v2888 = vsel %vm2717, %v2838, 0.0
        %v2889 = vadd.f32 %v2887, %v2888
        %v2890 = vsel %vm2717, %v2839, 0.0
        %v2891 = vadd.f32 %v2889, %v2890
        %v2892 = vsel %vm2717, %v2840, 0.0
        %v2893 = vadd.f32 %v2891, %v2892
        %v2894 = vsel %vm2717, %v2841, 0.0
        %v2895 = vadd.f32 %v2893, %v2894
        %v2896 = vsel %vm2717, %v2842, 0.0
        %v2897 = vadd.f32 %v2895, %v2896
        %v2898 = vsel %vm2717, %v2843, 0.0
        %v2899 = vadd.f32 %v2897, %v2898
        %v2900 = vsel %vm2717, %v2844, 0.0
        %v2901 = vadd.f32 %v2899, %v2900
        %v2902 = vsel %vm2717, %v2845, 0.0
        %v2903 = vadd.f32 %v2901, %v2902
        %v2904 = vsel %vm2717, %v2846, 0.0
        %v2905 = vadd.f32 %v2903, %v2904
        %v2906 = vsel %vm2717, %v2847, 0.0
        %v2907 = vadd.f32 %v2905, %v2906
        %v2908 = vsel %vm2717, %v2848, 0.0
        %v2909 = vadd.f32 %v2907, %v2908
        %v2910 = vsel %vm2717, %v2849, 0.0
        %v2911 = vadd.f32 %v2909, %v2910
        %v2912 = vsel %vm2717, %v2850, 0.0
        %v2913 = vadd.f32 %v2911, %v2912
        %v2914 = vrot.slane %v2913, 4
        %v2915 = vadd.f32 %v2913, %v2914
        %v2916 = vrot.slane %v2915, 2
        %v2917 = vadd.f32 %v2915, %v2916
        %v2918 = vrot.slane %v2917, 1
        %v2919 = vadd.f32 %v2917, %v2918
        %vm2920 = vcmask 1040384
        %v2921 = vsel %vm2920, %v2818, %v2919
        %vm2922 = vcmask 58368
        %2923 = vst.msk [vmem:[%s171] sm:$0x3] %vm2922, %v2921
        %p2924 = scmp.lt.s32.totalorder %s18, 1
        %s2925 = scalar_select %p2924, %s18, 1
        %s2926 = smul.addr %s2925, 32
        %s2927 = smul.addr %s2926, 8
        %s2928 = scalar_lea.vmem %s2, %s2927
        %s2929 = sand.u32 %s99, 1
        %s2930 = scalar_lea.sflag [#allocation4], %s2929
        %s2931 = sand.u32 %s99, 1
        %s2932 = smul.addr %s2931, 2
        %s2933 = scalar_lea.vmem [#allocation3], %s2932
        // Predicated region
        $region29: #{tpu_custom_call.1} parent=27 // pred_check
          %p2934 = pneg %p83
        $region30: #{tpu_custom_call.1} parent=27 // pred_check_branch
          %2936 = sbr.rel (%p2934) target = $region32
        $region31: #{tpu_custom_call.1} parent=27 // pred_region
          _
        $region32: #{tpu_custom_call.1} parent=27 // pred_fallthru
          _
        // Predicated region
        $region33: #{tpu_custom_call.1} parent=27 // pred_check
          %p2937 = pneg %p109
        $region34: #{tpu_custom_call.1} parent=27 // pred_check_branch
          %2939 = sbr.rel (%p2937) target = $region36
        $region35: #{tpu_custom_call.1} parent=27 // pred_region
          %s2941 = ssub.s32 32, 32
          %2942 = vsyncadd %s2930, %s2941
          %s2943 = smul.addr %s18, 32
          %s2944 = scalar_lea.hbm %s3, %s2943
          %s2946 = sshll.u32 %s2933, 4
          %s2947 = int_to_ptr.vmem [resolvable:$true] %s2946
          %2949 = dma.vmem_to_hbm [thread:$0]  %s2947, 32, %s2944, %s2930
        $region36: #{tpu_custom_call.1} parent=27 // pred_fallthru
          _
      $region28: #{tpu_custom_call.1} parent=5 // pred_fallthru
        _
      %p2950 = scmp.le.s32.totalorder 2, %s13
      // Predicated region
      $region37: #{tpu_custom_call.1} parent=5 // pred_check
        %p2951 = pneg %p2950
      $region38: #{tpu_custom_call.1} parent=5 // pred_check_branch
        %2953 = sbr.rel (%p2951) target = $region40
      $region39: #{tpu_custom_call.1} parent=5 // pred_region
        %s2954 = ssub.s32 %s13, 2
        // Predicated region
        $region41: #{tpu_custom_call.1} parent=39 // pred_check
          %p2955 = pneg %p89
        $region42: #{tpu_custom_call.1} parent=39 // pred_check_branch
          %2957 = sbr.rel (%p2955) target = $region44
        $region43: #{tpu_custom_call.1} parent=39 // pred_region
          %p2958 = scmp.lt.s32.totalorder %s19, 1
          %s2959 = scalar_select %p2958, %s19, 1
          %s2960 = smul.addr %s2959, 32
          %s2961 = smul.addr %s2960, 8
          %s2962 = scalar_lea.vmem %s2, %s2961
        $region44: #{tpu_custom_call.1} parent=39 // pred_fallthru
          _
        // Predicated region
        $region45: #{tpu_custom_call.1} parent=39 // pred_check
          %p2963 = pneg %p115
        $region46: #{tpu_custom_call.1} parent=39 // pred_check_branch
          %2965 = sbr.rel (%p2963) target = $region48
        $region47: #{tpu_custom_call.1} parent=39 // pred_region
          %s2966 = sand.u32 %s100, 1
          %s2967 = scalar_lea.sflag [#allocation4], %s2966
          %s2968 = sand.u32 %s100, 1
          %s2969 = smul.addr %s2968, 2
          %s2970 = scalar_lea.vmem [#allocation3], %s2969
          %2971 = dma.done %s2967, 32
        $region48: #{tpu_custom_call.1} parent=39 // pred_fallthru
          _
      $region40: #{tpu_custom_call.1} parent=5 // pred_fallthru
        _
    $region6: #{tpu_custom_call.1} parent=1 // loop_footer
      %s17 = sadd.s32 1, %s13
    $region7: #{tpu_custom_call.1} parent=1 // loop_footer_branch
      %12 = sbr.rel target = $region3
    $region8: #{tpu_custom_call.1} parent=1 // loop_exit
      _
    %2972 = vsyncpa [#allocation4], 1
    %s2973 = scalar_lea.sflag [#allocation4], 1
    %2974 = vsyncpa %s2973, 1

</llo_original>
